<compile_context>
chip_gen: v7x
topology: tpu7x:2x2x1
jax: 0.10.0
libtpu: 0.0.40
codegen_flags: <defaults>
</compile_context>

<pallas_src>
import jax
import jax.numpy as jnp
from jax.experimental import pallas as pl
from jax.experimental.pallas import tpu as pltpu

_MIB = 1024 * 1024


def _tpu_generation():
    """Best-effort TPU generation probe (never raises)."""
    try:
        kind = jax.devices()[0].device_kind.lower()
    except Exception:
        return "unknown"
    if "v7" in kind or "7x" in kind:
        return "v7x"
    if "v6" in kind:
        return "v6e"
    if "v5" in kind:
        return "v5e" if ("lite" in kind or "5e" in kind) else "v5p"
    return "unknown"


def _gen_params(gen):
    """Returns (tensorcores_per_chip, VMEM budget for our buffers,
    default scoped-VMEM limit assumed by the compiler)."""
    if gen == "v7x":
        return 2, 26 * _MIB, 32 * _MIB   # 64 MiB physical, 32 MiB scoped default
    if gen == "v6e":
        return 1, 26 * _MIB, 32 * _MIB   # 128 MiB physical, 32 MiB scoped default
    if gen == "v5p":
        return 2, 13 * _MIB, 16 * _MIB   # megacore
    # v5e and unknown: be conservative (v5e scoped default is 16 MiB).
    return 1, 13 * _MIB, 16 * _MIB


def _usage_bytes(M, K, N, tk, tn, w_bytes):
    """VMEM working-set estimate, aware of which operands are single-buffered
    (block index constant over the whole grid) vs double-buffered."""
    gn, gk = N // tn, K // tk
    nb = lambda varies: 2 if varies else 1
    x1_b = nb(gk > 1) * M * tk * 4
    w_b = nb(gn * gk > 1) * tk * tn * w_bytes
    b_b = nb(gn > 1) * tn * 4
    x2_b = nb(gn > 1) * M * tn * 4
    o_b = nb(gn > 1) * M * tn * 4
    return x1_b + w_b + b_b + x2_b + o_b


def _choose_tiles(M, K, N, *, w_bytes, num_tc, vmem_budget):
    tk, tn = K, N
    # On multi-TensorCore chips split the (parallel) N axis across cores so
    # both TCs stream half the weight each; otherwise keep the grid collapsed.
    if num_tc > 1 and N % (128 * num_tc) == 0:
        tn = N // num_tc
    # Shrink N tiles first (keeps the K reduction collapsed), then K tiles.
    while _usage_bytes(M, K, N, tk, tn, w_bytes) > vmem_budget and tn % 256 == 0:
        tn //= 2
    while _usage_bytes(M, K, N, tk, tn, w_bytes) > vmem_budget and tk % 256 == 0:
        tk //= 2
    return tk, tn


def _spec(block_shape, index_map, *, single_step):
    """BlockSpec; request single-buffering when the block never changes."""
    if single_step:
        try:
            return pl.BlockSpec(block_shape, index_map,
                                pipeline_mode=pl.Buffered(1))
        except (TypeError, AttributeError):
            pass  # older/newer API without pipeline_mode: fall back silently
    return pl.BlockSpec(block_shape, index_map)


def _make_kernel(num_k_steps):
    if num_k_steps == 1:
        # Collapsed K axis: single fused pass over the output tile.
        def kernel(x1_ref, w_ref, b_ref, x2_ref, o_ref):
            acc = jnp.dot(x1_ref[...].astype(w_ref.dtype), w_ref[...],
                          preferred_element_type=jnp.float32)
            o_ref[...] = jnp.maximum(acc + b_ref[...] + x2_ref[...], 0.0)
        return kernel

    def kernel(x1_ref, w_ref, b_ref, x2_ref, o_ref):
        # K is the last grid axis ("arbitrary"); output block index is constant
        # along it, so o_ref is VMEM-resident and safe to accumulate into.
        k = pl.program_id(1)
        acc = jnp.dot(x1_ref[...].astype(w_ref.dtype), w_ref[...],
                      preferred_element_type=jnp.float32)

        @pl.when(k == 0)
        def _():
            o_ref[...] = acc          # first partial: plain store (no zero-init)

        @pl.when(k > 0)
        def _():
            o_ref[...] += acc

        @pl.when(k == num_k_steps - 1)
        def _():
            o_ref[...] = jnp.maximum(o_ref[...] + b_ref[...] + x2_ref[...], 0.0)

    return kernel


def linear_add_relu(x1, w, b, x2, *, tk=None, tn=None, use_bf16_weights=True):
    M, K = x1.shape
    Kw, N = w.shape
    assert K == Kw and x2.shape == (M, N) and b.shape == (1, N)
    assert x1.dtype == jnp.float32 and x2.dtype == jnp.float32
    assert b.dtype == jnp.float32
    assert w.dtype in (jnp.float32, jnp.bfloat16)
    # Full-M blocks are only sensible for small batch; re-derive tiling
    # (add an M tile, cap tk) before reusing this kernel at large M.
    assert M <= 256, "re-derive tiling (M tile) for large batch"

    if use_bf16_weights and w.dtype == jnp.float32:
        w = w.astype(jnp.bfloat16)   # halves the dominant HBM stream
    w_bytes = w.dtype.itemsize

    gen = _tpu_generation()
    num_tc, budget, default_scoped = _gen_params(gen)

    auto_tk, auto_tn = _choose_tiles(M, K, N, w_bytes=w_bytes,
                                     num_tc=num_tc, vmem_budget=budget)
    tk = auto_tk if tk is None else tk
    tn = auto_tn if tn is None else tn
    assert K % tk == 0 and N % tn == 0
    assert (tk == K or tk % 128 == 0) and (tn == N or tn % 128 == 0)

    gn, gk = N // tn, K // tk
    grid = (gn, gk)  # reduction (K) axis LAST, marked "arbitrary"

    # Raise scoped VMEM only when the (possibly user-overridden) tiles need it.
    usage = _usage_bytes(M, K, N, tk, tn, w_bytes)
    vmem_limit = None
    if usage + 2 * _MIB > default_scoped:
        vmem_limit = min(int(usage * 1.25) + 2 * _MIB, 60 * _MIB)

    cost = pl.CostEstimate(
        flops=2 * M * K * N,
        transcendentals=0,
        bytes_accessed=M * K * 4 + K * N * w_bytes + N * 4 + 2 * M * N * 4,
    )

    return pl.pallas_call(
        _make_kernel(gk),
        out_shape=jax.ShapeDtypeStruct((M, N), jnp.float32),
        grid_spec=pltpu.PrefetchScalarGridSpec(
            num_scalar_prefetch=0,
            grid=grid,
            in_specs=[
                _spec((M, tk), lambda j, k: (0, k), single_step=(gk == 1)),   # x1
                _spec((tk, tn), lambda j, k: (k, j), single_step=(gn * gk == 1)),  # w
                _spec((1, tn), lambda j, k: (0, j), single_step=(gn == 1)),   # bias
                _spec((M, tn), lambda j, k: (0, j), single_step=(gn == 1)),   # x2
            ],
            out_specs=pl.BlockSpec((M, tn), lambda j, k: (0, j)),
        ),
        compiler_params=pltpu.CompilerParams(
            dimension_semantics=("parallel", "arbitrary"),
            vmem_limit_bytes=vmem_limit,
        ),
        cost_estimate=cost,
    )(x1, w, b, x2)


if __name__ == "__main__":
    # Small shapes consistent with the module (Linear K->N, +x2, relu).
    M, K, N = 2, 2048, 512

    key = jax.random.PRNGKey(0)
    k1, k2, k3, k4 = jax.random.split(key, 4)

    x1 = jax.random.normal(k1, (M, K), dtype=jnp.float32)
    x2 = jax.random.normal(k2, (M, N), dtype=jnp.float32)

    # torch.nn.Linear-style init: uniform(-1/sqrt(K), 1/sqrt(K)), weight (N, K).
    bound = 1.0 / (K ** 0.5)
    weight = jax.random.uniform(k3, (N, K), minval=-bound, maxval=bound,
                                dtype=jnp.float32)
    bias = jax.random.uniform(k4, (N,), minval=-bound, maxval=bound,
                              dtype=jnp.float32)

    w = weight.T            # (K, N)
    b = bias.reshape(1, N)  # (1, N)

    # Fast path: bf16 weight stream (default).
    out = linear_add_relu(x1, w, b, x2)
    jax.block_until_ready(out)
    assert out.shape == (M, N)

    # References.
    ref_f32 = jnp.maximum(x1 @ weight.T + bias + x2, 0.0)
    ref_bf16 = jnp.maximum(
        jnp.dot(x1.astype(jnp.bfloat16), w.astype(jnp.bfloat16),
                preferred_element_type=jnp.float32) + b + x2, 0.0)

    assert jnp.allclose(out, ref_bf16, atol=2e-3, rtol=2e-3)
    assert jnp.allclose(out, ref_f32, atol=5e-2, rtol=5e-2)

    # Strict-numerics path (f32 weight stream) still available behind the flag.
    out_f32 = linear_add_relu(x1, w, b, x2, use_bf16_weights=False)
    jax.block_until_ready(out_f32)
    assert jnp.allclose(out_f32, ref_f32, atol=2e-2, rtol=2e-2)

    print("KERNEL_OK")
</pallas_src>

<mosaic_0001>
module attributes {stable_mosaic.version = 11 : i64} {
  func.func @kernel(%arg0: i32, %arg1: i32, %arg2: memref<2x2048xf32, #tpu.memory_space<vmem>>, %arg3: memref<2048x512xbf16, #tpu.memory_space<vmem>>, %arg4: memref<1x512xf32, #tpu.memory_space<vmem>>, %arg5: memref<2x512xf32, #tpu.memory_space<vmem>>, %arg6: memref<2x512xf32, #tpu.memory_space<vmem>>) attributes {dimension_semantics = [#tpu.dimension_semantics<parallel>, #tpu.dimension_semantics<arbitrary>], iteration_bounds = array<i64: 1, 1>, scalar_prefetch = 0 : i64, scratch_operands = 0 : i64, tpu.core_type = #tpu.core_type<tc>, window_params = [{pipeline_mode = #tpu.pipeline_mode<synchronous>, transform_indices = @transform_0, window_bounds = array<i64: 2, 2048>}, {pipeline_mode = #tpu.pipeline_mode<synchronous>, transform_indices = @transform_1, window_bounds = array<i64: 2048, 512>}, {pipeline_mode = #tpu.pipeline_mode<synchronous>, transform_indices = @transform_2, window_bounds = array<i64: 1, 512>}, {pipeline_mode = #tpu.pipeline_mode<synchronous>, transform_indices = @transform_3, window_bounds = array<i64: 2, 512>}, {transform_indices = @transform_4, window_bounds = array<i64: 2, 512>}]} {
    %c0 = arith.constant 0 : index
    %c0_0 = arith.constant 0 : index
    %0 = vector.load %arg2[%c0, %c0_0] : memref<2x2048xf32, #tpu.memory_space<vmem>>, vector<2x2048xf32>
    %1 = arith.truncf %0 : vector<2x2048xf32> to vector<2x2048xbf16>
    %c0_1 = arith.constant 0 : index
    %c0_2 = arith.constant 0 : index
    %2 = vector.load %arg3[%c0_1, %c0_2] : memref<2048x512xbf16, #tpu.memory_space<vmem>>, vector<2048x512xbf16>
    %cst = arith.constant dense<0.000000e+00> : vector<2x512xf32>
    %3 = tpu.matmul %1, %2, %cst {dimension_numbers = #tpu.dot_dimension_numbers<[1], [0], [0], [1], [0, 0, 1, 1], [], []>} : vector<2x2048xbf16>, vector<2048x512xbf16>, vector<2x512xf32> -> vector<2x512xf32>
    %c0_3 = arith.constant 0 : index
    %c0_4 = arith.constant 0 : index
    %4 = vector.load %arg4[%c0_3, %c0_4] : memref<1x512xf32, #tpu.memory_space<vmem>>, vector<1x512xf32>
    %5 = vector.broadcast %4 : vector<1x512xf32> to vector<2x512xf32>
    %6 = arith.addf %3, %5 : vector<2x512xf32>
    %c0_5 = arith.constant 0 : index
    %c0_6 = arith.constant 0 : index
    %7 = vector.load %arg5[%c0_5, %c0_6] : memref<2x512xf32, #tpu.memory_space<vmem>>, vector<2x512xf32>
    %8 = arith.addf %6, %7 : vector<2x512xf32>
    %cst_7 = arith.constant 0.000000e+00 : f32
    %9 = vector.broadcast %cst_7 : f32 to vector<2x512xf32>
    %10 = arith.maximumf %8, %9 : vector<2x512xf32>
    %c0_8 = arith.constant 0 : index
    %c0_9 = arith.constant 0 : index
    %11 = vector.load %arg6[%c0_8, %c0_9] : memref<2x512xf32, #tpu.memory_space<vmem>>, vector<2x512xf32>
    tpu.vector_store %arg6[%c0_8, %c0_9], %10 {strides = array<i32>} : memref<2x512xf32, #tpu.memory_space<vmem>>, vector<2x512xf32>,
    return
  }
  func.func @transform_0(%arg0: i32, %arg1: i32) -> (i32, i32) {
    %c0_i32 = arith.constant 0 : i32
    %c0_i32_0 = arith.constant 0 : i32
    return %c0_i32, %arg1 : i32, i32
  }
  func.func @transform_1(%arg0: i32, %arg1: i32) -> (i32, i32) {
    %c0_i32 = arith.constant 0 : i32
    return %arg1, %arg0 : i32, i32
  }
  func.func @transform_2(%arg0: i32, %arg1: i32) -> (i32, i32) {
    %c0_i32 = arith.constant 0 : i32
    %c0_i32_0 = arith.constant 0 : i32
    return %c0_i32, %arg0 : i32, i32
  }
  func.func @transform_3(%arg0: i32, %arg1: i32) -> (i32, i32) {
    %c0_i32 = arith.constant 0 : i32
    %c0_i32_0 = arith.constant 0 : i32
    return %c0_i32, %arg0 : i32, i32
  }
  func.func @transform_4(%arg0: i32, %arg1: i32) -> (i32, i32) {
    %c0_i32 = arith.constant 0 : i32
    %c0_i32_0 = arith.constant 0 : i32
    return %c0_i32, %arg0 : i32, i32
  }
}

</mosaic_0001>

<llo_original>
// kernel: tpu_custom_call.1
$region0: #{tpu_custom_call.1}
  #allocation0 [shape = 'u32[]', space=smem, size = 0x4, offset = 0x4, fixed_abs, tag = 'smem constant byte address 0x4 - core index']
  #allocation1 [shape = 'u32[144,128]{1,0:T(1,128)}', space=vmem, size = 0x12000, scoped, tag = 'internal scratch']
  %s0 = inlined_call_operand.hbm [shape: f32[2,2048], index: 0, kind: input, shape index: {}]
  %s1 = inlined_call_operand.hbm [shape: bf16[2048,512], index: 1, kind: input, shape index: {}]
  %s2 = inlined_call_operand.hbm [shape: f32[1,512], index: 2, kind: input, shape index: {}]
  %s3 = inlined_call_operand.hbm [shape: f32[2,512], index: 3, kind: input, shape index: {}]
  %s4 = inlined_call_operand.hbm [shape: f32[2,512], index: 4, kind: output, shape index: {}]
  %s5 = sld [smem:[#allocation0]]
  $region42: #{tpu_custom_call.1} parent=0
    _
  %s7 = ssub.s32 1, %s5
  %s8 = scalar_select 0, %s7, %s5
  $region1: #{tpu_custom_call.1} parent=0
    #allocation2 [shape = 'u8[16384]{0}', space=vmem, size = 0x4000, scoped, tag = 'input window, operand 0, single buffered']
    #allocation3 [shape = 's32[1]{0}', space=sflag, size = 0x4, scoped, tag = 'scoped memory for tpu_custom_call.1']
    #allocation4 [shape = 's32[1]{0}', space=sflag, size = 0x4, scoped, tag = 'scoped memory for tpu_custom_call.1']
    #allocation5 [shape = 'u8[2097152]{0}', space=vmem, size = 0x200000, scoped, tag = 'input window, operand 1, single buffered']
    #allocation6 [shape = 's32[1]{0}', space=sflag, size = 0x4, scoped, tag = 'scoped memory for tpu_custom_call.1']
    #allocation7 [shape = 'u8[2048]{0}', space=vmem, size = 0x800, scoped, tag = 'input window, operand 2, single buffered']
    #allocation8 [shape = 'u8[4096]{0}', space=vmem, size = 0x1000, scoped, tag = 'input window, operand 3, single buffered']
    #allocation9 [shape = 's32[1]{0}', space=sflag, size = 0x4, scoped, tag = 'scoped memory for tpu_custom_call.1']
    #allocation10 [shape = 'u8[4096]{0}', space=vmem, size = 0x1000, scoped, tag = 'output window, operand 0, single buffered']
    %9 = vsyncpa [#allocation3], 0
    %10 = vsyncpa [#allocation6], 0
    %11 = vsyncpa [#allocation9], 0
    %12 = vsyncpa [#allocation4], 0
    // Predicated region
    $region2: #{tpu_custom_call.1} parent=1 // pred_check
      _
    $region3: #{tpu_custom_call.1} parent=1 // pred_check_branch
      %14 = sbr.rel (0) target = $region5
    $region4: #{tpu_custom_call.1} parent=1 // pred_region
      %s16 = ssub.s32 512, 512
      %17 = vsyncadd [#allocation3], %s16
      %s19 = sshll.u32 [#allocation2], 4
      %s20 = int_to_ptr.vmem [resolvable:$true] %s19
      %22 = dma.hbm_to_vmem [thread:$0]  %s0, 512, %s20, [#allocation3]
    $region5: #{tpu_custom_call.1} parent=1 // pred_fallthru
      _
    // Predicated region
    $region6: #{tpu_custom_call.1} parent=1 // pred_check
      _
    $region7: #{tpu_custom_call.1} parent=1 // pred_check_branch
      %24 = sbr.rel (0) target = $region9
    $region8: #{tpu_custom_call.1} parent=1 // pred_region
      %s26 = ssub.s32 65536, 65536
      %27 = vsyncadd [#allocation6], %s26
      %s28 = sshll.u32 [#allocation5], 4
      %s29 = int_to_ptr.vmem [resolvable:$true] %s28
      %34 = dma.hbm_to_vmem [thread:$0]  %s1, 65536, %s29, [#allocation6], 256, 256, 16
    $region9: #{tpu_custom_call.1} parent=1 // pred_fallthru
      _
    // Predicated region
    $region10: #{tpu_custom_call.1} parent=1 // pred_check
      _
    $region11: #{tpu_custom_call.1} parent=1 // pred_check_branch
      %36 = sbr.rel (0) target = $region13
    $region12: #{tpu_custom_call.1} parent=1 // pred_region
      %s38 = ssub.s32 64, 64
      %39 = vsyncadd [#allocation6], %s38
      %s41 = sshll.u32 [#allocation7], 4
      %s42 = int_to_ptr.vmem [resolvable:$true] %s41
      %44 = dma.hbm_to_vmem [thread:$0]  %s2, 64, %s42, [#allocation6]
    $region13: #{tpu_custom_call.1} parent=1 // pred_fallthru
      _
    // Predicated region
    $region14: #{tpu_custom_call.1} parent=1 // pred_check
      _
    $region15: #{tpu_custom_call.1} parent=1 // pred_check_branch
      %46 = sbr.rel (0) target = $region17
    $region16: #{tpu_custom_call.1} parent=1 // pred_region
      %s48 = ssub.s32 128, 128
      %49 = vsyncadd [#allocation9], %s48
      %s51 = sshll.u32 [#allocation8], 4
      %s52 = int_to_ptr.vmem [resolvable:$true] %s51
      %54 = dma.hbm_to_vmem [thread:$0]  %s3, 128, %s52, [#allocation9]
    $region17: #{tpu_custom_call.1} parent=1 // pred_fallthru
      _
    // Predicated region
    $region18: #{tpu_custom_call.1} parent=1 // pred_check
      _
    $region19: #{tpu_custom_call.1} parent=1 // pred_check_branch
      %56 = sbr.rel (0) target = $region21
    $region20: #{tpu_custom_call.1} parent=1 // pred_region
      %57 = dma.done [#allocation3], 512
    $region21: #{tpu_custom_call.1} parent=1 // pred_fallthru
      _
    // Predicated region
    $region22: #{tpu_custom_call.1} parent=1 // pred_check
      _
    $region23: #{tpu_custom_call.1} parent=1 // pred_check_branch
      %59 = sbr.rel (0) target = $region25
    $region24: #{tpu_custom_call.1} parent=1 // pred_region
      %60 = dma.done [#allocation6], 65536
    $region25: #{tpu_custom_call.1} parent=1 // pred_fallthru
      _
    // Predicated region
    $region26: #{tpu_custom_call.1} parent=1 // pred_check
      _
    $region27: #{tpu_custom_call.1} parent=1 // pred_check_branch
      %62 = sbr.rel (0) target = $region29
    $region28: #{tpu_custom_call.1} parent=1 // pred_region
      %63 = dma.done [#allocation6], 64
    $region29: #{tpu_custom_call.1} parent=1 // pred_fallthru
      _
    // Predicated region
    $region30: #{tpu_custom_call.1} parent=1 // pred_check
      _
    $region31: #{tpu_custom_call.1} parent=1 // pred_check_branch
      %65 = sbr.rel (0) target = $region33
    $region32: #{tpu_custom_call.1} parent=1 // pred_region
      %66 = dma.done [#allocation9], 128
    $region33: #{tpu_custom_call.1} parent=1 // pred_fallthru
      _
    %v67 = vld [vmem:[#allocation2] sm:$0xff]
    %v68 = vld [vmem:[#allocation2 + $0x8] sm:$0xff]
    %v69 = vld [vmem:[#allocation2 + $0x10] sm:$0xff]
    %v70 = vld [vmem:[#allocation2 + $0x18] sm:$0xff]
    %v75 = vcombine.high %v67, %v67
    %v77 = vunpack.c.l.s4 1983009808
    %v78 = vunpack.c.0.s8 %v77
    %v79 = vlaneseq
    %v80 = vshrl.u32 %v79, 7
    %v81 = vsub.s32 %v78, %v80
    %v82 = vrot.slane %v67, %v81
    %v84 = vunpack.c.l.s4 1983009808
    %v85 = vunpack.c.0.s8 %v84
    %v86 = vlaneseq
    %v87 = vshrl.u32 %v86, 7
    %v88 = vsub.s32 %v85, %v87
    %v89 = vrot.slane %v75, %v88
    %v90 = vcombine.high %v82, %v82
    %v91 = vcombine.high %v89, %v89
    %v92 = vcombine.high %v68, %v68
    %v94 = vunpack.c.l.s4 1983009808
    %v95 = vunpack.c.0.s8 %v94
    %v96 = vlaneseq
    %v97 = vshrl.u32 %v96, 7
    %v98 = vsub.s32 %v95, %v97
    %v99 = vrot.slane %v68, %v98
    %v101 = vunpack.c.l.s4 1983009808
    %v102 = vunpack.c.0.s8 %v101
    %v103 = vlaneseq
    %v104 = vshrl.u32 %v103, 7
    %v105 = vsub.s32 %v102, %v104
    %v106 = vrot.slane %v92, %v105
    %v107 = vcombine.high %v99, %v99
    %v108 = vcombine.high %v106, %v106
    %v109 = vcombine.high %v69, %v69
    %v111 = vunpack.c.l.s4 1983009808
    %v112 = vunpack.c.0.s8 %v111
    %v113 = vlaneseq
    %v114 = vshrl.u32 %v113, 7
    %v115 = vsub.s32 %v112, %v114
    %v116 = vrot.slane %v69, %v115
    %v118 = vunpack.c.l.s4 1983009808
    %v119 = vunpack.c.0.s8 %v118
    %v120 = vlaneseq
    %v121 = vshrl.u32 %v120, 7
    %v122 = vsub.s32 %v119, %v121
    %v123 = vrot.slane %v109, %v122
    %v124 = vcombine.high %v116, %v116
    %v125 = vcombine.high %v123, %v123
    %v126 = vcombine.high %v70, %v70
    %v128 = vunpack.c.l.s4 1983009808
    %v129 = vunpack.c.0.s8 %v128
    %v130 = vlaneseq
    %v131 = vshrl.u32 %v130, 7
    %v132 = vsub.s32 %v129, %v131
    %v133 = vrot.slane %v70, %v132
    %v135 = vunpack.c.l.s4 1983009808
    %v136 = vunpack.c.0.s8 %v135
    %v137 = vlaneseq
    %v138 = vshrl.u32 %v137, 7
    %v139 = vsub.s32 %v136, %v138
    %v140 = vrot.slane %v126, %v139
    %v141 = vcombine.high %v133, %v133
    %v142 = vcombine.high %v140, %v140
    %v159 = vpack.c.bf16 %v82, %v82
    %v160 = vpack.c.bf16 %v90, %v90
    %v161 = vpack.c.bf16 %v89, %v89
    %v162 = vpack.c.bf16 %v91, %v91
    %v163 = vpack.c.bf16 %v99, %v99
    %v164 = vpack.c.bf16 %v107, %v107
    %v165 = vpack.c.bf16 %v106, %v106
    %v166 = vpack.c.bf16 %v108, %v108
    %v167 = vpack.c.bf16 %v116, %v116
    %v168 = vpack.c.bf16 %v124, %v124
    %v169 = vpack.c.bf16 %v123, %v123
    %v170 = vpack.c.bf16 %v125, %v125
    %v171 = vpack.c.bf16 %v133, %v133
    %v172 = vpack.c.bf16 %v141, %v141
    %v173 = vpack.c.bf16 %v140, %v140
    %v174 = vpack.c.bf16 %v142, %v142
    %v175 = vld [vmem:[#allocation5] sm:$0xff]
    %v176 = vld [vmem:[#allocation5 + $0x8] sm:$0xff]
    %v177 = vld [vmem:[#allocation5 + $0x10] sm:$0xff]
    %v178 = vld [vmem:[#allocation5 + $0x18] sm:$0xff]
    %v179 = vld [vmem:[#allocation5 + $0x20] sm:$0xff]
    %v180 = vld [vmem:[#allocation5 + $0x28] sm:$0xff]
    %v181 = vld [vmem:[#allocation5 + $0x30] sm:$0xff]
    %v182 = vld [vmem:[#allocation5 + $0x38] sm:$0xff]
    %v183 = vld [vmem:[#allocation5 + $0x40] sm:$0xff]
    %v184 = vld [vmem:[#allocation5 + $0x48] sm:$0xff]
    %v185 = vld [vmem:[#allocation5 + $0x50] sm:$0xff]
    %v186 = vld [vmem:[#allocation5 + $0x58] sm:$0xff]
    %v187 = vld [vmem:[#allocation5 + $0x60] sm:$0xff]
    %v188 = vld [vmem:[#allocation5 + $0x68] sm:$0xff]
    %v189 = vld [vmem:[#allocation5 + $0x70] sm:$0xff]
    %v190 = vld [vmem:[#allocation5 + $0x78] sm:$0xff]
    %v191 = vld [vmem:[#allocation5 + $0x80] sm:$0xff]
    %v192 = vld [vmem:[#allocation5 + $0x88] sm:$0xff]
    %v193 = vld [vmem:[#allocation5 + $0x90] sm:$0xff]
    %v194 = vld [vmem:[#allocation5 + $0x98] sm:$0xff]
    %v195 = vld [vmem:[#allocation5 + $0xa0] sm:$0xff]
    %v196 = vld [vmem:[#allocation5 + $0xa8] sm:$0xff]
    %v197 = vld [vmem:[#allocation5 + $0xb0] sm:$0xff]
    %v198 = vld [vmem:[#allocation5 + $0xb8] sm:$0xff]
    %v199 = vld [vmem:[#allocation5 + $0xc0] sm:$0xff]
    %v200 = vld [vmem:[#allocation5 + $0xc8] sm:$0xff]
    %v201 = vld [vmem:[#allocation5 + $0xd0] sm:$0xff]
    %v202 = vld [vmem:[#allocation5 + $0xd8] sm:$0xff]
    %v203 = vld [vmem:[#allocation5 + $0xe0] sm:$0xff]
    %v204 = vld [vmem:[#allocation5 + $0xe8] sm:$0xff]
    %v205 = vld [vmem:[#allocation5 + $0xf0] sm:$0xff]
    %v206 = vld [vmem:[#allocation5 + $0xf8] sm:$0xff]
    %v207 = vld [vmem:[#allocation5 + $0x100] sm:$0xff]
    %v208 = vld [vmem:[#allocation5 + $0x108] sm:$0xff]
    %v209 = vld [vmem:[#allocation5 + $0x110] sm:$0xff]
    %v210 = vld [vmem:[#allocation5 + $0x118] sm:$0xff]
    %v211 = vld [vmem:[#allocation5 + $0x120] sm:$0xff]
    %v212 = vld [vmem:[#allocation5 + $0x128] sm:$0xff]
    %v213 = vld [vmem:[#allocation5 + $0x130] sm:$0xff]
    %v214 = vld [vmem:[#allocation5 + $0x138] sm:$0xff]
    %v215 = vld [vmem:[#allocation5 + $0x140] sm:$0xff]
    %v216 = vld [vmem:[#allocation5 + $0x148] sm:$0xff]
    %v217 = vld [vmem:[#allocation5 + $0x150] sm:$0xff]
    %v218 = vld [vmem:[#allocation5 + $0x158] sm:$0xff]
    %v219 = vld [vmem:[#allocation5 + $0x160] sm:$0xff]
    %v220 = vld [vmem:[#allocation5 + $0x168] sm:$0xff]
    %v221 = vld [vmem:[#allocation5 + $0x170] sm:$0xff]
    %v222 = vld [vmem:[#allocation5 + $0x178] sm:$0xff]
    %v223 = vld [vmem:[#allocation5 + $0x180] sm:$0xff]
    %v224 = vld [vmem:[#allocation5 + $0x188] sm:$0xff]
    %v225 = vld [vmem:[#allocation5 + $0x190] sm:$0xff]
    %v226 = vld [vmem:[#allocation5 + $0x198] sm:$0xff]
    %v227 = vld [vmem:[#allocation5 + $0x1a0] sm:$0xff]
    %v228 = vld [vmem:[#allocation5 + $0x1a8] sm:$0xff]
    %v229 = vld [vmem:[#allocation5 + $0x1b0] sm:$0xff]
    %v230 = vld [vmem:[#allocation5 + $0x1b8] sm:$0xff]
    %v231 = vld [vmem:[#allocation5 + $0x1c0] sm:$0xff]
    %v232 = vld [vmem:[#allocation5 + $0x1c8] sm:$0xff]
    %v233 = vld [vmem:[#allocation5 + $0x1d0] sm:$0xff]
    %v234 = vld [vmem:[#allocation5 + $0x1d8] sm:$0xff]
    %v235 = vld [vmem:[#allocation5 + $0x1e0] sm:$0xff]
    %v236 = vld [vmem:[#allocation5 + $0x1e8] sm:$0xff]
    %v237 = vld [vmem:[#allocation5 + $0x1f0] sm:$0xff]
    %v238 = vld [vmem:[#allocation5 + $0x1f8] sm:$0xff]
    %v239 = vld [vmem:[#allocation5 + $0x200] sm:$0xff]
    %v240 = vld [vmem:[#allocation5 + $0x208] sm:$0xff]
    %v241 = vld [vmem:[#allocation5 + $0x210] sm:$0xff]
    %v242 = vld [vmem:[#allocation5 + $0x218] sm:$0xff]
    %v243 = vld [vmem:[#allocation5 + $0x220] sm:$0xff]
    %v244 = vld [vmem:[#allocation5 + $0x228] sm:$0xff]
    %v245 = vld [vmem:[#allocation5 + $0x230] sm:$0xff]
    %v246 = vld [vmem:[#allocation5 + $0x238] sm:$0xff]
    %v247 = vld [vmem:[#allocation5 + $0x240] sm:$0xff]
    %v248 = vld [vmem:[#allocation5 + $0x248] sm:$0xff]
    %v249 = vld [vmem:[#allocation5 + $0x250] sm:$0xff]
    %v250 = vld [vmem:[#allocation5 + $0x258] sm:$0xff]
    %v251 = vld [vmem:[#allocation5 + $0x260] sm:$0xff]
    %v252 = vld [vmem:[#allocation5 + $0x268] sm:$0xff]
    %v253 = vld [vmem:[#allocation5 + $0x270] sm:$0xff]
    %v254 = vld [vmem:[#allocation5 + $0x278] sm:$0xff]
    %v255 = vld [vmem:[#allocation5 + $0x280] sm:$0xff]
    %v256 = vld [vmem:[#allocation5 + $0x288] sm:$0xff]
    %v257 = vld [vmem:[#allocation5 + $0x290] sm:$0xff]
    %v258 = vld [vmem:[#allocation5 + $0x298] sm:$0xff]
    %v259 = vld [vmem:[#allocation5 + $0x2a0] sm:$0xff]
    %v260 = vld [vmem:[#allocation5 + $0x2a8] sm:$0xff]
    %v261 = vld [vmem:[#allocation5 + $0x2b0] sm:$0xff]
    %v262 = vld [vmem:[#allocation5 + $0x2b8] sm:$0xff]
    %v263 = vld [vmem:[#allocation5 + $0x2c0] sm:$0xff]
    %v264 = vld [vmem:[#allocation5 + $0x2c8] sm:$0xff]
    %v265 = vld [vmem:[#allocation5 + $0x2d0] sm:$0xff]
    %v266 = vld [vmem:[#allocation5 + $0x2d8] sm:$0xff]
    %v267 = vld [vmem:[#allocation5 + $0x2e0] sm:$0xff]
    %v268 = vld [vmem:[#allocation5 + $0x2e8] sm:$0xff]
    %v269 = vld [vmem:[#allocation5 + $0x2f0] sm:$0xff]
    %v270 = vld [vmem:[#allocation5 + $0x2f8] sm:$0xff]
    %v271 = vld [vmem:[#allocation5 + $0x300] sm:$0xff]
    %v272 = vld [vmem:[#allocation5 + $0x308] sm:$0xff]
    %v273 = vld [vmem:[#allocation5 + $0x310] sm:$0xff]
    %v274 = vld [vmem:[#allocation5 + $0x318] sm:$0xff]
    %v275 = vld [vmem:[#allocation5 + $0x320] sm:$0xff]
    %v276 = vld [vmem:[#allocation5 + $0x328] sm:$0xff]
    %v277 = vld [vmem:[#allocation5 + $0x330] sm:$0xff]
    %v278 = vld [vmem:[#allocation5 + $0x338] sm:$0xff]
    %v279 = vld [vmem:[#allocation5 + $0x340] sm:$0xff]
    %v280 = vld [vmem:[#allocation5 + $0x348] sm:$0xff]
    %v281 = vld [vmem:[#allocation5 + $0x350] sm:$0xff]
    %v282 = vld [vmem:[#allocation5 + $0x358] sm:$0xff]
    %v283 = vld [vmem:[#allocation5 + $0x360] sm:$0xff]
    %v284 = vld [vmem:[#allocation5 + $0x368] sm:$0xff]
    %v285 = vld [vmem:[#allocation5 + $0x370] sm:$0xff]
    %v286 = vld [vmem:[#allocation5 + $0x378] sm:$0xff]
    %v287 = vld [vmem:[#allocation5 + $0x380] sm:$0xff]
    %v288 = vld [vmem:[#allocation5 + $0x388] sm:$0xff]
    %v289 = vld [vmem:[#allocation5 + $0x390] sm:$0xff]
    %v290 = vld [vmem:[#allocation5 + $0x398] sm:$0xff]
    %v291 = vld [vmem:[#allocation5 + $0x3a0] sm:$0xff]
    %v292 = vld [vmem:[#allocation5 + $0x3a8] sm:$0xff]
    %v293 = vld [vmem:[#allocation5 + $0x3b0] sm:$0xff]
    %v294 = vld [vmem:[#allocation5 + $0x3b8] sm:$0xff]
    %v295 = vld [vmem:[#allocation5 + $0x3c0] sm:$0xff]
    %v296 = vld [vmem:[#allocation5 + $0x3c8] sm:$0xff]
    %v297 = vld [vmem:[#allocation5 + $0x3d0] sm:$0xff]
    %v298 = vld [vmem:[#allocation5 + $0x3d8] sm:$0xff]
    %v299 = vld [vmem:[#allocation5 + $0x3e0] sm:$0xff]
    %v300 = vld [vmem:[#allocation5 + $0x3e8] sm:$0xff]
    %v301 = vld [vmem:[#allocation5 + $0x3f0] sm:$0xff]
    %v302 = vld [vmem:[#allocation5 + $0x3f8] sm:$0xff]
    %v303 = vld [vmem:[#allocation5 + $0x400] sm:$0xff]
    %v304 = vld [vmem:[#allocation5 + $0x408] sm:$0xff]
    %v305 = vld [vmem:[#allocation5 + $0x410] sm:$0xff]
    %v306 = vld [vmem:[#allocation5 + $0x418] sm:$0xff]
    %v307 = vld [vmem:[#allocation5 + $0x420] sm:$0xff]
    %v308 = vld [vmem:[#allocation5 + $0x428] sm:$0xff]
    %v309 = vld [vmem:[#allocation5 + $0x430] sm:$0xff]
    %v310 = vld [vmem:[#allocation5 + $0x438] sm:$0xff]
    %v311 = vld [vmem:[#allocation5 + $0x440] sm:$0xff]
    %v312 = vld [vmem:[#allocation5 + $0x448] sm:$0xff]
    %v313 = vld [vmem:[#allocation5 + $0x450] sm:$0xff]
    %v314 = vld [vmem:[#allocation5 + $0x458] sm:$0xff]
    %v315 = vld [vmem:[#allocation5 + $0x460] sm:$0xff]
    %v316 = vld [vmem:[#allocation5 + $0x468] sm:$0xff]
    %v317 = vld [vmem:[#allocation5 + $0x470] sm:$0xff]
    %v318 = vld [vmem:[#allocation5 + $0x478] sm:$0xff]
    %v319 = vld [vmem:[#allocation5 + $0x480] sm:$0xff]
    %v320 = vld [vmem:[#allocation5 + $0x488] sm:$0xff]
    %v321 = vld [vmem:[#allocation5 + $0x490] sm:$0xff]
    %v322 = vld [vmem:[#allocation5 + $0x498] sm:$0xff]
    %v323 = vld [vmem:[#allocation5 + $0x4a0] sm:$0xff]
    %v324 = vld [vmem:[#allocation5 + $0x4a8] sm:$0xff]
    %v325 = vld [vmem:[#allocation5 + $0x4b0] sm:$0xff]
    %v326 = vld [vmem:[#allocation5 + $0x4b8] sm:$0xff]
    %v327 = vld [vmem:[#allocation5 + $0x4c0] sm:$0xff]
    %v328 = vld [vmem:[#allocation5 + $0x4c8] sm:$0xff]
    %v329 = vld [vmem:[#allocation5 + $0x4d0] sm:$0xff]
    %v330 = vld [vmem:[#allocation5 + $0x4d8] sm:$0xff]
    %v331 = vld [vmem:[#allocation5 + $0x4e0] sm:$0xff]
    %v332 = vld [vmem:[#allocation5 + $0x4e8] sm:$0xff]
    %v333 = vld [vmem:[#allocation5 + $0x4f0] sm:$0xff]
    %v334 = vld [vmem:[#allocation5 + $0x4f8] sm:$0xff]
    %v335 = vld [vmem:[#allocation5 + $0x500] sm:$0xff]
    %v336 = vld [vmem:[#allocation5 + $0x508] sm:$0xff]
    %v337 = vld [vmem:[#allocation5 + $0x510] sm:$0xff]
    %v338 = vld [vmem:[#allocation5 + $0x518] sm:$0xff]
    %v339 = vld [vmem:[#allocation5 + $0x520] sm:$0xff]
    %v340 = vld [vmem:[#allocation5 + $0x528] sm:$0xff]
    %v341 = vld [vmem:[#allocation5 + $0x530] sm:$0xff]
    %v342 = vld [vmem:[#allocation5 + $0x538] sm:$0xff]
    %v343 = vld [vmem:[#allocation5 + $0x540] sm:$0xff]
    %v344 = vld [vmem:[#allocation5 + $0x548] sm:$0xff]
    %v345 = vld [vmem:[#allocation5 + $0x550] sm:$0xff]
    %v346 = vld [vmem:[#allocation5 + $0x558] sm:$0xff]
    %v347 = vld [vmem:[#allocation5 + $0x560] sm:$0xff]
    %v348 = vld [vmem:[#allocation5 + $0x568] sm:$0xff]
    %v349 = vld [vmem:[#allocation5 + $0x570] sm:$0xff]
    %v350 = vld [vmem:[#allocation5 + $0x578] sm:$0xff]
    %v351 = vld [vmem:[#allocation5 + $0x580] sm:$0xff]
    %v352 = vld [vmem:[#allocation5 + $0x588] sm:$0xff]
    %v353 = vld [vmem:[#allocation5 + $0x590] sm:$0xff]
    %v354 = vld [vmem:[#allocation5 + $0x598] sm:$0xff]
    %v355 = vld [vmem:[#allocation5 + $0x5a0] sm:$0xff]
    %v356 = vld [vmem:[#allocation5 + $0x5a8] sm:$0xff]
    %v357 = vld [vmem:[#allocation5 + $0x5b0] sm:$0xff]
    %v358 = vld [vmem:[#allocation5 + $0x5b8] sm:$0xff]
    %v359 = vld [vmem:[#allocation5 + $0x5c0] sm:$0xff]
    %v360 = vld [vmem:[#allocation5 + $0x5c8] sm:$0xff]
    %v361 = vld [vmem:[#allocation5 + $0x5d0] sm:$0xff]
    %v362 = vld [vmem:[#allocation5 + $0x5d8] sm:$0xff]
    %v363 = vld [vmem:[#allocation5 + $0x5e0] sm:$0xff]
    %v364 = vld [vmem:[#allocation5 + $0x5e8] sm:$0xff]
    %v365 = vld [vmem:[#allocation5 + $0x5f0] sm:$0xff]
    %v366 = vld [vmem:[#allocation5 + $0x5f8] sm:$0xff]
    %v367 = vld [vmem:[#allocation5 + $0x600] sm:$0xff]
    %v368 = vld [vmem:[#allocation5 + $0x608] sm:$0xff]
    %v369 = vld [vmem:[#allocation5 + $0x610] sm:$0xff]
    %v370 = vld [vmem:[#allocation5 + $0x618] sm:$0xff]
    %v371 = vld [vmem:[#allocation5 + $0x620] sm:$0xff]
    %v372 = vld [vmem:[#allocation5 + $0x628] sm:$0xff]
    %v373 = vld [vmem:[#allocation5 + $0x630] sm:$0xff]
    %v374 = vld [vmem:[#allocation5 + $0x638] sm:$0xff]
    %v375 = vld [vmem:[#allocation5 + $0x640] sm:$0xff]
    %v376 = vld [vmem:[#allocation5 + $0x648] sm:$0xff]
    %v377 = vld [vmem:[#allocation5 + $0x650] sm:$0xff]
    %v378 = vld [vmem:[#allocation5 + $0x658] sm:$0xff]
    %v379 = vld [vmem:[#allocation5 + $0x660] sm:$0xff]
    %v380 = vld [vmem:[#allocation5 + $0x668] sm:$0xff]
    %v381 = vld [vmem:[#allocation5 + $0x670] sm:$0xff]
    %v382 = vld [vmem:[#allocation5 + $0x678] sm:$0xff]
    %v383 = vld [vmem:[#allocation5 + $0x680] sm:$0xff]
    %v384 = vld [vmem:[#allocation5 + $0x688] sm:$0xff]
    %v385 = vld [vmem:[#allocation5 + $0x690] sm:$0xff]
    %v386 = vld [vmem:[#allocation5 + $0x698] sm:$0xff]
    %v387 = vld [vmem:[#allocation5 + $0x6a0] sm:$0xff]
    %v388 = vld [vmem:[#allocation5 + $0x6a8] sm:$0xff]
    %v389 = vld [vmem:[#allocation5 + $0x6b0] sm:$0xff]
    %v390 = vld [vmem:[#allocation5 + $0x6b8] sm:$0xff]
    %v391 = vld [vmem:[#allocation5 + $0x6c0] sm:$0xff]
    %v392 = vld [vmem:[#allocation5 + $0x6c8] sm:$0xff]
    %v393 = vld [vmem:[#allocation5 + $0x6d0] sm:$0xff]
    %v394 = vld [vmem:[#allocation5 + $0x6d8] sm:$0xff]
    %v395 = vld [vmem:[#allocation5 + $0x6e0] sm:$0xff]
    %v396 = vld [vmem:[#allocation5 + $0x6e8] sm:$0xff]
    %v397 = vld [vmem:[#allocation5 + $0x6f0] sm:$0xff]
    %v398 = vld [vmem:[#allocation5 + $0x6f8] sm:$0xff]
    %v399 = vld [vmem:[#allocation5 + $0x700] sm:$0xff]
    %v400 = vld [vmem:[#allocation5 + $0x708] sm:$0xff]
    %v401 = vld [vmem:[#allocation5 + $0x710] sm:$0xff]
    %v402 = vld [vmem:[#allocation5 + $0x718] sm:$0xff]
    %v403 = vld [vmem:[#allocation5 + $0x720] sm:$0xff]
    %v404 = vld [vmem:[#allocation5 + $0x728] sm:$0xff]
    %v405 = vld [vmem:[#allocation5 + $0x730] sm:$0xff]
    %v406 = vld [vmem:[#allocation5 + $0x738] sm:$0xff]
    %v407 = vld [vmem:[#allocation5 + $0x740] sm:$0xff]
    %v408 = vld [vmem:[#allocation5 + $0x748] sm:$0xff]
    %v409 = vld [vmem:[#allocation5 + $0x750] sm:$0xff]
    %v410 = vld [vmem:[#allocation5 + $0x758] sm:$0xff]
    %v411 = vld [vmem:[#allocation5 + $0x760] sm:$0xff]
    %v412 = vld [vmem:[#allocation5 + $0x768] sm:$0xff]
    %v413 = vld [vmem:[#allocation5 + $0x770] sm:$0xff]
    %v414 = vld [vmem:[#allocation5 + $0x778] sm:$0xff]
    %v415 = vld [vmem:[#allocation5 + $0x780] sm:$0xff]
    %v416 = vld [vmem:[#allocation5 + $0x788] sm:$0xff]
    %v417 = vld [vmem:[#allocation5 + $0x790] sm:$0xff]
    %v418 = vld [vmem:[#allocation5 + $0x798] sm:$0xff]
    %v419 = vld [vmem:[#allocation5 + $0x7a0] sm:$0xff]
    %v420 = vld [vmem:[#allocation5 + $0x7a8] sm:$0xff]
    %v421 = vld [vmem:[#allocation5 + $0x7b0] sm:$0xff]
    %v422 = vld [vmem:[#allocation5 + $0x7b8] sm:$0xff]
    %v423 = vld [vmem:[#allocation5 + $0x7c0] sm:$0xff]
    %v424 = vld [vmem:[#allocation5 + $0x7c8] sm:$0xff]
    %v425 = vld [vmem:[#allocation5 + $0x7d0] sm:$0xff]
    %v426 = vld [vmem:[#allocation5 + $0x7d8] sm:$0xff]
    %v427 = vld [vmem:[#allocation5 + $0x7e0] sm:$0xff]
    %v428 = vld [vmem:[#allocation5 + $0x7e8] sm:$0xff]
    %v429 = vld [vmem:[#allocation5 + $0x7f0] sm:$0xff]
    %v430 = vld [vmem:[#allocation5 + $0x7f8] sm:$0xff]
    %v431 = vld [vmem:[#allocation5 + $0x800] sm:$0xff]
    %v432 = vld [vmem:[#allocation5 + $0x808] sm:$0xff]
    %v433 = vld [vmem:[#allocation5 + $0x810] sm:$0xff]
    %v434 = vld [vmem:[#allocation5 + $0x818] sm:$0xff]
    %v435 = vld [vmem:[#allocation5 + $0x820] sm:$0xff]
    %v436 = vld [vmem:[#allocation5 + $0x828] sm:$0xff]
    %v437 = vld [vmem:[#allocation5 + $0x830] sm:$0xff]
    %v438 = vld [vmem:[#allocation5 + $0x838] sm:$0xff]
    %v439 = vld [vmem:[#allocation5 + $0x840] sm:$0xff]
    %v440 = vld [vmem:[#allocation5 + $0x848] sm:$0xff]
    %v441 = vld [vmem:[#allocation5 + $0x850] sm:$0xff]
    %v442 = vld [vmem:[#allocation5 + $0x858] sm:$0xff]
    %v443 = vld [vmem:[#allocation5 + $0x860] sm:$0xff]
    %v444 = vld [vmem:[#allocation5 + $0x868] sm:$0xff]
    %v445 = vld [vmem:[#allocation5 + $0x870] sm:$0xff]
    %v446 = vld [vmem:[#allocation5 + $0x878] sm:$0xff]
    %v447 = vld [vmem:[#allocation5 + $0x880] sm:$0xff]
    %v448 = vld [vmem:[#allocation5 + $0x888] sm:$0xff]
    %v449 = vld [vmem:[#allocation5 + $0x890] sm:$0xff]
    %v450 = vld [vmem:[#allocation5 + $0x898] sm:$0xff]
    %v451 = vld [vmem:[#allocation5 + $0x8a0] sm:$0xff]
    %v452 = vld [vmem:[#allocation5 + $0x8a8] sm:$0xff]
    %v453 = vld [vmem:[#allocation5 + $0x8b0] sm:$0xff]
    %v454 = vld [vmem:[#allocation5 + $0x8b8] sm:$0xff]
    %v455 = vld [vmem:[#allocation5 + $0x8c0] sm:$0xff]
    %v456 = vld [vmem:[#allocation5 + $0x8c8] sm:$0xff]
    %v457 = vld [vmem:[#allocation5 + $0x8d0] sm:$0xff]
    %v458 = vld [vmem:[#allocation5 + $0x8d8] sm:$0xff]
    %v459 = vld [vmem:[#allocation5 + $0x8e0] sm:$0xff]
    %v460 = vld [vmem:[#allocation5 + $0x8e8] sm:$0xff]
    %v461 = vld [vmem:[#allocation5 + $0x8f0] sm:$0xff]
    %v462 = vld [vmem:[#allocation5 + $0x8f8] sm:$0xff]
    %v463 = vld [vmem:[#allocation5 + $0x900] sm:$0xff]
    %v464 = vld [vmem:[#allocation5 + $0x908] sm:$0xff]
    %v465 = vld [vmem:[#allocation5 + $0x910] sm:$0xff]
    %v466 = vld [vmem:[#allocation5 + $0x918] sm:$0xff]
    %v467 = vld [vmem:[#allocation5 + $0x920] sm:$0xff]
    %v468 = vld [vmem:[#allocation5 + $0x928] sm:$0xff]
    %v469 = vld [vmem:[#allocation5 + $0x930] sm:$0xff]
    %v470 = vld [vmem:[#allocation5 + $0x938] sm:$0xff]
    %v471 = vld [vmem:[#allocation5 + $0x940] sm:$0xff]
    %v472 = vld [vmem:[#allocation5 + $0x948] sm:$0xff]
    %v473 = vld [vmem:[#allocation5 + $0x950] sm:$0xff]
    %v474 = vld [vmem:[#allocation5 + $0x958] sm:$0xff]
    %v475 = vld [vmem:[#allocation5 + $0x960] sm:$0xff]
    %v476 = vld [vmem:[#allocation5 + $0x968] sm:$0xff]
    %v477 = vld [vmem:[#allocation5 + $0x970] sm:$0xff]
    %v478 = vld [vmem:[#allocation5 + $0x978] sm:$0xff]
    %v479 = vld [vmem:[#allocation5 + $0x980] sm:$0xff]
    %v480 = vld [vmem:[#allocation5 + $0x988] sm:$0xff]
    %v481 = vld [vmem:[#allocation5 + $0x990] sm:$0xff]
    %v482 = vld [vmem:[#allocation5 + $0x998] sm:$0xff]
    %v483 = vld [vmem:[#allocation5 + $0x9a0] sm:$0xff]
    %v484 = vld [vmem:[#allocation5 + $0x9a8] sm:$0xff]
    %v485 = vld [vmem:[#allocation5 + $0x9b0] sm:$0xff]
    %v486 = vld [vmem:[#allocation5 + $0x9b8] sm:$0xff]
    %v487 = vld [vmem:[#allocation5 + $0x9c0] sm:$0xff]
    %v488 = vld [vmem:[#allocation5 + $0x9c8] sm:$0xff]
    %v489 = vld [vmem:[#allocation5 + $0x9d0] sm:$0xff]
    %v490 = vld [vmem:[#allocation5 + $0x9d8] sm:$0xff]
    %v491 = vld [vmem:[#allocation5 + $0x9e0] sm:$0xff]
    %v492 = vld [vmem:[#allocation5 + $0x9e8] sm:$0xff]
    %v493 = vld [vmem:[#allocation5 + $0x9f0] sm:$0xff]
    %v494 = vld [vmem:[#allocation5 + $0x9f8] sm:$0xff]
    %v495 = vld [vmem:[#allocation5 + $0xa00] sm:$0xff]
    %v496 = vld [vmem:[#allocation5 + $0xa08] sm:$0xff]
    %v497 = vld [vmem:[#allocation5 + $0xa10] sm:$0xff]
    %v498 = vld [vmem:[#allocation5 + $0xa18] sm:$0xff]
    %v499 = vld [vmem:[#allocation5 + $0xa20] sm:$0xff]
    %v500 = vld [vmem:[#allocation5 + $0xa28] sm:$0xff]
    %v501 = vld [vmem:[#allocation5 + $0xa30] sm:$0xff]
    %v502 = vld [vmem:[#allocation5 + $0xa38] sm:$0xff]
    %v503 = vld [vmem:[#allocation5 + $0xa40] sm:$0xff]
    %v504 = vld [vmem:[#allocation5 + $0xa48] sm:$0xff]
    %v505 = vld [vmem:[#allocation5 + $0xa50] sm:$0xff]
    %v506 = vld [vmem:[#allocation5 + $0xa58] sm:$0xff]
    %v507 = vld [vmem:[#allocation5 + $0xa60] sm:$0xff]
    %v508 = vld [vmem:[#allocation5 + $0xa68] sm:$0xff]
    %v509 = vld [vmem:[#allocation5 + $0xa70] sm:$0xff]
    %v510 = vld [vmem:[#allocation5 + $0xa78] sm:$0xff]
    %v511 = vld [vmem:[#allocation5 + $0xa80] sm:$0xff]
    %v512 = vld [vmem:[#allocation5 + $0xa88] sm:$0xff]
    %v513 = vld [vmem:[#allocation5 + $0xa90] sm:$0xff]
    %v514 = vld [vmem:[#allocation5 + $0xa98] sm:$0xff]
    %v515 = vld [vmem:[#allocation5 + $0xaa0] sm:$0xff]
    %v516 = vld [vmem:[#allocation5 + $0xaa8] sm:$0xff]
    %v517 = vld [vmem:[#allocation5 + $0xab0] sm:$0xff]
    %v518 = vld [vmem:[#allocation5 + $0xab8] sm:$0xff]
    %v519 = vld [vmem:[#allocation5 + $0xac0] sm:$0xff]
    %v520 = vld [vmem:[#allocation5 + $0xac8] sm:$0xff]
    %v521 = vld [vmem:[#allocation5 + $0xad0] sm:$0xff]
    %v522 = vld [vmem:[#allocation5 + $0xad8] sm:$0xff]
    %v523 = vld [vmem:[#allocation5 + $0xae0] sm:$0xff]
    %v524 = vld [vmem:[#allocation5 + $0xae8] sm:$0xff]
    %v525 = vld [vmem:[#allocation5 + $0xaf0] sm:$0xff]
    %v526 = vld [vmem:[#allocation5 + $0xaf8] sm:$0xff]
    %v527 = vld [vmem:[#allocation5 + $0xb00] sm:$0xff]
    %v528 = vld [vmem:[#allocation5 + $0xb08] sm:$0xff]
    %v529 = vld [vmem:[#allocation5 + $0xb10] sm:$0xff]
    %v530 = vld [vmem:[#allocation5 + $0xb18] sm:$0xff]
    %v531 = vld [vmem:[#allocation5 + $0xb20] sm:$0xff]
    %v532 = vld [vmem:[#allocation5 + $0xb28] sm:$0xff]
    %v533 = vld [vmem:[#allocation5 + $0xb30] sm:$0xff]
    %v534 = vld [vmem:[#allocation5 + $0xb38] sm:$0xff]
    %v535 = vld [vmem:[#allocation5 + $0xb40] sm:$0xff]
    %v536 = vld [vmem:[#allocation5 + $0xb48] sm:$0xff]
    %v537 = vld [vmem:[#allocation5 + $0xb50] sm:$0xff]
    %v538 = vld [vmem:[#allocation5 + $0xb58] sm:$0xff]
    %v539 = vld [vmem:[#allocation5 + $0xb60] sm:$0xff]
    %v540 = vld [vmem:[#allocation5 + $0xb68] sm:$0xff]
    %v541 = vld [vmem:[#allocation5 + $0xb70] sm:$0xff]
    %v542 = vld [vmem:[#allocation5 + $0xb78] sm:$0xff]
    %v543 = vld [vmem:[#allocation5 + $0xb80] sm:$0xff]
    %v544 = vld [vmem:[#allocation5 + $0xb88] sm:$0xff]
    %v545 = vld [vmem:[#allocation5 + $0xb90] sm:$0xff]
    %v546 = vld [vmem:[#allocation5 + $0xb98] sm:$0xff]
    %v547 = vld [vmem:[#allocation5 + $0xba0] sm:$0xff]
    %v548 = vld [vmem:[#allocation5 + $0xba8] sm:$0xff]
    %v549 = vld [vmem:[#allocation5 + $0xbb0] sm:$0xff]
    %v550 = vld [vmem:[#allocation5 + $0xbb8] sm:$0xff]
    %v551 = vld [vmem:[#allocation5 + $0xbc0] sm:$0xff]
    %v552 = vld [vmem:[#allocation5 + $0xbc8] sm:$0xff]
    %v553 = vld [vmem:[#allocation5 + $0xbd0] sm:$0xff]
    %v554 = vld [vmem:[#allocation5 + $0xbd8] sm:$0xff]
    %v555 = vld [vmem:[#allocation5 + $0xbe0] sm:$0xff]
    %v556 = vld [vmem:[#allocation5 + $0xbe8] sm:$0xff]
    %v557 = vld [vmem:[#allocation5 + $0xbf0] sm:$0xff]
    %v558 = vld [vmem:[#allocation5 + $0xbf8] sm:$0xff]
    %v559 = vld [vmem:[#allocation5 + $0xc00] sm:$0xff]
    %v560 = vld [vmem:[#allocation5 + $0xc08] sm:$0xff]
    %v561 = vld [vmem:[#allocation5 + $0xc10] sm:$0xff]
    %v562 = vld [vmem:[#allocation5 + $0xc18] sm:$0xff]
    %v563 = vld [vmem:[#allocation5 + $0xc20] sm:$0xff]
    %v564 = vld [vmem:[#allocation5 + $0xc28] sm:$0xff]
    %v565 = vld [vmem:[#allocation5 + $0xc30] sm:$0xff]
    %v566 = vld [vmem:[#allocation5 + $0xc38] sm:$0xff]
    %v567 = vld [vmem:[#allocation5 + $0xc40] sm:$0xff]
    %v568 = vld [vmem:[#allocation5 + $0xc48] sm:$0xff]
    %v569 = vld [vmem:[#allocation5 + $0xc50] sm:$0xff]
    %v570 = vld [vmem:[#allocation5 + $0xc58] sm:$0xff]
    %v571 = vld [vmem:[#allocation5 + $0xc60] sm:$0xff]
    %v572 = vld [vmem:[#allocation5 + $0xc68] sm:$0xff]
    %v573 = vld [vmem:[#allocation5 + $0xc70] sm:$0xff]
    %v574 = vld [vmem:[#allocation5 + $0xc78] sm:$0xff]
    %v575 = vld [vmem:[#allocation5 + $0xc80] sm:$0xff]
    %v576 = vld [vmem:[#allocation5 + $0xc88] sm:$0xff]
    %v577 = vld [vmem:[#allocation5 + $0xc90] sm:$0xff]
    %v578 = vld [vmem:[#allocation5 + $0xc98] sm:$0xff]
    %v579 = vld [vmem:[#allocation5 + $0xca0] sm:$0xff]
    %v580 = vld [vmem:[#allocation5 + $0xca8] sm:$0xff]
    %v581 = vld [vmem:[#allocation5 + $0xcb0] sm:$0xff]
    %v582 = vld [vmem:[#allocation5 + $0xcb8] sm:$0xff]
    %v583 = vld [vmem:[#allocation5 + $0xcc0] sm:$0xff]
    %v584 = vld [vmem:[#allocation5 + $0xcc8] sm:$0xff]
    %v585 = vld [vmem:[#allocation5 + $0xcd0] sm:$0xff]
    %v586 = vld [vmem:[#allocation5 + $0xcd8] sm:$0xff]
    %v587 = vld [vmem:[#allocation5 + $0xce0] sm:$0xff]
    %v588 = vld [vmem:[#allocation5 + $0xce8] sm:$0xff]
    %v589 = vld [vmem:[#allocation5 + $0xcf0] sm:$0xff]
    %v590 = vld [vmem:[#allocation5 + $0xcf8] sm:$0xff]
    %v591 = vld [vmem:[#allocation5 + $0xd00] sm:$0xff]
    %v592 = vld [vmem:[#allocation5 + $0xd08] sm:$0xff]
    %v593 = vld [vmem:[#allocation5 + $0xd10] sm:$0xff]
    %v594 = vld [vmem:[#allocation5 + $0xd18] sm:$0xff]
    %v595 = vld [vmem:[#allocation5 + $0xd20] sm:$0xff]
    %v596 = vld [vmem:[#allocation5 + $0xd28] sm:$0xff]
    %v597 = vld [vmem:[#allocation5 + $0xd30] sm:$0xff]
    %v598 = vld [vmem:[#allocation5 + $0xd38] sm:$0xff]
    %v599 = vld [vmem:[#allocation5 + $0xd40] sm:$0xff]
    %v600 = vld [vmem:[#allocation5 + $0xd48] sm:$0xff]
    %v601 = vld [vmem:[#allocation5 + $0xd50] sm:$0xff]
    %v602 = vld [vmem:[#allocation5 + $0xd58] sm:$0xff]
    %v603 = vld [vmem:[#allocation5 + $0xd60] sm:$0xff]
    %v604 = vld [vmem:[#allocation5 + $0xd68] sm:$0xff]
    %v605 = vld [vmem:[#allocation5 + $0xd70] sm:$0xff]
    %v606 = vld [vmem:[#allocation5 + $0xd78] sm:$0xff]
    %v607 = vld [vmem:[#allocation5 + $0xd80] sm:$0xff]
    %v608 = vld [vmem:[#allocation5 + $0xd88] sm:$0xff]
    %v609 = vld [vmem:[#allocation5 + $0xd90] sm:$0xff]
    %v610 = vld [vmem:[#allocation5 + $0xd98] sm:$0xff]
    %v611 = vld [vmem:[#allocation5 + $0xda0] sm:$0xff]
    %v612 = vld [vmem:[#allocation5 + $0xda8] sm:$0xff]
    %v613 = vld [vmem:[#allocation5 + $0xdb0] sm:$0xff]
    %v614 = vld [vmem:[#allocation5 + $0xdb8] sm:$0xff]
    %v615 = vld [vmem:[#allocation5 + $0xdc0] sm:$0xff]
    %v616 = vld [vmem:[#allocation5 + $0xdc8] sm:$0xff]
    %v617 = vld [vmem:[#allocation5 + $0xdd0] sm:$0xff]
    %v618 = vld [vmem:[#allocation5 + $0xdd8] sm:$0xff]
    %v619 = vld [vmem:[#allocation5 + $0xde0] sm:$0xff]
    %v620 = vld [vmem:[#allocation5 + $0xde8] sm:$0xff]
    %v621 = vld [vmem:[#allocation5 + $0xdf0] sm:$0xff]
    %v622 = vld [vmem:[#allocation5 + $0xdf8] sm:$0xff]
    %v623 = vld [vmem:[#allocation5 + $0xe00] sm:$0xff]
    %v624 = vld [vmem:[#allocation5 + $0xe08] sm:$0xff]
    %v625 = vld [vmem:[#allocation5 + $0xe10] sm:$0xff]
    %v626 = vld [vmem:[#allocation5 + $0xe18] sm:$0xff]
    %v627 = vld [vmem:[#allocation5 + $0xe20] sm:$0xff]
    %v628 = vld [vmem:[#allocation5 + $0xe28] sm:$0xff]
    %v629 = vld [vmem:[#allocation5 + $0xe30] sm:$0xff]
    %v630 = vld [vmem:[#allocation5 + $0xe38] sm:$0xff]
    %v631 = vld [vmem:[#allocation5 + $0xe40] sm:$0xff]
    %v632 = vld [vmem:[#allocation5 + $0xe48] sm:$0xff]
    %v633 = vld [vmem:[#allocation5 + $0xe50] sm:$0xff]
    %v634 = vld [vmem:[#allocation5 + $0xe58] sm:$0xff]
    %v635 = vld [vmem:[#allocation5 + $0xe60] sm:$0xff]
    %v636 = vld [vmem:[#allocation5 + $0xe68] sm:$0xff]
    %v637 = vld [vmem:[#allocation5 + $0xe70] sm:$0xff]
    %v638 = vld [vmem:[#allocation5 + $0xe78] sm:$0xff]
    %v639 = vld [vmem:[#allocation5 + $0xe80] sm:$0xff]
    %v640 = vld [vmem:[#allocation5 + $0xe88] sm:$0xff]
    %v641 = vld [vmem:[#allocation5 + $0xe90] sm:$0xff]
    %v642 = vld [vmem:[#allocation5 + $0xe98] sm:$0xff]
    %v643 = vld [vmem:[#allocation5 + $0xea0] sm:$0xff]
    %v644 = vld [vmem:[#allocation5 + $0xea8] sm:$0xff]
    %v645 = vld [vmem:[#allocation5 + $0xeb0] sm:$0xff]
    %v646 = vld [vmem:[#allocation5 + $0xeb8] sm:$0xff]
    %v647 = vld [vmem:[#allocation5 + $0xec0] sm:$0xff]
    %v648 = vld [vmem:[#allocation5 + $0xec8] sm:$0xff]
    %v649 = vld [vmem:[#allocation5 + $0xed0] sm:$0xff]
    %v650 = vld [vmem:[#allocation5 + $0xed8] sm:$0xff]
    %v651 = vld [vmem:[#allocation5 + $0xee0] sm:$0xff]
    %v652 = vld [vmem:[#allocation5 + $0xee8] sm:$0xff]
    %v653 = vld [vmem:[#allocation5 + $0xef0] sm:$0xff]
    %v654 = vld [vmem:[#allocation5 + $0xef8] sm:$0xff]
    %v655 = vld [vmem:[#allocation5 + $0xf00] sm:$0xff]
    %v656 = vld [vmem:[#allocation5 + $0xf08] sm:$0xff]
    %v657 = vld [vmem:[#allocation5 + $0xf10] sm:$0xff]
    %v658 = vld [vmem:[#allocation5 + $0xf18] sm:$0xff]
    %v659 = vld [vmem:[#allocation5 + $0xf20] sm:$0xff]
    %v660 = vld [vmem:[#allocation5 + $0xf28] sm:$0xff]
    %v661 = vld [vmem:[#allocation5 + $0xf30] sm:$0xff]
    %v662 = vld [vmem:[#allocation5 + $0xf38] sm:$0xff]
    %v663 = vld [vmem:[#allocation5 + $0xf40] sm:$0xff]
    %v664 = vld [vmem:[#allocation5 + $0xf48] sm:$0xff]
    %v665 = vld [vmem:[#allocation5 + $0xf50] sm:$0xff]
    %v666 = vld [vmem:[#allocation5 + $0xf58] sm:$0xff]
    %v667 = vld [vmem:[#allocation5 + $0xf60] sm:$0xff]
    %v668 = vld [vmem:[#allocation5 + $0xf68] sm:$0xff]
    %v669 = vld [vmem:[#allocation5 + $0xf70] sm:$0xff]
    %v670 = vld [vmem:[#allocation5 + $0xf78] sm:$0xff]
    %v671 = vld [vmem:[#allocation5 + $0xf80] sm:$0xff]
    %v672 = vld [vmem:[#allocation5 + $0xf88] sm:$0xff]
    %v673 = vld [vmem:[#allocation5 + $0xf90] sm:$0xff]
    %v674 = vld [vmem:[#allocation5 + $0xf98] sm:$0xff]
    %v675 = vld [vmem:[#allocation5 + $0xfa0] sm:$0xff]
    %v676 = vld [vmem:[#allocation5 + $0xfa8] sm:$0xff]
    %v677 = vld [vmem:[#allocation5 + $0xfb0] sm:$0xff]
    %v678 = vld [vmem:[#allocation5 + $0xfb8] sm:$0xff]
    %v679 = vld [vmem:[#allocation5 + $0xfc0] sm:$0xff]
    %v680 = vld [vmem:[#allocation5 + $0xfc8] sm:$0xff]
    %v681 = vld [vmem:[#allocation5 + $0xfd0] sm:$0xff]
    %v682 = vld [vmem:[#allocation5 + $0xfd8] sm:$0xff]
    %v683 = vld [vmem:[#allocation5 + $0xfe0] sm:$0xff]
    %v684 = vld [vmem:[#allocation5 + $0xfe8] sm:$0xff]
    %v685 = vld [vmem:[#allocation5 + $0xff0] sm:$0xff]
    %v686 = vld [vmem:[#allocation5 + $0xff8] sm:$0xff]
    %v687 = vld [vmem:[#allocation7] sm:$0xf]
    %v689 = vlaneseq
    %v690 = vshrl.u32 %v689, 7
    %v691 = vsub.s32 0, %v690
    %v692 = vrot.slane %v687, %v691
    %v693 = vlaneseq
    %v694 = vshrl.u32 %v693, 7
    %v695 = vsub.s32 1, %v694
    %v696 = vrot.slane %v687, %v695
    %v697 = vlaneseq
    %v698 = vshrl.u32 %v697, 7
    %v699 = vsub.s32 2, %v698
    %v700 = vrot.slane %v687, %v699
    %v701 = vlaneseq
    %v702 = vshrl.u32 %v701, 7
    %v703 = vsub.s32 3, %v702
    %v704 = vrot.slane %v687, %v703
    %v1221 = vunpack.c.l.b16 %v175
    %v1222 = vunpack.c.h.b16 %v175
    %v1223 = vunpack.c.l.b16 %v176
    %v1224 = vunpack.c.h.b16 %v176
    %v1225 = vunpack.c.l.b16 %v177
    %v1226 = vunpack.c.h.b16 %v177
    %v1227 = vunpack.c.l.b16 %v178
    %v1228 = vunpack.c.h.b16 %v178
    %v1229 = vunpack.c.l.b16 %v179
    %v1230 = vunpack.c.h.b16 %v179
    %v1231 = vunpack.c.l.b16 %v180
    %v1232 = vunpack.c.h.b16 %v180
    %v1233 = vunpack.c.l.b16 %v181
    %v1234 = vunpack.c.h.b16 %v181
    %v1235 = vunpack.c.l.b16 %v182
    %v1236 = vunpack.c.h.b16 %v182
    %v1237 = vunpack.c.l.b16 %v183
    %v1238 = vunpack.c.h.b16 %v183
    %v1239 = vunpack.c.l.b16 %v184
    %v1240 = vunpack.c.h.b16 %v184
    %v1241 = vunpack.c.l.b16 %v185
    %v1242 = vunpack.c.h.b16 %v185
    %v1243 = vunpack.c.l.b16 %v186
    %v1244 = vunpack.c.h.b16 %v186
    %v1245 = vunpack.c.l.b16 %v187
    %v1246 = vunpack.c.h.b16 %v187
    %v1247 = vunpack.c.l.b16 %v188
    %v1248 = vunpack.c.h.b16 %v188
    %v1249 = vunpack.c.l.b16 %v189
    %v1250 = vunpack.c.h.b16 %v189
    %v1251 = vunpack.c.l.b16 %v190
    %v1252 = vunpack.c.h.b16 %v190
    %v1253 = vunpack.c.l.b16 %v191
    %v1254 = vunpack.c.h.b16 %v191
    %v1255 = vunpack.c.l.b16 %v192
    %v1256 = vunpack.c.h.b16 %v192
    %v1257 = vunpack.c.l.b16 %v193
    %v1258 = vunpack.c.h.b16 %v193
    %v1259 = vunpack.c.l.b16 %v194
    %v1260 = vunpack.c.h.b16 %v194
    %v1261 = vunpack.c.l.b16 %v195
    %v1262 = vunpack.c.h.b16 %v195
    %v1263 = vunpack.c.l.b16 %v196
    %v1264 = vunpack.c.h.b16 %v196
    %v1265 = vunpack.c.l.b16 %v197
    %v1266 = vunpack.c.h.b16 %v197
    %v1267 = vunpack.c.l.b16 %v198
    %v1268 = vunpack.c.h.b16 %v198
    %v1269 = vunpack.c.l.b16 %v199
    %v1270 = vunpack.c.h.b16 %v199
    %v1271 = vunpack.c.l.b16 %v200
    %v1272 = vunpack.c.h.b16 %v200
    %v1273 = vunpack.c.l.b16 %v201
    %v1274 = vunpack.c.h.b16 %v201
    %v1275 = vunpack.c.l.b16 %v202
    %v1276 = vunpack.c.h.b16 %v202
    %v1277 = vunpack.c.l.b16 %v203
    %v1278 = vunpack.c.h.b16 %v203
    %v1279 = vunpack.c.l.b16 %v204
    %v1280 = vunpack.c.h.b16 %v204
    %v1281 = vunpack.c.l.b16 %v205
    %v1282 = vunpack.c.h.b16 %v205
    %v1283 = vunpack.c.l.b16 %v206
    %v1284 = vunpack.c.h.b16 %v206
    %v1285 = vunpack.c.l.b16 %v207
    %v1286 = vunpack.c.h.b16 %v207
    %v1287 = vunpack.c.l.b16 %v208
    %v1288 = vunpack.c.h.b16 %v208
    %v1289 = vunpack.c.l.b16 %v209
    %v1290 = vunpack.c.h.b16 %v209
    %v1291 = vunpack.c.l.b16 %v210
    %v1292 = vunpack.c.h.b16 %v210
    %v1293 = vunpack.c.l.b16 %v211
    %v1294 = vunpack.c.h.b16 %v211
    %v1295 = vunpack.c.l.b16 %v212
    %v1296 = vunpack.c.h.b16 %v212
    %v1297 = vunpack.c.l.b16 %v213
    %v1298 = vunpack.c.h.b16 %v213
    %v1299 = vunpack.c.l.b16 %v214
    %v1300 = vunpack.c.h.b16 %v214
    %v1301 = vunpack.c.l.b16 %v215
    %v1302 = vunpack.c.h.b16 %v215
    %v1303 = vunpack.c.l.b16 %v216
    %v1304 = vunpack.c.h.b16 %v216
    %v1305 = vunpack.c.l.b16 %v217
    %v1306 = vunpack.c.h.b16 %v217
    %v1307 = vunpack.c.l.b16 %v218
    %v1308 = vunpack.c.h.b16 %v218
    %v1309 = vunpack.c.l.b16 %v219
    %v1310 = vunpack.c.h.b16 %v219
    %v1311 = vunpack.c.l.b16 %v220
    %v1312 = vunpack.c.h.b16 %v220
    %v1313 = vunpack.c.l.b16 %v221
    %v1314 = vunpack.c.h.b16 %v221
    %v1315 = vunpack.c.l.b16 %v222
    %v1316 = vunpack.c.h.b16 %v222
    %v1317 = vunpack.c.l.b16 %v223
    %v1318 = vunpack.c.h.b16 %v223
    %v1319 = vunpack.c.l.b16 %v224
    %v1320 = vunpack.c.h.b16 %v224
    %v1321 = vunpack.c.l.b16 %v225
    %v1322 = vunpack.c.h.b16 %v225
    %v1323 = vunpack.c.l.b16 %v226
    %v1324 = vunpack.c.h.b16 %v226
    %v1325 = vunpack.c.l.b16 %v227
    %v1326 = vunpack.c.h.b16 %v227
    %v1327 = vunpack.c.l.b16 %v228
    %v1328 = vunpack.c.h.b16 %v228
    %v1329 = vunpack.c.l.b16 %v229
    %v1330 = vunpack.c.h.b16 %v229
    %v1331 = vunpack.c.l.b16 %v230
    %v1332 = vunpack.c.h.b16 %v230
    %v1333 = vunpack.c.l.b16 %v231
    %v1334 = vunpack.c.h.b16 %v231
    %v1335 = vunpack.c.l.b16 %v232
    %v1336 = vunpack.c.h.b16 %v232
    %v1337 = vunpack.c.l.b16 %v233
    %v1338 = vunpack.c.h.b16 %v233
    %v1339 = vunpack.c.l.b16 %v234
    %v1340 = vunpack.c.h.b16 %v234
    %v1341 = vunpack.c.l.b16 %v235
    %v1342 = vunpack.c.h.b16 %v235
    %v1343 = vunpack.c.l.b16 %v236
    %v1344 = vunpack.c.h.b16 %v236
    %v1345 = vunpack.c.l.b16 %v237
    %v1346 = vunpack.c.h.b16 %v237
    %v1347 = vunpack.c.l.b16 %v238
    %v1348 = vunpack.c.h.b16 %v238
    %v1349 = vunpack.c.l.b16 %v239
    %v1350 = vunpack.c.h.b16 %v239
    %v1351 = vunpack.c.l.b16 %v240
    %v1352 = vunpack.c.h.b16 %v240
    %v1353 = vunpack.c.l.b16 %v241
    %v1354 = vunpack.c.h.b16 %v241
    %v1355 = vunpack.c.l.b16 %v242
    %v1356 = vunpack.c.h.b16 %v242
    %v1357 = vunpack.c.l.b16 %v243
    %v1358 = vunpack.c.h.b16 %v243
    %v1359 = vunpack.c.l.b16 %v244
    %v1360 = vunpack.c.h.b16 %v244
    %v1361 = vunpack.c.l.b16 %v245
    %v1362 = vunpack.c.h.b16 %v245
    %v1363 = vunpack.c.l.b16 %v246
    %v1364 = vunpack.c.h.b16 %v246
    %v1365 = vunpack.c.l.b16 %v247
    %v1366 = vunpack.c.h.b16 %v247
    %v1367 = vunpack.c.l.b16 %v248
    %v1368 = vunpack.c.h.b16 %v248
    %v1369 = vunpack.c.l.b16 %v249
    %v1370 = vunpack.c.h.b16 %v249
    %v1371 = vunpack.c.l.b16 %v250
    %v1372 = vunpack.c.h.b16 %v250
    %v1373 = vunpack.c.l.b16 %v251
    %v1374 = vunpack.c.h.b16 %v251
    %v1375 = vunpack.c.l.b16 %v252
    %v1376 = vunpack.c.h.b16 %v252
    %v1377 = vunpack.c.l.b16 %v253
    %v1378 = vunpack.c.h.b16 %v253
    %v1379 = vunpack.c.l.b16 %v254
    %v1380 = vunpack.c.h.b16 %v254
    %v1381 = vunpack.c.l.b16 %v255
    %v1382 = vunpack.c.h.b16 %v255
    %v1383 = vunpack.c.l.b16 %v256
    %v1384 = vunpack.c.h.b16 %v256
    %v1385 = vunpack.c.l.b16 %v257
    %v1386 = vunpack.c.h.b16 %v257
    %v1387 = vunpack.c.l.b16 %v258
    %v1388 = vunpack.c.h.b16 %v258
    %v1389 = vunpack.c.l.b16 %v259
    %v1390 = vunpack.c.h.b16 %v259
    %v1391 = vunpack.c.l.b16 %v260
    %v1392 = vunpack.c.h.b16 %v260
    %v1393 = vunpack.c.l.b16 %v261
    %v1394 = vunpack.c.h.b16 %v261
    %v1395 = vunpack.c.l.b16 %v262
    %v1396 = vunpack.c.h.b16 %v262
    %v1397 = vunpack.c.l.b16 %v263
    %v1398 = vunpack.c.h.b16 %v263
    %v1399 = vunpack.c.l.b16 %v264
    %v1400 = vunpack.c.h.b16 %v264
    %v1401 = vunpack.c.l.b16 %v265
    %v1402 = vunpack.c.h.b16 %v265
    %v1403 = vunpack.c.l.b16 %v266
    %v1404 = vunpack.c.h.b16 %v266
    %v1405 = vunpack.c.l.b16 %v267
    %v1406 = vunpack.c.h.b16 %v267
    %v1407 = vunpack.c.l.b16 %v268
    %v1408 = vunpack.c.h.b16 %v268
    %v1409 = vunpack.c.l.b16 %v269
    %v1410 = vunpack.c.h.b16 %v269
    %v1411 = vunpack.c.l.b16 %v270
    %v1412 = vunpack.c.h.b16 %v270
    %v1413 = vunpack.c.l.b16 %v271
    %v1414 = vunpack.c.h.b16 %v271
    %v1415 = vunpack.c.l.b16 %v272
    %v1416 = vunpack.c.h.b16 %v272
    %v1417 = vunpack.c.l.b16 %v273
    %v1418 = vunpack.c.h.b16 %v273
    %v1419 = vunpack.c.l.b16 %v274
    %v1420 = vunpack.c.h.b16 %v274
    %v1421 = vunpack.c.l.b16 %v275
    %v1422 = vunpack.c.h.b16 %v275
    %v1423 = vunpack.c.l.b16 %v276
    %v1424 = vunpack.c.h.b16 %v276
    %v1425 = vunpack.c.l.b16 %v277
    %v1426 = vunpack.c.h.b16 %v277
    %v1427 = vunpack.c.l.b16 %v278
    %v1428 = vunpack.c.h.b16 %v278
    %v1429 = vunpack.c.l.b16 %v279
    %v1430 = vunpack.c.h.b16 %v279
    %v1431 = vunpack.c.l.b16 %v280
    %v1432 = vunpack.c.h.b16 %v280
    %v1433 = vunpack.c.l.b16 %v281
    %v1434 = vunpack.c.h.b16 %v281
    %v1435 = vunpack.c.l.b16 %v282
    %v1436 = vunpack.c.h.b16 %v282
    %v1437 = vunpack.c.l.b16 %v283
    %v1438 = vunpack.c.h.b16 %v283
    %v1439 = vunpack.c.l.b16 %v284
    %v1440 = vunpack.c.h.b16 %v284
    %v1441 = vunpack.c.l.b16 %v285
    %v1442 = vunpack.c.h.b16 %v285
    %v1443 = vunpack.c.l.b16 %v286
    %v1444 = vunpack.c.h.b16 %v286
    %v1445 = vunpack.c.l.b16 %v287
    %v1446 = vunpack.c.h.b16 %v287
    %v1447 = vunpack.c.l.b16 %v288
    %v1448 = vunpack.c.h.b16 %v288
    %v1449 = vunpack.c.l.b16 %v289
    %v1450 = vunpack.c.h.b16 %v289
    %v1451 = vunpack.c.l.b16 %v290
    %v1452 = vunpack.c.h.b16 %v290
    %v1453 = vunpack.c.l.b16 %v291
    %v1454 = vunpack.c.h.b16 %v291
    %v1455 = vunpack.c.l.b16 %v292
    %v1456 = vunpack.c.h.b16 %v292
    %v1457 = vunpack.c.l.b16 %v293
    %v1458 = vunpack.c.h.b16 %v293
    %v1459 = vunpack.c.l.b16 %v294
    %v1460 = vunpack.c.h.b16 %v294
    %v1461 = vunpack.c.l.b16 %v295
    %v1462 = vunpack.c.h.b16 %v295
    %v1463 = vunpack.c.l.b16 %v296
    %v1464 = vunpack.c.h.b16 %v296
    %v1465 = vunpack.c.l.b16 %v297
    %v1466 = vunpack.c.h.b16 %v297
    %v1467 = vunpack.c.l.b16 %v298
    %v1468 = vunpack.c.h.b16 %v298
    %v1469 = vunpack.c.l.b16 %v299
    %v1470 = vunpack.c.h.b16 %v299
    %v1471 = vunpack.c.l.b16 %v300
    %v1472 = vunpack.c.h.b16 %v300
    %v1473 = vunpack.c.l.b16 %v301
    %v1474 = vunpack.c.h.b16 %v301
    %v1475 = vunpack.c.l.b16 %v302
    %v1476 = vunpack.c.h.b16 %v302
    %v1477 = vunpack.c.l.b16 %v303
    %v1478 = vunpack.c.h.b16 %v303
    %v1479 = vunpack.c.l.b16 %v304
    %v1480 = vunpack.c.h.b16 %v304
    %v1481 = vunpack.c.l.b16 %v305
    %v1482 = vunpack.c.h.b16 %v305
    %v1483 = vunpack.c.l.b16 %v306
    %v1484 = vunpack.c.h.b16 %v306
    %v1485 = vunpack.c.l.b16 %v307
    %v1486 = vunpack.c.h.b16 %v307
    %v1487 = vunpack.c.l.b16 %v308
    %v1488 = vunpack.c.h.b16 %v308
    %v1489 = vunpack.c.l.b16 %v309
    %v1490 = vunpack.c.h.b16 %v309
    %v1491 = vunpack.c.l.b16 %v310
    %v1492 = vunpack.c.h.b16 %v310
    %v1493 = vunpack.c.l.b16 %v311
    %v1494 = vunpack.c.h.b16 %v311
    %v1495 = vunpack.c.l.b16 %v312
    %v1496 = vunpack.c.h.b16 %v312
    %v1497 = vunpack.c.l.b16 %v313
    %v1498 = vunpack.c.h.b16 %v313
    %v1499 = vunpack.c.l.b16 %v314
    %v1500 = vunpack.c.h.b16 %v314
    %v1501 = vunpack.c.l.b16 %v315
    %v1502 = vunpack.c.h.b16 %v315
    %v1503 = vunpack.c.l.b16 %v316
    %v1504 = vunpack.c.h.b16 %v316
    %v1505 = vunpack.c.l.b16 %v317
    %v1506 = vunpack.c.h.b16 %v317
    %v1507 = vunpack.c.l.b16 %v318
    %v1508 = vunpack.c.h.b16 %v318
    %v1509 = vunpack.c.l.b16 %v319
    %v1510 = vunpack.c.h.b16 %v319
    %v1511 = vunpack.c.l.b16 %v320
    %v1512 = vunpack.c.h.b16 %v320
    %v1513 = vunpack.c.l.b16 %v321
    %v1514 = vunpack.c.h.b16 %v321
    %v1515 = vunpack.c.l.b16 %v322
    %v1516 = vunpack.c.h.b16 %v322
    %v1517 = vunpack.c.l.b16 %v323
    %v1518 = vunpack.c.h.b16 %v323
    %v1519 = vunpack.c.l.b16 %v324
    %v1520 = vunpack.c.h.b16 %v324
    %v1521 = vunpack.c.l.b16 %v325
    %v1522 = vunpack.c.h.b16 %v325
    %v1523 = vunpack.c.l.b16 %v326
    %v1524 = vunpack.c.h.b16 %v326
    %v1525 = vunpack.c.l.b16 %v327
    %v1526 = vunpack.c.h.b16 %v327
    %v1527 = vunpack.c.l.b16 %v328
    %v1528 = vunpack.c.h.b16 %v328
    %v1529 = vunpack.c.l.b16 %v329
    %v1530 = vunpack.c.h.b16 %v329
    %v1531 = vunpack.c.l.b16 %v330
    %v1532 = vunpack.c.h.b16 %v330
    %v1533 = vunpack.c.l.b16 %v331
    %v1534 = vunpack.c.h.b16 %v331
    %v1535 = vunpack.c.l.b16 %v332
    %v1536 = vunpack.c.h.b16 %v332
    %v1537 = vunpack.c.l.b16 %v333
    %v1538 = vunpack.c.h.b16 %v333
    %v1539 = vunpack.c.l.b16 %v334
    %v1540 = vunpack.c.h.b16 %v334
    %v1541 = vunpack.c.l.b16 %v335
    %v1542 = vunpack.c.h.b16 %v335
    %v1543 = vunpack.c.l.b16 %v336
    %v1544 = vunpack.c.h.b16 %v336
    %v1545 = vunpack.c.l.b16 %v337
    %v1546 = vunpack.c.h.b16 %v337
    %v1547 = vunpack.c.l.b16 %v338
    %v1548 = vunpack.c.h.b16 %v338
    %v1549 = vunpack.c.l.b16 %v339
    %v1550 = vunpack.c.h.b16 %v339
    %v1551 = vunpack.c.l.b16 %v340
    %v1552 = vunpack.c.h.b16 %v340
    %v1553 = vunpack.c.l.b16 %v341
    %v1554 = vunpack.c.h.b16 %v341
    %v1555 = vunpack.c.l.b16 %v342
    %v1556 = vunpack.c.h.b16 %v342
    %v1557 = vunpack.c.l.b16 %v343
    %v1558 = vunpack.c.h.b16 %v343
    %v1559 = vunpack.c.l.b16 %v344
    %v1560 = vunpack.c.h.b16 %v344
    %v1561 = vunpack.c.l.b16 %v345
    %v1562 = vunpack.c.h.b16 %v345
    %v1563 = vunpack.c.l.b16 %v346
    %v1564 = vunpack.c.h.b16 %v346
    %v1565 = vunpack.c.l.b16 %v347
    %v1566 = vunpack.c.h.b16 %v347
    %v1567 = vunpack.c.l.b16 %v348
    %v1568 = vunpack.c.h.b16 %v348
    %v1569 = vunpack.c.l.b16 %v349
    %v1570 = vunpack.c.h.b16 %v349
    %v1571 = vunpack.c.l.b16 %v350
    %v1572 = vunpack.c.h.b16 %v350
    %v1573 = vunpack.c.l.b16 %v351
    %v1574 = vunpack.c.h.b16 %v351
    %v1575 = vunpack.c.l.b16 %v352
    %v1576 = vunpack.c.h.b16 %v352
    %v1577 = vunpack.c.l.b16 %v353
    %v1578 = vunpack.c.h.b16 %v353
    %v1579 = vunpack.c.l.b16 %v354
    %v1580 = vunpack.c.h.b16 %v354
    %v1581 = vunpack.c.l.b16 %v355
    %v1582 = vunpack.c.h.b16 %v355
    %v1583 = vunpack.c.l.b16 %v356
    %v1584 = vunpack.c.h.b16 %v356
    %v1585 = vunpack.c.l.b16 %v357
    %v1586 = vunpack.c.h.b16 %v357
    %v1587 = vunpack.c.l.b16 %v358
    %v1588 = vunpack.c.h.b16 %v358
    %v1589 = vunpack.c.l.b16 %v359
    %v1590 = vunpack.c.h.b16 %v359
    %v1591 = vunpack.c.l.b16 %v360
    %v1592 = vunpack.c.h.b16 %v360
    %v1593 = vunpack.c.l.b16 %v361
    %v1594 = vunpack.c.h.b16 %v361
    %v1595 = vunpack.c.l.b16 %v362
    %v1596 = vunpack.c.h.b16 %v362
    %v1597 = vunpack.c.l.b16 %v363
    %v1598 = vunpack.c.h.b16 %v363
    %v1599 = vunpack.c.l.b16 %v364
    %v1600 = vunpack.c.h.b16 %v364
    %v1601 = vunpack.c.l.b16 %v365
    %v1602 = vunpack.c.h.b16 %v365
    %v1603 = vunpack.c.l.b16 %v366
    %v1604 = vunpack.c.h.b16 %v366
    %v1605 = vunpack.c.l.b16 %v367
    %v1606 = vunpack.c.h.b16 %v367
    %v1607 = vunpack.c.l.b16 %v368
    %v1608 = vunpack.c.h.b16 %v368
    %v1609 = vunpack.c.l.b16 %v369
    %v1610 = vunpack.c.h.b16 %v369
    %v1611 = vunpack.c.l.b16 %v370
    %v1612 = vunpack.c.h.b16 %v370
    %v1613 = vunpack.c.l.b16 %v371
    %v1614 = vunpack.c.h.b16 %v371
    %v1615 = vunpack.c.l.b16 %v372
    %v1616 = vunpack.c.h.b16 %v372
    %v1617 = vunpack.c.l.b16 %v373
    %v1618 = vunpack.c.h.b16 %v373
    %v1619 = vunpack.c.l.b16 %v374
    %v1620 = vunpack.c.h.b16 %v374
    %v1621 = vunpack.c.l.b16 %v375
    %v1622 = vunpack.c.h.b16 %v375
    %v1623 = vunpack.c.l.b16 %v376
    %v1624 = vunpack.c.h.b16 %v376
    %v1625 = vunpack.c.l.b16 %v377
    %v1626 = vunpack.c.h.b16 %v377
    %v1627 = vunpack.c.l.b16 %v378
    %v1628 = vunpack.c.h.b16 %v378
    %v1629 = vunpack.c.l.b16 %v379
    %v1630 = vunpack.c.h.b16 %v379
    %v1631 = vunpack.c.l.b16 %v380
    %v1632 = vunpack.c.h.b16 %v380
    %v1633 = vunpack.c.l.b16 %v381
    %v1634 = vunpack.c.h.b16 %v381
    %v1635 = vunpack.c.l.b16 %v382
    %v1636 = vunpack.c.h.b16 %v382
    %v1637 = vunpack.c.l.b16 %v383
    %v1638 = vunpack.c.h.b16 %v383
    %v1639 = vunpack.c.l.b16 %v384
    %v1640 = vunpack.c.h.b16 %v384
    %v1641 = vunpack.c.l.b16 %v385
    %v1642 = vunpack.c.h.b16 %v385
    %v1643 = vunpack.c.l.b16 %v386
    %v1644 = vunpack.c.h.b16 %v386
    %v1645 = vunpack.c.l.b16 %v387
    %v1646 = vunpack.c.h.b16 %v387
    %v1647 = vunpack.c.l.b16 %v388
    %v1648 = vunpack.c.h.b16 %v388
    %v1649 = vunpack.c.l.b16 %v389
    %v1650 = vunpack.c.h.b16 %v389
    %v1651 = vunpack.c.l.b16 %v390
    %v1652 = vunpack.c.h.b16 %v390
    %v1653 = vunpack.c.l.b16 %v391
    %v1654 = vunpack.c.h.b16 %v391
    %v1655 = vunpack.c.l.b16 %v392
    %v1656 = vunpack.c.h.b16 %v392
    %v1657 = vunpack.c.l.b16 %v393
    %v1658 = vunpack.c.h.b16 %v393
    %v1659 = vunpack.c.l.b16 %v394
    %v1660 = vunpack.c.h.b16 %v394
    %v1661 = vunpack.c.l.b16 %v395
    %v1662 = vunpack.c.h.b16 %v395
    %v1663 = vunpack.c.l.b16 %v396
    %v1664 = vunpack.c.h.b16 %v396
    %v1665 = vunpack.c.l.b16 %v397
    %v1666 = vunpack.c.h.b16 %v397
    %v1667 = vunpack.c.l.b16 %v398
    %v1668 = vunpack.c.h.b16 %v398
    %v1669 = vunpack.c.l.b16 %v399
    %v1670 = vunpack.c.h.b16 %v399
    %v1671 = vunpack.c.l.b16 %v400
    %v1672 = vunpack.c.h.b16 %v400
    %v1673 = vunpack.c.l.b16 %v401
    %v1674 = vunpack.c.h.b16 %v401
    %v1675 = vunpack.c.l.b16 %v402
    %v1676 = vunpack.c.h.b16 %v402
    %v1677 = vunpack.c.l.b16 %v403
    %v1678 = vunpack.c.h.b16 %v403
    %v1679 = vunpack.c.l.b16 %v404
    %v1680 = vunpack.c.h.b16 %v404
    %v1681 = vunpack.c.l.b16 %v405
    %v1682 = vunpack.c.h.b16 %v405
    %v1683 = vunpack.c.l.b16 %v406
    %v1684 = vunpack.c.h.b16 %v406
    %v1685 = vunpack.c.l.b16 %v407
    %v1686 = vunpack.c.h.b16 %v407
    %v1687 = vunpack.c.l.b16 %v408
    %v1688 = vunpack.c.h.b16 %v408
    %v1689 = vunpack.c.l.b16 %v409
    %v1690 = vunpack.c.h.b16 %v409
    %v1691 = vunpack.c.l.b16 %v410
    %v1692 = vunpack.c.h.b16 %v410
    %v1693 = vunpack.c.l.b16 %v411
    %v1694 = vunpack.c.h.b16 %v411
    %v1695 = vunpack.c.l.b16 %v412
    %v1696 = vunpack.c.h.b16 %v412
    %v1697 = vunpack.c.l.b16 %v413
    %v1698 = vunpack.c.h.b16 %v413
    %v1699 = vunpack.c.l.b16 %v414
    %v1700 = vunpack.c.h.b16 %v414
    %v1701 = vunpack.c.l.b16 %v415
    %v1702 = vunpack.c.h.b16 %v415
    %v1703 = vunpack.c.l.b16 %v416
    %v1704 = vunpack.c.h.b16 %v416
    %v1705 = vunpack.c.l.b16 %v417
    %v1706 = vunpack.c.h.b16 %v417
    %v1707 = vunpack.c.l.b16 %v418
    %v1708 = vunpack.c.h.b16 %v418
    %v1709 = vunpack.c.l.b16 %v419
    %v1710 = vunpack.c.h.b16 %v419
    %v1711 = vunpack.c.l.b16 %v420
    %v1712 = vunpack.c.h.b16 %v420
    %v1713 = vunpack.c.l.b16 %v421
    %v1714 = vunpack.c.h.b16 %v421
    %v1715 = vunpack.c.l.b16 %v422
    %v1716 = vunpack.c.h.b16 %v422
    %v1717 = vunpack.c.l.b16 %v423
    %v1718 = vunpack.c.h.b16 %v423
    %v1719 = vunpack.c.l.b16 %v424
    %v1720 = vunpack.c.h.b16 %v424
    %v1721 = vunpack.c.l.b16 %v425
    %v1722 = vunpack.c.h.b16 %v425
    %v1723 = vunpack.c.l.b16 %v426
    %v1724 = vunpack.c.h.b16 %v426
    %v1725 = vunpack.c.l.b16 %v427
    %v1726 = vunpack.c.h.b16 %v427
    %v1727 = vunpack.c.l.b16 %v428
    %v1728 = vunpack.c.h.b16 %v428
    %v1729 = vunpack.c.l.b16 %v429
    %v1730 = vunpack.c.h.b16 %v429
    %v1731 = vunpack.c.l.b16 %v430
    %v1732 = vunpack.c.h.b16 %v430
    %v1733 = vunpack.c.l.b16 %v431
    %v1734 = vunpack.c.h.b16 %v431
    %v1735 = vunpack.c.l.b16 %v432
    %v1736 = vunpack.c.h.b16 %v432
    %v1737 = vunpack.c.l.b16 %v433
    %v1738 = vunpack.c.h.b16 %v433
    %v1739 = vunpack.c.l.b16 %v434
    %v1740 = vunpack.c.h.b16 %v434
    %v1741 = vunpack.c.l.b16 %v435
    %v1742 = vunpack.c.h.b16 %v435
    %v1743 = vunpack.c.l.b16 %v436
    %v1744 = vunpack.c.h.b16 %v436
    %v1745 = vunpack.c.l.b16 %v437
    %v1746 = vunpack.c.h.b16 %v437
    %v1747 = vunpack.c.l.b16 %v438
    %v1748 = vunpack.c.h.b16 %v438
    %v1749 = vunpack.c.l.b16 %v439
    %v1750 = vunpack.c.h.b16 %v439
    %v1751 = vunpack.c.l.b16 %v440
    %v1752 = vunpack.c.h.b16 %v440
    %v1753 = vunpack.c.l.b16 %v441
    %v1754 = vunpack.c.h.b16 %v441
    %v1755 = vunpack.c.l.b16 %v442
    %v1756 = vunpack.c.h.b16 %v442
    %v1757 = vunpack.c.l.b16 %v443
    %v1758 = vunpack.c.h.b16 %v443
    %v1759 = vunpack.c.l.b16 %v444
    %v1760 = vunpack.c.h.b16 %v444
    %v1761 = vunpack.c.l.b16 %v445
    %v1762 = vunpack.c.h.b16 %v445
    %v1763 = vunpack.c.l.b16 %v446
    %v1764 = vunpack.c.h.b16 %v446
    %v1765 = vunpack.c.l.b16 %v447
    %v1766 = vunpack.c.h.b16 %v447
    %v1767 = vunpack.c.l.b16 %v448
    %v1768 = vunpack.c.h.b16 %v448
    %v1769 = vunpack.c.l.b16 %v449
    %v1770 = vunpack.c.h.b16 %v449
    %v1771 = vunpack.c.l.b16 %v450
    %v1772 = vunpack.c.h.b16 %v450
    %v1773 = vunpack.c.l.b16 %v451
    %v1774 = vunpack.c.h.b16 %v451
    %v1775 = vunpack.c.l.b16 %v452
    %v1776 = vunpack.c.h.b16 %v452
    %v1777 = vunpack.c.l.b16 %v453
    %v1778 = vunpack.c.h.b16 %v453
    %v1779 = vunpack.c.l.b16 %v454
    %v1780 = vunpack.c.h.b16 %v454
    %v1781 = vunpack.c.l.b16 %v455
    %v1782 = vunpack.c.h.b16 %v455
    %v1783 = vunpack.c.l.b16 %v456
    %v1784 = vunpack.c.h.b16 %v456
    %v1785 = vunpack.c.l.b16 %v457
    %v1786 = vunpack.c.h.b16 %v457
    %v1787 = vunpack.c.l.b16 %v458
    %v1788 = vunpack.c.h.b16 %v458
    %v1789 = vunpack.c.l.b16 %v459
    %v1790 = vunpack.c.h.b16 %v459
    %v1791 = vunpack.c.l.b16 %v460
    %v1792 = vunpack.c.h.b16 %v460
    %v1793 = vunpack.c.l.b16 %v461
    %v1794 = vunpack.c.h.b16 %v461
    %v1795 = vunpack.c.l.b16 %v462
    %v1796 = vunpack.c.h.b16 %v462
    %v1797 = vunpack.c.l.b16 %v463
    %v1798 = vunpack.c.h.b16 %v463
    %v1799 = vunpack.c.l.b16 %v464
    %v1800 = vunpack.c.h.b16 %v464
    %v1801 = vunpack.c.l.b16 %v465
    %v1802 = vunpack.c.h.b16 %v465
    %v1803 = vunpack.c.l.b16 %v466
    %v1804 = vunpack.c.h.b16 %v466
    %v1805 = vunpack.c.l.b16 %v467
    %v1806 = vunpack.c.h.b16 %v467
    %v1807 = vunpack.c.l.b16 %v468
    %v1808 = vunpack.c.h.b16 %v468
    %v1809 = vunpack.c.l.b16 %v469
    %v1810 = vunpack.c.h.b16 %v469
    %v1811 = vunpack.c.l.b16 %v470
    %v1812 = vunpack.c.h.b16 %v470
    %v1813 = vunpack.c.l.b16 %v471
    %v1814 = vunpack.c.h.b16 %v471
    %v1815 = vunpack.c.l.b16 %v472
    %v1816 = vunpack.c.h.b16 %v472
    %v1817 = vunpack.c.l.b16 %v473
    %v1818 = vunpack.c.h.b16 %v473
    %v1819 = vunpack.c.l.b16 %v474
    %v1820 = vunpack.c.h.b16 %v474
    %v1821 = vunpack.c.l.b16 %v475
    %v1822 = vunpack.c.h.b16 %v475
    %v1823 = vunpack.c.l.b16 %v476
    %v1824 = vunpack.c.h.b16 %v476
    %v1825 = vunpack.c.l.b16 %v477
    %v1826 = vunpack.c.h.b16 %v477
    %v1827 = vunpack.c.l.b16 %v478
    %v1828 = vunpack.c.h.b16 %v478
    %v1829 = vunpack.c.l.b16 %v479
    %v1830 = vunpack.c.h.b16 %v479
    %v1831 = vunpack.c.l.b16 %v480
    %v1832 = vunpack.c.h.b16 %v480
    %v1833 = vunpack.c.l.b16 %v481
    %v1834 = vunpack.c.h.b16 %v481
    %v1835 = vunpack.c.l.b16 %v482
    %v1836 = vunpack.c.h.b16 %v482
    %v1837 = vunpack.c.l.b16 %v483
    %v1838 = vunpack.c.h.b16 %v483
    %v1839 = vunpack.c.l.b16 %v484
    %v1840 = vunpack.c.h.b16 %v484
    %v1841 = vunpack.c.l.b16 %v485
    %v1842 = vunpack.c.h.b16 %v485
    %v1843 = vunpack.c.l.b16 %v486
    %v1844 = vunpack.c.h.b16 %v486
    %v1845 = vunpack.c.l.b16 %v487
    %v1846 = vunpack.c.h.b16 %v487
    %v1847 = vunpack.c.l.b16 %v488
    %v1848 = vunpack.c.h.b16 %v488
    %v1849 = vunpack.c.l.b16 %v489
    %v1850 = vunpack.c.h.b16 %v489
    %v1851 = vunpack.c.l.b16 %v490
    %v1852 = vunpack.c.h.b16 %v490
    %v1853 = vunpack.c.l.b16 %v491
    %v1854 = vunpack.c.h.b16 %v491
    %v1855 = vunpack.c.l.b16 %v492
    %v1856 = vunpack.c.h.b16 %v492
    %v1857 = vunpack.c.l.b16 %v493
    %v1858 = vunpack.c.h.b16 %v493
    %v1859 = vunpack.c.l.b16 %v494
    %v1860 = vunpack.c.h.b16 %v494
    %v1861 = vunpack.c.l.b16 %v495
    %v1862 = vunpack.c.h.b16 %v495
    %v1863 = vunpack.c.l.b16 %v496
    %v1864 = vunpack.c.h.b16 %v496
    %v1865 = vunpack.c.l.b16 %v497
    %v1866 = vunpack.c.h.b16 %v497
    %v1867 = vunpack.c.l.b16 %v498
    %v1868 = vunpack.c.h.b16 %v498
    %v1869 = vunpack.c.l.b16 %v499
    %v1870 = vunpack.c.h.b16 %v499
    %v1871 = vunpack.c.l.b16 %v500
    %v1872 = vunpack.c.h.b16 %v500
    %v1873 = vunpack.c.l.b16 %v501
    %v1874 = vunpack.c.h.b16 %v501
    %v1875 = vunpack.c.l.b16 %v502
    %v1876 = vunpack.c.h.b16 %v502
    %v1877 = vunpack.c.l.b16 %v503
    %v1878 = vunpack.c.h.b16 %v503
    %v1879 = vunpack.c.l.b16 %v504
    %v1880 = vunpack.c.h.b16 %v504
    %v1881 = vunpack.c.l.b16 %v505
    %v1882 = vunpack.c.h.b16 %v505
    %v1883 = vunpack.c.l.b16 %v506
    %v1884 = vunpack.c.h.b16 %v506
    %v1885 = vunpack.c.l.b16 %v507
    %v1886 = vunpack.c.h.b16 %v507
    %v1887 = vunpack.c.l.b16 %v508
    %v1888 = vunpack.c.h.b16 %v508
    %v1889 = vunpack.c.l.b16 %v509
    %v1890 = vunpack.c.h.b16 %v509
    %v1891 = vunpack.c.l.b16 %v510
    %v1892 = vunpack.c.h.b16 %v510
    %v1893 = vunpack.c.l.b16 %v511
    %v1894 = vunpack.c.h.b16 %v511
    %v1895 = vunpack.c.l.b16 %v512
    %v1896 = vunpack.c.h.b16 %v512
    %v1897 = vunpack.c.l.b16 %v513
    %v1898 = vunpack.c.h.b16 %v513
    %v1899 = vunpack.c.l.b16 %v514
    %v1900 = vunpack.c.h.b16 %v514
    %v1901 = vunpack.c.l.b16 %v515
    %v1902 = vunpack.c.h.b16 %v515
    %v1903 = vunpack.c.l.b16 %v516
    %v1904 = vunpack.c.h.b16 %v516
    %v1905 = vunpack.c.l.b16 %v517
    %v1906 = vunpack.c.h.b16 %v517
    %v1907 = vunpack.c.l.b16 %v518
    %v1908 = vunpack.c.h.b16 %v518
    %v1909 = vunpack.c.l.b16 %v519
    %v1910 = vunpack.c.h.b16 %v519
    %v1911 = vunpack.c.l.b16 %v520
    %v1912 = vunpack.c.h.b16 %v520
    %v1913 = vunpack.c.l.b16 %v521
    %v1914 = vunpack.c.h.b16 %v521
    %v1915 = vunpack.c.l.b16 %v522
    %v1916 = vunpack.c.h.b16 %v522
    %v1917 = vunpack.c.l.b16 %v523
    %v1918 = vunpack.c.h.b16 %v523
    %v1919 = vunpack.c.l.b16 %v524
    %v1920 = vunpack.c.h.b16 %v524
    %v1921 = vunpack.c.l.b16 %v525
    %v1922 = vunpack.c.h.b16 %v525
    %v1923 = vunpack.c.l.b16 %v526
    %v1924 = vunpack.c.h.b16 %v526
    %v1925 = vunpack.c.l.b16 %v527
    %v1926 = vunpack.c.h.b16 %v527
    %v1927 = vunpack.c.l.b16 %v528
    %v1928 = vunpack.c.h.b16 %v528
    %v1929 = vunpack.c.l.b16 %v529
    %v1930 = vunpack.c.h.b16 %v529
    %v1931 = vunpack.c.l.b16 %v530
    %v1932 = vunpack.c.h.b16 %v530
    %v1933 = vunpack.c.l.b16 %v531
    %v1934 = vunpack.c.h.b16 %v531
    %v1935 = vunpack.c.l.b16 %v532
    %v1936 = vunpack.c.h.b16 %v532
    %v1937 = vunpack.c.l.b16 %v533
    %v1938 = vunpack.c.h.b16 %v533
    %v1939 = vunpack.c.l.b16 %v534
    %v1940 = vunpack.c.h.b16 %v534
    %v1941 = vunpack.c.l.b16 %v535
    %v1942 = vunpack.c.h.b16 %v535
    %v1943 = vunpack.c.l.b16 %v536
    %v1944 = vunpack.c.h.b16 %v536
    %v1945 = vunpack.c.l.b16 %v537
    %v1946 = vunpack.c.h.b16 %v537
    %v1947 = vunpack.c.l.b16 %v538
    %v1948 = vunpack.c.h.b16 %v538
    %v1949 = vunpack.c.l.b16 %v539
    %v1950 = vunpack.c.h.b16 %v539
    %v1951 = vunpack.c.l.b16 %v540
    %v1952 = vunpack.c.h.b16 %v540
    %v1953 = vunpack.c.l.b16 %v541
    %v1954 = vunpack.c.h.b16 %v541
    %v1955 = vunpack.c.l.b16 %v542
    %v1956 = vunpack.c.h.b16 %v542
    %v1957 = vunpack.c.l.b16 %v543
    %v1958 = vunpack.c.h.b16 %v543
    %v1959 = vunpack.c.l.b16 %v544
    %v1960 = vunpack.c.h.b16 %v544
    %v1961 = vunpack.c.l.b16 %v545
    %v1962 = vunpack.c.h.b16 %v545
    %v1963 = vunpack.c.l.b16 %v546
    %v1964 = vunpack.c.h.b16 %v546
    %v1965 = vunpack.c.l.b16 %v547
    %v1966 = vunpack.c.h.b16 %v547
    %v1967 = vunpack.c.l.b16 %v548
    %v1968 = vunpack.c.h.b16 %v548
    %v1969 = vunpack.c.l.b16 %v549
    %v1970 = vunpack.c.h.b16 %v549
    %v1971 = vunpack.c.l.b16 %v550
    %v1972 = vunpack.c.h.b16 %v550
    %v1973 = vunpack.c.l.b16 %v551
    %v1974 = vunpack.c.h.b16 %v551
    %v1975 = vunpack.c.l.b16 %v552
    %v1976 = vunpack.c.h.b16 %v552
    %v1977 = vunpack.c.l.b16 %v553
    %v1978 = vunpack.c.h.b16 %v553
    %v1979 = vunpack.c.l.b16 %v554
    %v1980 = vunpack.c.h.b16 %v554
    %v1981 = vunpack.c.l.b16 %v555
    %v1982 = vunpack.c.h.b16 %v555
    %v1983 = vunpack.c.l.b16 %v556
    %v1984 = vunpack.c.h.b16 %v556
    %v1985 = vunpack.c.l.b16 %v557
    %v1986 = vunpack.c.h.b16 %v557
    %v1987 = vunpack.c.l.b16 %v558
    %v1988 = vunpack.c.h.b16 %v558
    %v1989 = vunpack.c.l.b16 %v559
    %v1990 = vunpack.c.h.b16 %v559
    %v1991 = vunpack.c.l.b16 %v560
    %v1992 = vunpack.c.h.b16 %v560
    %v1993 = vunpack.c.l.b16 %v561
    %v1994 = vunpack.c.h.b16 %v561
    %v1995 = vunpack.c.l.b16 %v562
    %v1996 = vunpack.c.h.b16 %v562
    %v1997 = vunpack.c.l.b16 %v563
    %v1998 = vunpack.c.h.b16 %v563
    %v1999 = vunpack.c.l.b16 %v564
    %v2000 = vunpack.c.h.b16 %v564
    %v2001 = vunpack.c.l.b16 %v565
    %v2002 = vunpack.c.h.b16 %v565
    %v2003 = vunpack.c.l.b16 %v566
    %v2004 = vunpack.c.h.b16 %v566
    %v2005 = vunpack.c.l.b16 %v567
    %v2006 = vunpack.c.h.b16 %v567
    %v2007 = vunpack.c.l.b16 %v568
    %v2008 = vunpack.c.h.b16 %v568
    %v2009 = vunpack.c.l.b16 %v569
    %v2010 = vunpack.c.h.b16 %v569
    %v2011 = vunpack.c.l.b16 %v570
    %v2012 = vunpack.c.h.b16 %v570
    %v2013 = vunpack.c.l.b16 %v571
    %v2014 = vunpack.c.h.b16 %v571
    %v2015 = vunpack.c.l.b16 %v572
    %v2016 = vunpack.c.h.b16 %v572
    %v2017 = vunpack.c.l.b16 %v573
    %v2018 = vunpack.c.h.b16 %v573
    %v2019 = vunpack.c.l.b16 %v574
    %v2020 = vunpack.c.h.b16 %v574
    %v2021 = vunpack.c.l.b16 %v575
    %v2022 = vunpack.c.h.b16 %v575
    %v2023 = vunpack.c.l.b16 %v576
    %v2024 = vunpack.c.h.b16 %v576
    %v2025 = vunpack.c.l.b16 %v577
    %v2026 = vunpack.c.h.b16 %v577
    %v2027 = vunpack.c.l.b16 %v578
    %v2028 = vunpack.c.h.b16 %v578
    %v2029 = vunpack.c.l.b16 %v579
    %v2030 = vunpack.c.h.b16 %v579
    %v2031 = vunpack.c.l.b16 %v580
    %v2032 = vunpack.c.h.b16 %v580
    %v2033 = vunpack.c.l.b16 %v581
    %v2034 = vunpack.c.h.b16 %v581
    %v2035 = vunpack.c.l.b16 %v582
    %v2036 = vunpack.c.h.b16 %v582
    %v2037 = vunpack.c.l.b16 %v583
    %v2038 = vunpack.c.h.b16 %v583
    %v2039 = vunpack.c.l.b16 %v584
    %v2040 = vunpack.c.h.b16 %v584
    %v2041 = vunpack.c.l.b16 %v585
    %v2042 = vunpack.c.h.b16 %v585
    %v2043 = vunpack.c.l.b16 %v586
    %v2044 = vunpack.c.h.b16 %v586
    %v2045 = vunpack.c.l.b16 %v587
    %v2046 = vunpack.c.h.b16 %v587
    %v2047 = vunpack.c.l.b16 %v588
    %v2048 = vunpack.c.h.b16 %v588
    %v2049 = vunpack.c.l.b16 %v589
    %v2050 = vunpack.c.h.b16 %v589
    %v2051 = vunpack.c.l.b16 %v590
    %v2052 = vunpack.c.h.b16 %v590
    %v2053 = vunpack.c.l.b16 %v591
    %v2054 = vunpack.c.h.b16 %v591
    %v2055 = vunpack.c.l.b16 %v592
    %v2056 = vunpack.c.h.b16 %v592
    %v2057 = vunpack.c.l.b16 %v593
    %v2058 = vunpack.c.h.b16 %v593
    %v2059 = vunpack.c.l.b16 %v594
    %v2060 = vunpack.c.h.b16 %v594
    %v2061 = vunpack.c.l.b16 %v595
    %v2062 = vunpack.c.h.b16 %v595
    %v2063 = vunpack.c.l.b16 %v596
    %v2064 = vunpack.c.h.b16 %v596
    %v2065 = vunpack.c.l.b16 %v597
    %v2066 = vunpack.c.h.b16 %v597
    %v2067 = vunpack.c.l.b16 %v598
    %v2068 = vunpack.c.h.b16 %v598
    %v2069 = vunpack.c.l.b16 %v599
    %v2070 = vunpack.c.h.b16 %v599
    %v2071 = vunpack.c.l.b16 %v600
    %v2072 = vunpack.c.h.b16 %v600
    %v2073 = vunpack.c.l.b16 %v601
    %v2074 = vunpack.c.h.b16 %v601
    %v2075 = vunpack.c.l.b16 %v602
    %v2076 = vunpack.c.h.b16 %v602
    %v2077 = vunpack.c.l.b16 %v603
    %v2078 = vunpack.c.h.b16 %v603
    %v2079 = vunpack.c.l.b16 %v604
    %v2080 = vunpack.c.h.b16 %v604
    %v2081 = vunpack.c.l.b16 %v605
    %v2082 = vunpack.c.h.b16 %v605
    %v2083 = vunpack.c.l.b16 %v606
    %v2084 = vunpack.c.h.b16 %v606
    %v2085 = vunpack.c.l.b16 %v607
    %v2086 = vunpack.c.h.b16 %v607
    %v2087 = vunpack.c.l.b16 %v608
    %v2088 = vunpack.c.h.b16 %v608
    %v2089 = vunpack.c.l.b16 %v609
    %v2090 = vunpack.c.h.b16 %v609
    %v2091 = vunpack.c.l.b16 %v610
    %v2092 = vunpack.c.h.b16 %v610
    %v2093 = vunpack.c.l.b16 %v611
    %v2094 = vunpack.c.h.b16 %v611
    %v2095 = vunpack.c.l.b16 %v612
    %v2096 = vunpack.c.h.b16 %v612
    %v2097 = vunpack.c.l.b16 %v613
    %v2098 = vunpack.c.h.b16 %v613
    %v2099 = vunpack.c.l.b16 %v614
    %v2100 = vunpack.c.h.b16 %v614
    %v2101 = vunpack.c.l.b16 %v615
    %v2102 = vunpack.c.h.b16 %v615
    %v2103 = vunpack.c.l.b16 %v616
    %v2104 = vunpack.c.h.b16 %v616
    %v2105 = vunpack.c.l.b16 %v617
    %v2106 = vunpack.c.h.b16 %v617
    %v2107 = vunpack.c.l.b16 %v618
    %v2108 = vunpack.c.h.b16 %v618
    %v2109 = vunpack.c.l.b16 %v619
    %v2110 = vunpack.c.h.b16 %v619
    %v2111 = vunpack.c.l.b16 %v620
    %v2112 = vunpack.c.h.b16 %v620
    %v2113 = vunpack.c.l.b16 %v621
    %v2114 = vunpack.c.h.b16 %v621
    %v2115 = vunpack.c.l.b16 %v622
    %v2116 = vunpack.c.h.b16 %v622
    %v2117 = vunpack.c.l.b16 %v623
    %v2118 = vunpack.c.h.b16 %v623
    %v2119 = vunpack.c.l.b16 %v624
    %v2120 = vunpack.c.h.b16 %v624
    %v2121 = vunpack.c.l.b16 %v625
    %v2122 = vunpack.c.h.b16 %v625
    %v2123 = vunpack.c.l.b16 %v626
    %v2124 = vunpack.c.h.b16 %v626
    %v2125 = vunpack.c.l.b16 %v627
    %v2126 = vunpack.c.h.b16 %v627
    %v2127 = vunpack.c.l.b16 %v628
    %v2128 = vunpack.c.h.b16 %v628
    %v2129 = vunpack.c.l.b16 %v629
    %v2130 = vunpack.c.h.b16 %v629
    %v2131 = vunpack.c.l.b16 %v630
    %v2132 = vunpack.c.h.b16 %v630
    %v2133 = vunpack.c.l.b16 %v631
    %v2134 = vunpack.c.h.b16 %v631
    %v2135 = vunpack.c.l.b16 %v632
    %v2136 = vunpack.c.h.b16 %v632
    %v2137 = vunpack.c.l.b16 %v633
    %v2138 = vunpack.c.h.b16 %v633
    %v2139 = vunpack.c.l.b16 %v634
    %v2140 = vunpack.c.h.b16 %v634
    %v2141 = vunpack.c.l.b16 %v635
    %v2142 = vunpack.c.h.b16 %v635
    %v2143 = vunpack.c.l.b16 %v636
    %v2144 = vunpack.c.h.b16 %v636
    %v2145 = vunpack.c.l.b16 %v637
    %v2146 = vunpack.c.h.b16 %v637
    %v2147 = vunpack.c.l.b16 %v638
    %v2148 = vunpack.c.h.b16 %v638
    %v2149 = vunpack.c.l.b16 %v639
    %v2150 = vunpack.c.h.b16 %v639
    %v2151 = vunpack.c.l.b16 %v640
    %v2152 = vunpack.c.h.b16 %v640
    %v2153 = vunpack.c.l.b16 %v641
    %v2154 = vunpack.c.h.b16 %v641
    %v2155 = vunpack.c.l.b16 %v642
    %v2156 = vunpack.c.h.b16 %v642
    %v2157 = vunpack.c.l.b16 %v643
    %v2158 = vunpack.c.h.b16 %v643
    %v2159 = vunpack.c.l.b16 %v644
    %v2160 = vunpack.c.h.b16 %v644
    %v2161 = vunpack.c.l.b16 %v645
    %v2162 = vunpack.c.h.b16 %v645
    %v2163 = vunpack.c.l.b16 %v646
    %v2164 = vunpack.c.h.b16 %v646
    %v2165 = vunpack.c.l.b16 %v647
    %v2166 = vunpack.c.h.b16 %v647
    %v2167 = vunpack.c.l.b16 %v648
    %v2168 = vunpack.c.h.b16 %v648
    %v2169 = vunpack.c.l.b16 %v649
    %v2170 = vunpack.c.h.b16 %v649
    %v2171 = vunpack.c.l.b16 %v650
    %v2172 = vunpack.c.h.b16 %v650
    %v2173 = vunpack.c.l.b16 %v651
    %v2174 = vunpack.c.h.b16 %v651
    %v2175 = vunpack.c.l.b16 %v652
    %v2176 = vunpack.c.h.b16 %v652
    %v2177 = vunpack.c.l.b16 %v653
    %v2178 = vunpack.c.h.b16 %v653
    %v2179 = vunpack.c.l.b16 %v654
    %v2180 = vunpack.c.h.b16 %v654
    %v2181 = vunpack.c.l.b16 %v655
    %v2182 = vunpack.c.h.b16 %v655
    %v2183 = vunpack.c.l.b16 %v656
    %v2184 = vunpack.c.h.b16 %v656
    %v2185 = vunpack.c.l.b16 %v657
    %v2186 = vunpack.c.h.b16 %v657
    %v2187 = vunpack.c.l.b16 %v658
    %v2188 = vunpack.c.h.b16 %v658
    %v2189 = vunpack.c.l.b16 %v659
    %v2190 = vunpack.c.h.b16 %v659
    %v2191 = vunpack.c.l.b16 %v660
    %v2192 = vunpack.c.h.b16 %v660
    %v2193 = vunpack.c.l.b16 %v661
    %v2194 = vunpack.c.h.b16 %v661
    %v2195 = vunpack.c.l.b16 %v662
    %v2196 = vunpack.c.h.b16 %v662
    %v2197 = vunpack.c.l.b16 %v663
    %v2198 = vunpack.c.h.b16 %v663
    %v2199 = vunpack.c.l.b16 %v664
    %v2200 = vunpack.c.h.b16 %v664
    %v2201 = vunpack.c.l.b16 %v665
    %v2202 = vunpack.c.h.b16 %v665
    %v2203 = vunpack.c.l.b16 %v666
    %v2204 = vunpack.c.h.b16 %v666
    %v2205 = vunpack.c.l.b16 %v667
    %v2206 = vunpack.c.h.b16 %v667
    %v2207 = vunpack.c.l.b16 %v668
    %v2208 = vunpack.c.h.b16 %v668
    %v2209 = vunpack.c.l.b16 %v669
    %v2210 = vunpack.c.h.b16 %v669
    %v2211 = vunpack.c.l.b16 %v670
    %v2212 = vunpack.c.h.b16 %v670
    %v2213 = vunpack.c.l.b16 %v671
    %v2214 = vunpack.c.h.b16 %v671
    %v2215 = vunpack.c.l.b16 %v672
    %v2216 = vunpack.c.h.b16 %v672
    %v2217 = vunpack.c.l.b16 %v673
    %v2218 = vunpack.c.h.b16 %v673
    %v2219 = vunpack.c.l.b16 %v674
    %v2220 = vunpack.c.h.b16 %v674
    %v2221 = vunpack.c.l.b16 %v675
    %v2222 = vunpack.c.h.b16 %v675
    %v2223 = vunpack.c.l.b16 %v676
    %v2224 = vunpack.c.h.b16 %v676
    %v2225 = vunpack.c.l.b16 %v677
    %v2226 = vunpack.c.h.b16 %v677
    %v2227 = vunpack.c.l.b16 %v678
    %v2228 = vunpack.c.h.b16 %v678
    %v2229 = vunpack.c.l.b16 %v679
    %v2230 = vunpack.c.h.b16 %v679
    %v2231 = vunpack.c.l.b16 %v680
    %v2232 = vunpack.c.h.b16 %v680
    %v2233 = vunpack.c.l.b16 %v681
    %v2234 = vunpack.c.h.b16 %v681
    %v2235 = vunpack.c.l.b16 %v682
    %v2236 = vunpack.c.h.b16 %v682
    %v2237 = vunpack.c.l.b16 %v683
    %v2238 = vunpack.c.h.b16 %v683
    %v2239 = vunpack.c.l.b16 %v684
    %v2240 = vunpack.c.h.b16 %v684
    %v2241 = vunpack.c.l.b16 %v685
    %v2242 = vunpack.c.h.b16 %v685
    %v2243 = vunpack.c.l.b16 %v686
    %v2244 = vunpack.c.h.b16 %v686
    %v2245 = vpack.c.b16 %v1225, %v1221
    %v2246 = vpack.c.b16 %v1226, %v1222
    %v2247 = vpack.c.b16 %v1227, %v1223
    %v2248 = vpack.c.b16 %v1228, %v1224
    %v2249 = vpack.c.b16 %v1233, %v1229
    %v2250 = vpack.c.b16 %v1234, %v1230
    %v2251 = vpack.c.b16 %v1235, %v1231
    %v2252 = vpack.c.b16 %v1236, %v1232
    %v2253 = vpack.c.b16 %v1241, %v1237
    %v2254 = vpack.c.b16 %v1242, %v1238
    %v2255 = vpack.c.b16 %v1243, %v1239
    %v2256 = vpack.c.b16 %v1244, %v1240
    %v2257 = vpack.c.b16 %v1249, %v1245
    %v2258 = vpack.c.b16 %v1250, %v1246
    %v2259 = vpack.c.b16 %v1251, %v1247
    %v2260 = vpack.c.b16 %v1252, %v1248
    %v2261 = vpack.c.b16 %v1257, %v1253
    %v2262 = vpack.c.b16 %v1258, %v1254
    %v2263 = vpack.c.b16 %v1259, %v1255
    %v2264 = vpack.c.b16 %v1260, %v1256
    %v2265 = vpack.c.b16 %v1265, %v1261
    %v2266 = vpack.c.b16 %v1266, %v1262
    %v2267 = vpack.c.b16 %v1267, %v1263
    %v2268 = vpack.c.b16 %v1268, %v1264
    %v2269 = vpack.c.b16 %v1273, %v1269
    %v2270 = vpack.c.b16 %v1274, %v1270
    %v2271 = vpack.c.b16 %v1275, %v1271
    %v2272 = vpack.c.b16 %v1276, %v1272
    %v2273 = vpack.c.b16 %v1281, %v1277
    %v2274 = vpack.c.b16 %v1282, %v1278
    %v2275 = vpack.c.b16 %v1283, %v1279
    %v2276 = vpack.c.b16 %v1284, %v1280
    %v2277 = vpack.c.b16 %v1289, %v1285
    %v2278 = vpack.c.b16 %v1290, %v1286
    %v2279 = vpack.c.b16 %v1291, %v1287
    %v2280 = vpack.c.b16 %v1292, %v1288
    %v2281 = vpack.c.b16 %v1297, %v1293
    %v2282 = vpack.c.b16 %v1298, %v1294
    %v2283 = vpack.c.b16 %v1299, %v1295
    %v2284 = vpack.c.b16 %v1300, %v1296
    %v2285 = vpack.c.b16 %v1305, %v1301
    %v2286 = vpack.c.b16 %v1306, %v1302
    %v2287 = vpack.c.b16 %v1307, %v1303
    %v2288 = vpack.c.b16 %v1308, %v1304
    %v2289 = vpack.c.b16 %v1313, %v1309
    %v2290 = vpack.c.b16 %v1314, %v1310
    %v2291 = vpack.c.b16 %v1315, %v1311
    %v2292 = vpack.c.b16 %v1316, %v1312
    %v2293 = vpack.c.b16 %v1321, %v1317
    %v2294 = vpack.c.b16 %v1322, %v1318
    %v2295 = vpack.c.b16 %v1323, %v1319
    %v2296 = vpack.c.b16 %v1324, %v1320
    %v2297 = vpack.c.b16 %v1329, %v1325
    %v2298 = vpack.c.b16 %v1330, %v1326
    %v2299 = vpack.c.b16 %v1331, %v1327
    %v2300 = vpack.c.b16 %v1332, %v1328
    %v2301 = vpack.c.b16 %v1337, %v1333
    %v2302 = vpack.c.b16 %v1338, %v1334
    %v2303 = vpack.c.b16 %v1339, %v1335
    %v2304 = vpack.c.b16 %v1340, %v1336
    %v2305 = vpack.c.b16 %v1345, %v1341
    %v2306 = vpack.c.b16 %v1346, %v1342
    %v2307 = vpack.c.b16 %v1347, %v1343
    %v2308 = vpack.c.b16 %v1348, %v1344
    %v2309 = vpack.c.b16 %v1353, %v1349
    %v2310 = vpack.c.b16 %v1354, %v1350
    %v2311 = vpack.c.b16 %v1355, %v1351
    %v2312 = vpack.c.b16 %v1356, %v1352
    %v2313 = vpack.c.b16 %v1361, %v1357
    %v2314 = vpack.c.b16 %v1362, %v1358
    %v2315 = vpack.c.b16 %v1363, %v1359
    %v2316 = vpack.c.b16 %v1364, %v1360
    %v2317 = vpack.c.b16 %v1369, %v1365
    %v2318 = vpack.c.b16 %v1370, %v1366
    %v2319 = vpack.c.b16 %v1371, %v1367
    %v2320 = vpack.c.b16 %v1372, %v1368
    %v2321 = vpack.c.b16 %v1377, %v1373
    %v2322 = vpack.c.b16 %v1378, %v1374
    %v2323 = vpack.c.b16 %v1379, %v1375
    %v2324 = vpack.c.b16 %v1380, %v1376
    %v2325 = vpack.c.b16 %v1385, %v1381
    %v2326 = vpack.c.b16 %v1386, %v1382
    %v2327 = vpack.c.b16 %v1387, %v1383
    %v2328 = vpack.c.b16 %v1388, %v1384
    %v2329 = vpack.c.b16 %v1393, %v1389
    %v2330 = vpack.c.b16 %v1394, %v1390
    %v2331 = vpack.c.b16 %v1395, %v1391
    %v2332 = vpack.c.b16 %v1396, %v1392
    %v2333 = vpack.c.b16 %v1401, %v1397
    %v2334 = vpack.c.b16 %v1402, %v1398
    %v2335 = vpack.c.b16 %v1403, %v1399
    %v2336 = vpack.c.b16 %v1404, %v1400
    %v2337 = vpack.c.b16 %v1409, %v1405
    %v2338 = vpack.c.b16 %v1410, %v1406
    %v2339 = vpack.c.b16 %v1411, %v1407
    %v2340 = vpack.c.b16 %v1412, %v1408
    %v2341 = vpack.c.b16 %v1417, %v1413
    %v2342 = vpack.c.b16 %v1418, %v1414
    %v2343 = vpack.c.b16 %v1419, %v1415
    %v2344 = vpack.c.b16 %v1420, %v1416
    %v2345 = vpack.c.b16 %v1425, %v1421
    %v2346 = vpack.c.b16 %v1426, %v1422
    %v2347 = vpack.c.b16 %v1427, %v1423
    %v2348 = vpack.c.b16 %v1428, %v1424
    %v2349 = vpack.c.b16 %v1433, %v1429
    %v2350 = vpack.c.b16 %v1434, %v1430
    %v2351 = vpack.c.b16 %v1435, %v1431
    %v2352 = vpack.c.b16 %v1436, %v1432
    %v2353 = vpack.c.b16 %v1441, %v1437
    %v2354 = vpack.c.b16 %v1442, %v1438
    %v2355 = vpack.c.b16 %v1443, %v1439
    %v2356 = vpack.c.b16 %v1444, %v1440
    %v2357 = vpack.c.b16 %v1449, %v1445
    %v2358 = vpack.c.b16 %v1450, %v1446
    %v2359 = vpack.c.b16 %v1451, %v1447
    %v2360 = vpack.c.b16 %v1452, %v1448
    %v2361 = vpack.c.b16 %v1457, %v1453
    %v2362 = vpack.c.b16 %v1458, %v1454
    %v2363 = vpack.c.b16 %v1459, %v1455
    %v2364 = vpack.c.b16 %v1460, %v1456
    %v2365 = vpack.c.b16 %v1465, %v1461
    %v2366 = vpack.c.b16 %v1466, %v1462
    %v2367 = vpack.c.b16 %v1467, %v1463
    %v2368 = vpack.c.b16 %v1468, %v1464
    %v2369 = vpack.c.b16 %v1473, %v1469
    %v2370 = vpack.c.b16 %v1474, %v1470
    %v2371 = vpack.c.b16 %v1475, %v1471
    %v2372 = vpack.c.b16 %v1476, %v1472
    %v2373 = vpack.c.b16 %v1481, %v1477
    %v2374 = vpack.c.b16 %v1482, %v1478
    %v2375 = vpack.c.b16 %v1483, %v1479
    %v2376 = vpack.c.b16 %v1484, %v1480
    %v2377 = vpack.c.b16 %v1489, %v1485
    %v2378 = vpack.c.b16 %v1490, %v1486
    %v2379 = vpack.c.b16 %v1491, %v1487
    %v2380 = vpack.c.b16 %v1492, %v1488
    %v2381 = vpack.c.b16 %v1497, %v1493
    %v2382 = vpack.c.b16 %v1498, %v1494
    %v2383 = vpack.c.b16 %v1499, %v1495
    %v2384 = vpack.c.b16 %v1500, %v1496
    %v2385 = vpack.c.b16 %v1505, %v1501
    %v2386 = vpack.c.b16 %v1506, %v1502
    %v2387 = vpack.c.b16 %v1507, %v1503
    %v2388 = vpack.c.b16 %v1508, %v1504
    %v2389 = vpack.c.b16 %v1513, %v1509
    %v2390 = vpack.c.b16 %v1514, %v1510
    %v2391 = vpack.c.b16 %v1515, %v1511
    %v2392 = vpack.c.b16 %v1516, %v1512
    %v2393 = vpack.c.b16 %v1521, %v1517
    %v2394 = vpack.c.b16 %v1522, %v1518
    %v2395 = vpack.c.b16 %v1523, %v1519
    %v2396 = vpack.c.b16 %v1524, %v1520
    %v2397 = vpack.c.b16 %v1529, %v1525
    %v2398 = vpack.c.b16 %v1530, %v1526
    %v2399 = vpack.c.b16 %v1531, %v1527
    %v2400 = vpack.c.b16 %v1532, %v1528
    %v2401 = vpack.c.b16 %v1537, %v1533
    %v2402 = vpack.c.b16 %v1538, %v1534
    %v2403 = vpack.c.b16 %v1539, %v1535
    %v2404 = vpack.c.b16 %v1540, %v1536
    %v2405 = vpack.c.b16 %v1545, %v1541
    %v2406 = vpack.c.b16 %v1546, %v1542
    %v2407 = vpack.c.b16 %v1547, %v1543
    %v2408 = vpack.c.b16 %v1548, %v1544
    %v2409 = vpack.c.b16 %v1553, %v1549
    %v2410 = vpack.c.b16 %v1554, %v1550
    %v2411 = vpack.c.b16 %v1555, %v1551
    %v2412 = vpack.c.b16 %v1556, %v1552
    %v2413 = vpack.c.b16 %v1561, %v1557
    %v2414 = vpack.c.b16 %v1562, %v1558
    %v2415 = vpack.c.b16 %v1563, %v1559
    %v2416 = vpack.c.b16 %v1564, %v1560
    %v2417 = vpack.c.b16 %v1569, %v1565
    %v2418 = vpack.c.b16 %v1570, %v1566
    %v2419 = vpack.c.b16 %v1571, %v1567
    %v2420 = vpack.c.b16 %v1572, %v1568
    %v2421 = vpack.c.b16 %v1577, %v1573
    %v2422 = vpack.c.b16 %v1578, %v1574
    %v2423 = vpack.c.b16 %v1579, %v1575
    %v2424 = vpack.c.b16 %v1580, %v1576
    %v2425 = vpack.c.b16 %v1585, %v1581
    %v2426 = vpack.c.b16 %v1586, %v1582
    %v2427 = vpack.c.b16 %v1587, %v1583
    %v2428 = vpack.c.b16 %v1588, %v1584
    %v2429 = vpack.c.b16 %v1593, %v1589
    %v2430 = vpack.c.b16 %v1594, %v1590
    %v2431 = vpack.c.b16 %v1595, %v1591
    %v2432 = vpack.c.b16 %v1596, %v1592
    %v2433 = vpack.c.b16 %v1601, %v1597
    %v2434 = vpack.c.b16 %v1602, %v1598
    %v2435 = vpack.c.b16 %v1603, %v1599
    %v2436 = vpack.c.b16 %v1604, %v1600
    %v2437 = vpack.c.b16 %v1609, %v1605
    %v2438 = vpack.c.b16 %v1610, %v1606
    %v2439 = vpack.c.b16 %v1611, %v1607
    %v2440 = vpack.c.b16 %v1612, %v1608
    %v2441 = vpack.c.b16 %v1617, %v1613
    %v2442 = vpack.c.b16 %v1618, %v1614
    %v2443 = vpack.c.b16 %v1619, %v1615
    %v2444 = vpack.c.b16 %v1620, %v1616
    %v2445 = vpack.c.b16 %v1625, %v1621
    %v2446 = vpack.c.b16 %v1626, %v1622
    %v2447 = vpack.c.b16 %v1627, %v1623
    %v2448 = vpack.c.b16 %v1628, %v1624
    %v2449 = vpack.c.b16 %v1633, %v1629
    %v2450 = vpack.c.b16 %v1634, %v1630
    %v2451 = vpack.c.b16 %v1635, %v1631
    %v2452 = vpack.c.b16 %v1636, %v1632
    %v2453 = vpack.c.b16 %v1641, %v1637
    %v2454 = vpack.c.b16 %v1642, %v1638
    %v2455 = vpack.c.b16 %v1643, %v1639
    %v2456 = vpack.c.b16 %v1644, %v1640
    %v2457 = vpack.c.b16 %v1649, %v1645
    %v2458 = vpack.c.b16 %v1650, %v1646
    %v2459 = vpack.c.b16 %v1651, %v1647
    %v2460 = vpack.c.b16 %v1652, %v1648
    %v2461 = vpack.c.b16 %v1657, %v1653
    %v2462 = vpack.c.b16 %v1658, %v1654
    %v2463 = vpack.c.b16 %v1659, %v1655
    %v2464 = vpack.c.b16 %v1660, %v1656
    %v2465 = vpack.c.b16 %v1665, %v1661
    %v2466 = vpack.c.b16 %v1666, %v1662
    %v2467 = vpack.c.b16 %v1667, %v1663
    %v2468 = vpack.c.b16 %v1668, %v1664
    %v2469 = vpack.c.b16 %v1673, %v1669
    %v2470 = vpack.c.b16 %v1674, %v1670
    %v2471 = vpack.c.b16 %v1675, %v1671
    %v2472 = vpack.c.b16 %v1676, %v1672
    %v2473 = vpack.c.b16 %v1681, %v1677
    %v2474 = vpack.c.b16 %v1682, %v1678
    %v2475 = vpack.c.b16 %v1683, %v1679
    %v2476 = vpack.c.b16 %v1684, %v1680
    %v2477 = vpack.c.b16 %v1689, %v1685
    %v2478 = vpack.c.b16 %v1690, %v1686
    %v2479 = vpack.c.b16 %v1691, %v1687
    %v2480 = vpack.c.b16 %v1692, %v1688
    %v2481 = vpack.c.b16 %v1697, %v1693
    %v2482 = vpack.c.b16 %v1698, %v1694
    %v2483 = vpack.c.b16 %v1699, %v1695
    %v2484 = vpack.c.b16 %v1700, %v1696
    %v2485 = vpack.c.b16 %v1705, %v1701
    %v2486 = vpack.c.b16 %v1706, %v1702
    %v2487 = vpack.c.b16 %v1707, %v1703
    %v2488 = vpack.c.b16 %v1708, %v1704
    %v2489 = vpack.c.b16 %v1713, %v1709
    %v2490 = vpack.c.b16 %v1714, %v1710
    %v2491 = vpack.c.b16 %v1715, %v1711
    %v2492 = vpack.c.b16 %v1716, %v1712
    %v2493 = vpack.c.b16 %v1721, %v1717
    %v2494 = vpack.c.b16 %v1722, %v1718
    %v2495 = vpack.c.b16 %v1723, %v1719
    %v2496 = vpack.c.b16 %v1724, %v1720
    %v2497 = vpack.c.b16 %v1729, %v1725
    %v2498 = vpack.c.b16 %v1730, %v1726
    %v2499 = vpack.c.b16 %v1731, %v1727
    %v2500 = vpack.c.b16 %v1732, %v1728
    %v2501 = vpack.c.b16 %v1737, %v1733
    %v2502 = vpack.c.b16 %v1738, %v1734
    %v2503 = vpack.c.b16 %v1739, %v1735
    %v2504 = vpack.c.b16 %v1740, %v1736
    %v2505 = vpack.c.b16 %v1745, %v1741
    %v2506 = vpack.c.b16 %v1746, %v1742
    %v2507 = vpack.c.b16 %v1747, %v1743
    %v2508 = vpack.c.b16 %v1748, %v1744
    %v2509 = vpack.c.b16 %v1753, %v1749
    %v2510 = vpack.c.b16 %v1754, %v1750
    %v2511 = vpack.c.b16 %v1755, %v1751
    %v2512 = vpack.c.b16 %v1756, %v1752
    %v2513 = vpack.c.b16 %v1761, %v1757
    %v2514 = vpack.c.b16 %v1762, %v1758
    %v2515 = vpack.c.b16 %v1763, %v1759
    %v2516 = vpack.c.b16 %v1764, %v1760
    %v2517 = vpack.c.b16 %v1769, %v1765
    %v2518 = vpack.c.b16 %v1770, %v1766
    %v2519 = vpack.c.b16 %v1771, %v1767
    %v2520 = vpack.c.b16 %v1772, %v1768
    %v2521 = vpack.c.b16 %v1777, %v1773
    %v2522 = vpack.c.b16 %v1778, %v1774
    %v2523 = vpack.c.b16 %v1779, %v1775
    %v2524 = vpack.c.b16 %v1780, %v1776
    %v2525 = vpack.c.b16 %v1785, %v1781
    %v2526 = vpack.c.b16 %v1786, %v1782
    %v2527 = vpack.c.b16 %v1787, %v1783
    %v2528 = vpack.c.b16 %v1788, %v1784
    %v2529 = vpack.c.b16 %v1793, %v1789
    %v2530 = vpack.c.b16 %v1794, %v1790
    %v2531 = vpack.c.b16 %v1795, %v1791
    %v2532 = vpack.c.b16 %v1796, %v1792
    %v2533 = vpack.c.b16 %v1801, %v1797
    %v2534 = vpack.c.b16 %v1802, %v1798
    %v2535 = vpack.c.b16 %v1803, %v1799
    %v2536 = vpack.c.b16 %v1804, %v1800
    %v2537 = vpack.c.b16 %v1809, %v1805
    %v2538 = vpack.c.b16 %v1810, %v1806
    %v2539 = vpack.c.b16 %v1811, %v1807
    %v2540 = vpack.c.b16 %v1812, %v1808
    %v2541 = vpack.c.b16 %v1817, %v1813
    %v2542 = vpack.c.b16 %v1818, %v1814
    %v2543 = vpack.c.b16 %v1819, %v1815
    %v2544 = vpack.c.b16 %v1820, %v1816
    %v2545 = vpack.c.b16 %v1825, %v1821
    %v2546 = vpack.c.b16 %v1826, %v1822
    %v2547 = vpack.c.b16 %v1827, %v1823
    %v2548 = vpack.c.b16 %v1828, %v1824
    %v2549 = vpack.c.b16 %v1833, %v1829
    %v2550 = vpack.c.b16 %v1834, %v1830
    %v2551 = vpack.c.b16 %v1835, %v1831
    %v2552 = vpack.c.b16 %v1836, %v1832
    %v2553 = vpack.c.b16 %v1841, %v1837
    %v2554 = vpack.c.b16 %v1842, %v1838
    %v2555 = vpack.c.b16 %v1843, %v1839
    %v2556 = vpack.c.b16 %v1844, %v1840
    %v2557 = vpack.c.b16 %v1849, %v1845
    %v2558 = vpack.c.b16 %v1850, %v1846
    %v2559 = vpack.c.b16 %v1851, %v1847
    %v2560 = vpack.c.b16 %v1852, %v1848
    %v2561 = vpack.c.b16 %v1857, %v1853
    %v2562 = vpack.c.b16 %v1858, %v1854
    %v2563 = vpack.c.b16 %v1859, %v1855
    %v2564 = vpack.c.b16 %v1860, %v1856
    %v2565 = vpack.c.b16 %v1865, %v1861
    %v2566 = vpack.c.b16 %v1866, %v1862
    %v2567 = vpack.c.b16 %v1867, %v1863
    %v2568 = vpack.c.b16 %v1868, %v1864
    %v2569 = vpack.c.b16 %v1873, %v1869
    %v2570 = vpack.c.b16 %v1874, %v1870
    %v2571 = vpack.c.b16 %v1875, %v1871
    %v2572 = vpack.c.b16 %v1876, %v1872
    %v2573 = vpack.c.b16 %v1881, %v1877
    %v2574 = vpack.c.b16 %v1882, %v1878
    %v2575 = vpack.c.b16 %v1883, %v1879
    %v2576 = vpack.c.b16 %v1884, %v1880
    %v2577 = vpack.c.b16 %v1889, %v1885
    %v2578 = vpack.c.b16 %v1890, %v1886
    %v2579 = vpack.c.b16 %v1891, %v1887
    %v2580 = vpack.c.b16 %v1892, %v1888
    %v2581 = vpack.c.b16 %v1897, %v1893
    %v2582 = vpack.c.b16 %v1898, %v1894
    %v2583 = vpack.c.b16 %v1899, %v1895
    %v2584 = vpack.c.b16 %v1900, %v1896
    %v2585 = vpack.c.b16 %v1905, %v1901
    %v2586 = vpack.c.b16 %v1906, %v1902
    %v2587 = vpack.c.b16 %v1907, %v1903
    %v2588 = vpack.c.b16 %v1908, %v1904
    %v2589 = vpack.c.b16 %v1913, %v1909
    %v2590 = vpack.c.b16 %v1914, %v1910
    %v2591 = vpack.c.b16 %v1915, %v1911
    %v2592 = vpack.c.b16 %v1916, %v1912
    %v2593 = vpack.c.b16 %v1921, %v1917
    %v2594 = vpack.c.b16 %v1922, %v1918
    %v2595 = vpack.c.b16 %v1923, %v1919
    %v2596 = vpack.c.b16 %v1924, %v1920
    %v2597 = vpack.c.b16 %v1929, %v1925
    %v2598 = vpack.c.b16 %v1930, %v1926
    %v2599 = vpack.c.b16 %v1931, %v1927
    %v2600 = vpack.c.b16 %v1932, %v1928
    %v2601 = vpack.c.b16 %v1937, %v1933
    %v2602 = vpack.c.b16 %v1938, %v1934
    %v2603 = vpack.c.b16 %v1939, %v1935
    %v2604 = vpack.c.b16 %v1940, %v1936
    %v2605 = vpack.c.b16 %v1945, %v1941
    %v2606 = vpack.c.b16 %v1946, %v1942
    %v2607 = vpack.c.b16 %v1947, %v1943
    %v2608 = vpack.c.b16 %v1948, %v1944
    %v2609 = vpack.c.b16 %v1953, %v1949
    %v2610 = vpack.c.b16 %v1954, %v1950
    %v2611 = vpack.c.b16 %v1955, %v1951
    %v2612 = vpack.c.b16 %v1956, %v1952
    %v2613 = vpack.c.b16 %v1961, %v1957
    %v2614 = vpack.c.b16 %v1962, %v1958
    %v2615 = vpack.c.b16 %v1963, %v1959
    %v2616 = vpack.c.b16 %v1964, %v1960
    %v2617 = vpack.c.b16 %v1969, %v1965
    %v2618 = vpack.c.b16 %v1970, %v1966
    %v2619 = vpack.c.b16 %v1971, %v1967
    %v2620 = vpack.c.b16 %v1972, %v1968
    %v2621 = vpack.c.b16 %v1977, %v1973
    %v2622 = vpack.c.b16 %v1978, %v1974
    %v2623 = vpack.c.b16 %v1979, %v1975
    %v2624 = vpack.c.b16 %v1980, %v1976
    %v2625 = vpack.c.b16 %v1985, %v1981
    %v2626 = vpack.c.b16 %v1986, %v1982
    %v2627 = vpack.c.b16 %v1987, %v1983
    %v2628 = vpack.c.b16 %v1988, %v1984
    %v2629 = vpack.c.b16 %v1993, %v1989
    %v2630 = vpack.c.b16 %v1994, %v1990
    %v2631 = vpack.c.b16 %v1995, %v1991
    %v2632 = vpack.c.b16 %v1996, %v1992
    %v2633 = vpack.c.b16 %v2001, %v1997
    %v2634 = vpack.c.b16 %v2002, %v1998
    %v2635 = vpack.c.b16 %v2003, %v1999
    %v2636 = vpack.c.b16 %v2004, %v2000
    %v2637 = vpack.c.b16 %v2009, %v2005
    %v2638 = vpack.c.b16 %v2010, %v2006
    %v2639 = vpack.c.b16 %v2011, %v2007
    %v2640 = vpack.c.b16 %v2012, %v2008
    %v2641 = vpack.c.b16 %v2017, %v2013
    %v2642 = vpack.c.b16 %v2018, %v2014
    %v2643 = vpack.c.b16 %v2019, %v2015
    %v2644 = vpack.c.b16 %v2020, %v2016
    %v2645 = vpack.c.b16 %v2025, %v2021
    %v2646 = vpack.c.b16 %v2026, %v2022
    %v2647 = vpack.c.b16 %v2027, %v2023
    %v2648 = vpack.c.b16 %v2028, %v2024
    %v2649 = vpack.c.b16 %v2033, %v2029
    %v2650 = vpack.c.b16 %v2034, %v2030
    %v2651 = vpack.c.b16 %v2035, %v2031
    %v2652 = vpack.c.b16 %v2036, %v2032
    %v2653 = vpack.c.b16 %v2041, %v2037
    %v2654 = vpack.c.b16 %v2042, %v2038
    %v2655 = vpack.c.b16 %v2043, %v2039
    %v2656 = vpack.c.b16 %v2044, %v2040
    %v2657 = vpack.c.b16 %v2049, %v2045
    %v2658 = vpack.c.b16 %v2050, %v2046
    %v2659 = vpack.c.b16 %v2051, %v2047
    %v2660 = vpack.c.b16 %v2052, %v2048
    %v2661 = vpack.c.b16 %v2057, %v2053
    %v2662 = vpack.c.b16 %v2058, %v2054
    %v2663 = vpack.c.b16 %v2059, %v2055
    %v2664 = vpack.c.b16 %v2060, %v2056
    %v2665 = vpack.c.b16 %v2065, %v2061
    %v2666 = vpack.c.b16 %v2066, %v2062
    %v2667 = vpack.c.b16 %v2067, %v2063
    %v2668 = vpack.c.b16 %v2068, %v2064
    %v2669 = vpack.c.b16 %v2073, %v2069
    %v2670 = vpack.c.b16 %v2074, %v2070
    %v2671 = vpack.c.b16 %v2075, %v2071
    %v2672 = vpack.c.b16 %v2076, %v2072
    %v2673 = vpack.c.b16 %v2081, %v2077
    %v2674 = vpack.c.b16 %v2082, %v2078
    %v2675 = vpack.c.b16 %v2083, %v2079
    %v2676 = vpack.c.b16 %v2084, %v2080
    %v2677 = vpack.c.b16 %v2089, %v2085
    %v2678 = vpack.c.b16 %v2090, %v2086
    %v2679 = vpack.c.b16 %v2091, %v2087
    %v2680 = vpack.c.b16 %v2092, %v2088
    %v2681 = vpack.c.b16 %v2097, %v2093
    %v2682 = vpack.c.b16 %v2098, %v2094
    %v2683 = vpack.c.b16 %v2099, %v2095
    %v2684 = vpack.c.b16 %v2100, %v2096
    %v2685 = vpack.c.b16 %v2105, %v2101
    %v2686 = vpack.c.b16 %v2106, %v2102
    %v2687 = vpack.c.b16 %v2107, %v2103
    %v2688 = vpack.c.b16 %v2108, %v2104
    %v2689 = vpack.c.b16 %v2113, %v2109
    %v2690 = vpack.c.b16 %v2114, %v2110
    %v2691 = vpack.c.b16 %v2115, %v2111
    %v2692 = vpack.c.b16 %v2116, %v2112
    %v2693 = vpack.c.b16 %v2121, %v2117
    %v2694 = vpack.c.b16 %v2122, %v2118
    %v2695 = vpack.c.b16 %v2123, %v2119
    %v2696 = vpack.c.b16 %v2124, %v2120
    %v2697 = vpack.c.b16 %v2129, %v2125
    %v2698 = vpack.c.b16 %v2130, %v2126
    %v2699 = vpack.c.b16 %v2131, %v2127
    %v2700 = vpack.c.b16 %v2132, %v2128
    %v2701 = vpack.c.b16 %v2137, %v2133
    %v2702 = vpack.c.b16 %v2138, %v2134
    %v2703 = vpack.c.b16 %v2139, %v2135
    %v2704 = vpack.c.b16 %v2140, %v2136
    %v2705 = vpack.c.b16 %v2145, %v2141
    %v2706 = vpack.c.b16 %v2146, %v2142
    %v2707 = vpack.c.b16 %v2147, %v2143
    %v2708 = vpack.c.b16 %v2148, %v2144
    %v2709 = vpack.c.b16 %v2153, %v2149
    %v2710 = vpack.c.b16 %v2154, %v2150
    %v2711 = vpack.c.b16 %v2155, %v2151
    %v2712 = vpack.c.b16 %v2156, %v2152
    %v2713 = vpack.c.b16 %v2161, %v2157
    %v2714 = vpack.c.b16 %v2162, %v2158
    %v2715 = vpack.c.b16 %v2163, %v2159
    %v2716 = vpack.c.b16 %v2164, %v2160
    %v2717 = vpack.c.b16 %v2169, %v2165
    %v2718 = vpack.c.b16 %v2170, %v2166
    %v2719 = vpack.c.b16 %v2171, %v2167
    %v2720 = vpack.c.b16 %v2172, %v2168
    %v2721 = vpack.c.b16 %v2177, %v2173
    %v2722 = vpack.c.b16 %v2178, %v2174
    %v2723 = vpack.c.b16 %v2179, %v2175
    %v2724 = vpack.c.b16 %v2180, %v2176
    %v2725 = vpack.c.b16 %v2185, %v2181
    %v2726 = vpack.c.b16 %v2186, %v2182
    %v2727 = vpack.c.b16 %v2187, %v2183
    %v2728 = vpack.c.b16 %v2188, %v2184
    %v2729 = vpack.c.b16 %v2193, %v2189
    %v2730 = vpack.c.b16 %v2194, %v2190
    %v2731 = vpack.c.b16 %v2195, %v2191
    %v2732 = vpack.c.b16 %v2196, %v2192
    %v2733 = vpack.c.b16 %v2201, %v2197
    %v2734 = vpack.c.b16 %v2202, %v2198
    %v2735 = vpack.c.b16 %v2203, %v2199
    %v2736 = vpack.c.b16 %v2204, %v2200
    %v2737 = vpack.c.b16 %v2209, %v2205
    %v2738 = vpack.c.b16 %v2210, %v2206
    %v2739 = vpack.c.b16 %v2211, %v2207
    %v2740 = vpack.c.b16 %v2212, %v2208
    %v2741 = vpack.c.b16 %v2217, %v2213
    %v2742 = vpack.c.b16 %v2218, %v2214
    %v2743 = vpack.c.b16 %v2219, %v2215
    %v2744 = vpack.c.b16 %v2220, %v2216
    %v2745 = vpack.c.b16 %v2225, %v2221
    %v2746 = vpack.c.b16 %v2226, %v2222
    %v2747 = vpack.c.b16 %v2227, %v2223
    %v2748 = vpack.c.b16 %v2228, %v2224
    %v2749 = vpack.c.b16 %v2233, %v2229
    %v2750 = vpack.c.b16 %v2234, %v2230
    %v2751 = vpack.c.b16 %v2235, %v2231
    %v2752 = vpack.c.b16 %v2236, %v2232
    %v2753 = vpack.c.b16 %v2241, %v2237
    %v2754 = vpack.c.b16 %v2242, %v2238
    %v2755 = vpack.c.b16 %v2243, %v2239
    %v2756 = vpack.c.b16 %v2244, %v2240
    %3269 = vmatprep.subr.bf16.mxu0 %v2246
    %3270 = vmatpush1.bf16.msra.mxu0 %v2245
    %3271 = vmatprep.subr.bf16.mxu0 %v2250
    %3272 = vmatpush1.bf16.msra.mxu0 %v2249
    %3273 = vmatprep.subr.bf16.mxu0 %v2254
    %3274 = vmatpush1.bf16.msra.mxu0 %v2253
    %3275 = vmatprep.subr.bf16.mxu0 %v2258
    %3276 = vmatpush1.bf16.msra.mxu0 %v2257
    %3277 = vmatprep.subr.bf16.mxu0 %v2262
    %3278 = vmatpush1.bf16.msra.mxu0 %v2261
    %3279 = vmatprep.subr.bf16.mxu0 %v2266
    %3280 = vmatpush1.bf16.msra.mxu0 %v2265
    %3281 = vmatprep.subr.bf16.mxu0 %v2270
    %3282 = vmatpush1.bf16.msra.mxu0 %v2269
    %3283 = vmatprep.subr.bf16.mxu0 %v2274
    %3284 = vmatpush1.bf16.msra.mxu0 %v2273
    %3285 = vmatprep.subr.bf16.mxu0 %v2278
    %3286 = vmatpush1.bf16.msra.mxu0 %v2277
    %3287 = vmatprep.subr.bf16.mxu0 %v2282
    %3288 = vmatpush1.bf16.msra.mxu0 %v2281
    %3289 = vmatprep.subr.bf16.mxu0 %v2286
    %3290 = vmatpush1.bf16.msra.mxu0 %v2285
    %3291 = vmatprep.subr.bf16.mxu0 %v2290
    %3292 = vmatpush1.bf16.msra.mxu0 %v2289
    %3293 = vmatprep.subr.bf16.mxu0 %v2294
    %3294 = vmatpush1.bf16.msra.mxu0 %v2293
    %3295 = vmatprep.subr.bf16.mxu0 %v2298
    %3296 = vmatpush1.bf16.msra.mxu0 %v2297
    %3297 = vmatprep.subr.bf16.mxu0 %v2302
    %3298 = vmatpush1.bf16.msra.mxu0 %v2301
    %3299 = vmatprep.subr.bf16.mxu0 %v2306
    %3300 = vmatpush1.bf16.msra.mxu0 %v2305
    %3301 = vmatprep.mubr.bf16.mxu0 %v160
    %3302 = vmatmul.mubr.bf16.gmra.mrb[0].mxu0 %v159
    %v3303 = vpop.f32.mrb[0].mxu0
    %v3304 = vadd.f32 %v692, %v3303
    %v3305 = vpop.f32.mrb[0].mxu0
    %v3306 = vadd.f32 %v696, %v3305
    %v3307 = vpop.f32.mrb[0].mxu0
    %v3308 = vpop.f32.mrb[0].mxu0
    %3309 = vdwg.mxu0
    %3310 = vmatprep.subr.bf16.mxu0 %v2310
    %3311 = vmatpush1.bf16.msra.mxu0 %v2309
    %3312 = vmatprep.subr.bf16.mxu0 %v2314
    %3313 = vmatpush1.bf16.msra.mxu0 %v2313
    %3314 = vmatprep.subr.bf16.mxu0 %v2318
    %3315 = vmatpush1.bf16.msra.mxu0 %v2317
    %3316 = vmatprep.subr.bf16.mxu0 %v2322
    %3317 = vmatpush1.bf16.msra.mxu0 %v2321
    %3318 = vmatprep.subr.bf16.mxu0 %v2326
    %3319 = vmatpush1.bf16.msra.mxu0 %v2325
    %3320 = vmatprep.subr.bf16.mxu0 %v2330
    %3321 = vmatpush1.bf16.msra.mxu0 %v2329
    %3322 = vmatprep.subr.bf16.mxu0 %v2334
    %3323 = vmatpush1.bf16.msra.mxu0 %v2333
    %3324 = vmatprep.subr.bf16.mxu0 %v2338
    %3325 = vmatpush1.bf16.msra.mxu0 %v2337
    %3326 = vmatprep.subr.bf16.mxu0 %v2342
    %3327 = vmatpush1.bf16.msra.mxu0 %v2341
    %3328 = vmatprep.subr.bf16.mxu0 %v2346
    %3329 = vmatpush1.bf16.msra.mxu0 %v2345
    %3330 = vmatprep.subr.bf16.mxu0 %v2350
    %3331 = vmatpush1.bf16.msra.mxu0 %v2349
    %3332 = vmatprep.subr.bf16.mxu0 %v2354
    %3333 = vmatpush1.bf16.msra.mxu0 %v2353
    %3334 = vmatprep.subr.bf16.mxu0 %v2358
    %3335 = vmatpush1.bf16.msra.mxu0 %v2357
    %3336 = vmatprep.subr.bf16.mxu0 %v2362
    %3337 = vmatpush1.bf16.msra.mxu0 %v2361
    %3338 = vmatprep.subr.bf16.mxu0 %v2366
    %3339 = vmatpush1.bf16.msra.mxu0 %v2365
    %3340 = vmatprep.subr.bf16.mxu0 %v2370
    %3341 = vmatpush1.bf16.msra.mxu0 %v2369
    %3342 = vmatprep.mubr.bf16.mxu0 %v162
    %3343 = vmatmul.mubr.bf16.gmra.mrb[0].mxu0 %v161
    %v3344 = vpop.f32.mrb[0].mxu0
    %v3345 = vadd.f32 %v3304, %v3344
    %v3346 = vpop.f32.mrb[0].mxu0
    %v3347 = vadd.f32 %v3306, %v3346
    %v3348 = vpop.f32.mrb[0].mxu0
    %v3349 = vpop.f32.mrb[0].mxu0
    %3350 = vdwg.mxu0
    %3351 = vmatprep.subr.bf16.mxu0 %v2374
    %3352 = vmatpush1.bf16.msra.mxu0 %v2373
    %3353 = vmatprep.subr.bf16.mxu0 %v2378
    %3354 = vmatpush1.bf16.msra.mxu0 %v2377
    %3355 = vmatprep.subr.bf16.mxu0 %v2382
    %3356 = vmatpush1.bf16.msra.mxu0 %v2381
    %3357 = vmatprep.subr.bf16.mxu0 %v2386
    %3358 = vmatpush1.bf16.msra.mxu0 %v2385
    %3359 = vmatprep.subr.bf16.mxu0 %v2390
    %3360 = vmatpush1.bf16.msra.mxu0 %v2389
    %3361 = vmatprep.subr.bf16.mxu0 %v2394
    %3362 = vmatpush1.bf16.msra.mxu0 %v2393
    %3363 = vmatprep.subr.bf16.mxu0 %v2398
    %3364 = vmatpush1.bf16.msra.mxu0 %v2397
    %3365 = vmatprep.subr.bf16.mxu0 %v2402
    %3366 = vmatpush1.bf16.msra.mxu0 %v2401
    %3367 = vmatprep.subr.bf16.mxu0 %v2406
    %3368 = vmatpush1.bf16.msra.mxu0 %v2405
    %3369 = vmatprep.subr.bf16.mxu0 %v2410
    %3370 = vmatpush1.bf16.msra.mxu0 %v2409
    %3371 = vmatprep.subr.bf16.mxu0 %v2414
    %3372 = vmatpush1.bf16.msra.mxu0 %v2413
    %3373 = vmatprep.subr.bf16.mxu0 %v2418
    %3374 = vmatpush1.bf16.msra.mxu0 %v2417
    %3375 = vmatprep.subr.bf16.mxu0 %v2422
    %3376 = vmatpush1.bf16.msra.mxu0 %v2421
    %3377 = vmatprep.subr.bf16.mxu0 %v2426
    %3378 = vmatpush1.bf16.msra.mxu0 %v2425
    %3379 = vmatprep.subr.bf16.mxu0 %v2430
    %3380 = vmatpush1.bf16.msra.mxu0 %v2429
    %3381 = vmatprep.subr.bf16.mxu0 %v2434
    %3382 = vmatpush1.bf16.msra.mxu0 %v2433
    %3383 = vmatprep.mubr.bf16.mxu0 %v164
    %3384 = vmatmul.mubr.bf16.gmra.mrb[0].mxu0 %v163
    %v3385 = vpop.f32.mrb[0].mxu0
    %v3386 = vadd.f32 %v3345, %v3385
    %v3387 = vpop.f32.mrb[0].mxu0
    %v3388 = vadd.f32 %v3347, %v3387
    %v3389 = vpop.f32.mrb[0].mxu0
    %v3390 = vpop.f32.mrb[0].mxu0
    %3391 = vdwg.mxu0
    %3392 = vmatprep.subr.bf16.mxu0 %v2438
    %3393 = vmatpush1.bf16.msra.mxu0 %v2437
    %3394 = vmatprep.subr.bf16.mxu0 %v2442
    %3395 = vmatpush1.bf16.msra.mxu0 %v2441
    %3396 = vmatprep.subr.bf16.mxu0 %v2446
    %3397 = vmatpush1.bf16.msra.mxu0 %v2445
    %3398 = vmatprep.subr.bf16.mxu0 %v2450
    %3399 = vmatpush1.bf16.msra.mxu0 %v2449
    %3400 = vmatprep.subr.bf16.mxu0 %v2454
    %3401 = vmatpush1.bf16.msra.mxu0 %v2453
    %3402 = vmatprep.subr.bf16.mxu0 %v2458
    %3403 = vmatpush1.bf16.msra.mxu0 %v2457
    %3404 = vmatprep.subr.bf16.mxu0 %v2462
    %3405 = vmatpush1.bf16.msra.mxu0 %v2461
    %3406 = vmatprep.subr.bf16.mxu0 %v2466
    %3407 = vmatpush1.bf16.msra.mxu0 %v2465
    %3408 = vmatprep.subr.bf16.mxu0 %v2470
    %3409 = vmatpush1.bf16.msra.mxu0 %v2469
    %3410 = vmatprep.subr.bf16.mxu0 %v2474
    %3411 = vmatpush1.bf16.msra.mxu0 %v2473
    %3412 = vmatprep.subr.bf16.mxu0 %v2478
    %3413 = vmatpush1.bf16.msra.mxu0 %v2477
    %3414 = vmatprep.subr.bf16.mxu0 %v2482
    %3415 = vmatpush1.bf16.msra.mxu0 %v2481
    %3416 = vmatprep.subr.bf16.mxu0 %v2486
    %3417 = vmatpush1.bf16.msra.mxu0 %v2485
    %3418 = vmatprep.subr.bf16.mxu0 %v2490
    %3419 = vmatpush1.bf16.msra.mxu0 %v2489
    %3420 = vmatprep.subr.bf16.mxu0 %v2494
    %3421 = vmatpush1.bf16.msra.mxu0 %v2493
    %3422 = vmatprep.subr.bf16.mxu0 %v2498
    %3423 = vmatpush1.bf16.msra.mxu0 %v2497
    %3424 = vmatprep.mubr.bf16.mxu0 %v166
    %3425 = vmatmul.mubr.bf16.gmra.mrb[0].mxu0 %v165
    %v3426 = vpop.f32.mrb[0].mxu0
    %v3427 = vadd.f32 %v3386, %v3426
    %v3428 = vpop.f32.mrb[0].mxu0
    %v3429 = vadd.f32 %v3388, %v3428
    %v3430 = vpop.f32.mrb[0].mxu0
    %v3431 = vpop.f32.mrb[0].mxu0
    %3432 = vdwg.mxu0
    %3433 = vmatprep.subr.bf16.mxu0 %v2502
    %3434 = vmatpush1.bf16.msra.mxu0 %v2501
    %3435 = vmatprep.subr.bf16.mxu0 %v2506
    %3436 = vmatpush1.bf16.msra.mxu0 %v2505
    %3437 = vmatprep.subr.bf16.mxu0 %v2510
    %3438 = vmatpush1.bf16.msra.mxu0 %v2509
    %3439 = vmatprep.subr.bf16.mxu0 %v2514
    %3440 = vmatpush1.bf16.msra.mxu0 %v2513
    %3441 = vmatprep.subr.bf16.mxu0 %v2518
    %3442 = vmatpush1.bf16.msra.mxu0 %v2517
    %3443 = vmatprep.subr.bf16.mxu0 %v2522
    %3444 = vmatpush1.bf16.msra.mxu0 %v2521
    %3445 = vmatprep.subr.bf16.mxu0 %v2526
    %3446 = vmatpush1.bf16.msra.mxu0 %v2525
    %3447 = vmatprep.subr.bf16.mxu0 %v2530
    %3448 = vmatpush1.bf16.msra.mxu0 %v2529
    %3449 = vmatprep.subr.bf16.mxu0 %v2534
    %3450 = vmatpush1.bf16.msra.mxu0 %v2533
    %3451 = vmatprep.subr.bf16.mxu0 %v2538
    %3452 = vmatpush1.bf16.msra.mxu0 %v2537
    %3453 = vmatprep.subr.bf16.mxu0 %v2542
    %3454 = vmatpush1.bf16.msra.mxu0 %v2541
    %3455 = vmatprep.subr.bf16.mxu0 %v2546
    %3456 = vmatpush1.bf16.msra.mxu0 %v2545
    %3457 = vmatprep.subr.bf16.mxu0 %v2550
    %3458 = vmatpush1.bf16.msra.mxu0 %v2549
    %3459 = vmatprep.subr.bf16.mxu0 %v2554
    %3460 = vmatpush1.bf16.msra.mxu0 %v2553
    %3461 = vmatprep.subr.bf16.mxu0 %v2558
    %3462 = vmatpush1.bf16.msra.mxu0 %v2557
    %3463 = vmatprep.subr.bf16.mxu0 %v2562
    %3464 = vmatpush1.bf16.msra.mxu0 %v2561
    %3465 = vmatprep.mubr.bf16.mxu0 %v168
    %3466 = vmatmul.mubr.bf16.gmra.mrb[0].mxu0 %v167
    %v3467 = vpop.f32.mrb[0].mxu0
    %v3468 = vadd.f32 %v3427, %v3467
    %v3469 = vpop.f32.mrb[0].mxu0
    %v3470 = vadd.f32 %v3429, %v3469
    %v3471 = vpop.f32.mrb[0].mxu0
    %v3472 = vpop.f32.mrb[0].mxu0
    %3473 = vdwg.mxu0
    %3474 = vmatprep.subr.bf16.mxu0 %v2566
    %3475 = vmatpush1.bf16.msra.mxu0 %v2565
    %3476 = vmatprep.subr.bf16.mxu0 %v2570
    %3477 = vmatpush1.bf16.msra.mxu0 %v2569
    %3478 = vmatprep.subr.bf16.mxu0 %v2574
    %3479 = vmatpush1.bf16.msra.mxu0 %v2573
    %3480 = vmatprep.subr.bf16.mxu0 %v2578
    %3481 = vmatpush1.bf16.msra.mxu0 %v2577
    %3482 = vmatprep.subr.bf16.mxu0 %v2582
    %3483 = vmatpush1.bf16.msra.mxu0 %v2581
    %3484 = vmatprep.subr.bf16.mxu0 %v2586
    %3485 = vmatpush1.bf16.msra.mxu0 %v2585
    %3486 = vmatprep.subr.bf16.mxu0 %v2590
    %3487 = vmatpush1.bf16.msra.mxu0 %v2589
    %3488 = vmatprep.subr.bf16.mxu0 %v2594
    %3489 = vmatpush1.bf16.msra.mxu0 %v2593
    %3490 = vmatprep.subr.bf16.mxu0 %v2598
    %3491 = vmatpush1.bf16.msra.mxu0 %v2597
    %3492 = vmatprep.subr.bf16.mxu0 %v2602
    %3493 = vmatpush1.bf16.msra.mxu0 %v2601
    %3494 = vmatprep.subr.bf16.mxu0 %v2606
    %3495 = vmatpush1.bf16.msra.mxu0 %v2605
    %3496 = vmatprep.subr.bf16.mxu0 %v2610
    %3497 = vmatpush1.bf16.msra.mxu0 %v2609
    %3498 = vmatprep.subr.bf16.mxu0 %v2614
    %3499 = vmatpush1.bf16.msra.mxu0 %v2613
    %3500 = vmatprep.subr.bf16.mxu0 %v2618
    %3501 = vmatpush1.bf16.msra.mxu0 %v2617
    %3502 = vmatprep.subr.bf16.mxu0 %v2622
    %3503 = vmatpush1.bf16.msra.mxu0 %v2621
    %3504 = vmatprep.subr.bf16.mxu0 %v2626
    %3505 = vmatpush1.bf16.msra.mxu0 %v2625
    %3506 = vmatprep.mubr.bf16.mxu0 %v170
    %3507 = vmatmul.mubr.bf16.gmra.mrb[0].mxu0 %v169
    %v3508 = vpop.f32.mrb[0].mxu0
    %v3509 = vadd.f32 %v3468, %v3508
    %v3510 = vpop.f32.mrb[0].mxu0
    %v3511 = vadd.f32 %v3470, %v3510
    %v3512 = vpop.f32.mrb[0].mxu0
    %v3513 = vpop.f32.mrb[0].mxu0
    %3514 = vdwg.mxu0
    %3515 = vmatprep.subr.bf16.mxu0 %v2630
    %3516 = vmatpush1.bf16.msra.mxu0 %v2629
    %3517 = vmatprep.subr.bf16.mxu0 %v2634
    %3518 = vmatpush1.bf16.msra.mxu0 %v2633
    %3519 = vmatprep.subr.bf16.mxu0 %v2638
    %3520 = vmatpush1.bf16.msra.mxu0 %v2637
    %3521 = vmatprep.subr.bf16.mxu0 %v2642
    %3522 = vmatpush1.bf16.msra.mxu0 %v2641
    %3523 = vmatprep.subr.bf16.mxu0 %v2646
    %3524 = vmatpush1.bf16.msra.mxu0 %v2645
    %3525 = vmatprep.subr.bf16.mxu0 %v2650
    %3526 = vmatpush1.bf16.msra.mxu0 %v2649
    %3527 = vmatprep.subr.bf16.mxu0 %v2654
    %3528 = vmatpush1.bf16.msra.mxu0 %v2653
    %3529 = vmatprep.subr.bf16.mxu0 %v2658
    %3530 = vmatpush1.bf16.msra.mxu0 %v2657
    %3531 = vmatprep.subr.bf16.mxu0 %v2662
    %3532 = vmatpush1.bf16.msra.mxu0 %v2661
    %3533 = vmatprep.subr.bf16.mxu0 %v2666
    %3534 = vmatpush1.bf16.msra.mxu0 %v2665
    %3535 = vmatprep.subr.bf16.mxu0 %v2670
    %3536 = vmatpush1.bf16.msra.mxu0 %v2669
    %3537 = vmatprep.subr.bf16.mxu0 %v2674
    %3538 = vmatpush1.bf16.msra.mxu0 %v2673
    %3539 = vmatprep.subr.bf16.mxu0 %v2678
    %3540 = vmatpush1.bf16.msra.mxu0 %v2677
    %3541 = vmatprep.subr.bf16.mxu0 %v2682
    %3542 = vmatpush1.bf16.msra.mxu0 %v2681
    %3543 = vmatprep.subr.bf16.mxu0 %v2686
    %3544 = vmatpush1.bf16.msra.mxu0 %v2685
    %3545 = vmatprep.subr.bf16.mxu0 %v2690
    %3546 = vmatpush1.bf16.msra.mxu0 %v2689
    %3547 = vmatprep.mubr.bf16.mxu0 %v172
    %3548 = vmatmul.mubr.bf16.gmra.mrb[0].mxu0 %v171
    %v3549 = vpop.f32.mrb[0].mxu0
    %v3550 = vadd.f32 %v3509, %v3549
    %v3551 = vpop.f32.mrb[0].mxu0
    %v3552 = vadd.f32 %v3511, %v3551
    %v3553 = vpop.f32.mrb[0].mxu0
    %v3554 = vpop.f32.mrb[0].mxu0
    %3555 = vdwg.mxu0
    %3556 = vmatprep.subr.bf16.mxu0 %v2694
    %3557 = vmatpush1.bf16.msra.mxu0 %v2693
    %3558 = vmatprep.subr.bf16.mxu0 %v2698
    %3559 = vmatpush1.bf16.msra.mxu0 %v2697
    %3560 = vmatprep.subr.bf16.mxu0 %v2702
    %3561 = vmatpush1.bf16.msra.mxu0 %v2701
    %3562 = vmatprep.subr.bf16.mxu0 %v2706
    %3563 = vmatpush1.bf16.msra.mxu0 %v2705
    %3564 = vmatprep.subr.bf16.mxu0 %v2710
    %3565 = vmatpush1.bf16.msra.mxu0 %v2709
    %3566 = vmatprep.subr.bf16.mxu0 %v2714
    %3567 = vmatpush1.bf16.msra.mxu0 %v2713
    %3568 = vmatprep.subr.bf16.mxu0 %v2718
    %3569 = vmatpush1.bf16.msra.mxu0 %v2717
    %3570 = vmatprep.subr.bf16.mxu0 %v2722
    %3571 = vmatpush1.bf16.msra.mxu0 %v2721
    %3572 = vmatprep.subr.bf16.mxu0 %v2726
    %3573 = vmatpush1.bf16.msra.mxu0 %v2725
    %3574 = vmatprep.subr.bf16.mxu0 %v2730
    %3575 = vmatpush1.bf16.msra.mxu0 %v2729
    %3576 = vmatprep.subr.bf16.mxu0 %v2734
    %3577 = vmatpush1.bf16.msra.mxu0 %v2733
    %3578 = vmatprep.subr.bf16.mxu0 %v2738
    %3579 = vmatpush1.bf16.msra.mxu0 %v2737
    %3580 = vmatprep.subr.bf16.mxu0 %v2742
    %3581 = vmatpush1.bf16.msra.mxu0 %v2741
    %3582 = vmatprep.subr.bf16.mxu0 %v2746
    %3583 = vmatpush1.bf16.msra.mxu0 %v2745
    %3584 = vmatprep.subr.bf16.mxu0 %v2750
    %3585 = vmatpush1.bf16.msra.mxu0 %v2749
    %3586 = vmatprep.subr.bf16.mxu0 %v2754
    %3587 = vmatpush1.bf16.msra.mxu0 %v2753
    %3588 = vmatprep.mubr.bf16.mxu0 %v174
    %3589 = vmatmul.mubr.bf16.gmra.mrb[0].mxu0 %v173
    %v3590 = vpop.f32.mrb[0].mxu0
    %v3591 = vadd.f32 %v3550, %v3590
    %v3592 = vpop.f32.mrb[0].mxu0
    %v3593 = vadd.f32 %v3552, %v3592
    %v3594 = vpop.f32.mrb[0].mxu0
    %v3595 = vpop.f32.mrb[0].mxu0
    %3596 = vdwg.mxu0
    %3597 = vmatprep.subr.bf16.mxu0 %v2248
    %3598 = vmatpush1.bf16.msra.mxu0 %v2247
    %3599 = vmatprep.subr.bf16.mxu0 %v2252
    %3600 = vmatpush1.bf16.msra.mxu0 %v2251
    %3601 = vmatprep.subr.bf16.mxu0 %v2256
    %3602 = vmatpush1.bf16.msra.mxu0 %v2255
    %3603 = vmatprep.subr.bf16.mxu0 %v2260
    %3604 = vmatpush1.bf16.msra.mxu0 %v2259
    %3605 = vmatprep.subr.bf16.mxu0 %v2264
    %3606 = vmatpush1.bf16.msra.mxu0 %v2263
    %3607 = vmatprep.subr.bf16.mxu0 %v2268
    %3608 = vmatpush1.bf16.msra.mxu0 %v2267
    %3609 = vmatprep.subr.bf16.mxu0 %v2272
    %3610 = vmatpush1.bf16.msra.mxu0 %v2271
    %3611 = vmatprep.subr.bf16.mxu0 %v2276
    %3612 = vmatpush1.bf16.msra.mxu0 %v2275
    %3613 = vmatprep.subr.bf16.mxu0 %v2280
    %3614 = vmatpush1.bf16.msra.mxu0 %v2279
    %3615 = vmatprep.subr.bf16.mxu0 %v2284
    %3616 = vmatpush1.bf16.msra.mxu0 %v2283
    %3617 = vmatprep.subr.bf16.mxu0 %v2288
    %3618 = vmatpush1.bf16.msra.mxu0 %v2287
    %3619 = vmatprep.subr.bf16.mxu0 %v2292
    %3620 = vmatpush1.bf16.msra.mxu0 %v2291
    %3621 = vmatprep.subr.bf16.mxu0 %v2296
    %3622 = vmatpush1.bf16.msra.mxu0 %v2295
    %3623 = vmatprep.subr.bf16.mxu0 %v2300
    %3624 = vmatpush1.bf16.msra.mxu0 %v2299
    %3625 = vmatprep.subr.bf16.mxu0 %v2304
    %3626 = vmatpush1.bf16.msra.mxu0 %v2303
    %3627 = vmatprep.subr.bf16.mxu0 %v2308
    %3628 = vmatpush1.bf16.msra.mxu0 %v2307
    %3629 = vmatprep.mubr.bf16.mxu0 %v160
    %3630 = vmatmul.mubr.bf16.gmra.mrb[0].mxu0 %v159
    %v3631 = vpop.f32.mrb[0].mxu0
    %v3632 = vadd.f32 %v700, %v3631
    %v3633 = vpop.f32.mrb[0].mxu0
    %v3634 = vadd.f32 %v704, %v3633
    %v3635 = vpop.f32.mrb[0].mxu0
    %v3636 = vpop.f32.mrb[0].mxu0
    %3637 = vdwg.mxu0
    %3638 = vmatprep.subr.bf16.mxu0 %v2312
    %3639 = vmatpush1.bf16.msra.mxu0 %v2311
    %3640 = vmatprep.subr.bf16.mxu0 %v2316
    %3641 = vmatpush1.bf16.msra.mxu0 %v2315
    %3642 = vmatprep.subr.bf16.mxu0 %v2320
    %3643 = vmatpush1.bf16.msra.mxu0 %v2319
    %3644 = vmatprep.subr.bf16.mxu0 %v2324
    %3645 = vmatpush1.bf16.msra.mxu0 %v2323
    %3646 = vmatprep.subr.bf16.mxu0 %v2328
    %3647 = vmatpush1.bf16.msra.mxu0 %v2327
    %3648 = vmatprep.subr.bf16.mxu0 %v2332
    %3649 = vmatpush1.bf16.msra.mxu0 %v2331
    %3650 = vmatprep.subr.bf16.mxu0 %v2336
    %3651 = vmatpush1.bf16.msra.mxu0 %v2335
    %3652 = vmatprep.subr.bf16.mxu0 %v2340
    %3653 = vmatpush1.bf16.msra.mxu0 %v2339
    %3654 = vmatprep.subr.bf16.mxu0 %v2344
    %3655 = vmatpush1.bf16.msra.mxu0 %v2343
    %3656 = vmatprep.subr.bf16.mxu0 %v2348
    %3657 = vmatpush1.bf16.msra.mxu0 %v2347
    %3658 = vmatprep.subr.bf16.mxu0 %v2352
    %3659 = vmatpush1.bf16.msra.mxu0 %v2351
    %3660 = vmatprep.subr.bf16.mxu0 %v2356
    %3661 = vmatpush1.bf16.msra.mxu0 %v2355
    %3662 = vmatprep.subr.bf16.mxu0 %v2360
    %3663 = vmatpush1.bf16.msra.mxu0 %v2359
    %3664 = vmatprep.subr.bf16.mxu0 %v2364
    %3665 = vmatpush1.bf16.msra.mxu0 %v2363
    %3666 = vmatprep.subr.bf16.mxu0 %v2368
    %3667 = vmatpush1.bf16.msra.mxu0 %v2367
    %3668 = vmatprep.subr.bf16.mxu0 %v2372
    %3669 = vmatpush1.bf16.msra.mxu0 %v2371
    %3670 = vmatprep.mubr.bf16.mxu0 %v162
    %3671 = vmatmul.mubr.bf16.gmra.mrb[0].mxu0 %v161
    %v3672 = vpop.f32.mrb[0].mxu0
    %v3673 = vadd.f32 %v3632, %v3672
    %v3674 = vpop.f32.mrb[0].mxu0
    %v3675 = vadd.f32 %v3634, %v3674
    %v3676 = vpop.f32.mrb[0].mxu0
    %v3677 = vpop.f32.mrb[0].mxu0
    %3678 = vdwg.mxu0
    %3679 = vmatprep.subr.bf16.mxu0 %v2376
    %3680 = vmatpush1.bf16.msra.mxu0 %v2375
    %3681 = vmatprep.subr.bf16.mxu0 %v2380
    %3682 = vmatpush1.bf16.msra.mxu0 %v2379
    %3683 = vmatprep.subr.bf16.mxu0 %v2384
    %3684 = vmatpush1.bf16.msra.mxu0 %v2383
    %3685 = vmatprep.subr.bf16.mxu0 %v2388
    %3686 = vmatpush1.bf16.msra.mxu0 %v2387
    %3687 = vmatprep.subr.bf16.mxu0 %v2392
    %3688 = vmatpush1.bf16.msra.mxu0 %v2391
    %3689 = vmatprep.subr.bf16.mxu0 %v2396
    %3690 = vmatpush1.bf16.msra.mxu0 %v2395
    %3691 = vmatprep.subr.bf16.mxu0 %v2400
    %3692 = vmatpush1.bf16.msra.mxu0 %v2399
    %3693 = vmatprep.subr.bf16.mxu0 %v2404
    %3694 = vmatpush1.bf16.msra.mxu0 %v2403
    %3695 = vmatprep.subr.bf16.mxu0 %v2408
    %3696 = vmatpush1.bf16.msra.mxu0 %v2407
    %3697 = vmatprep.subr.bf16.mxu0 %v2412
    %3698 = vmatpush1.bf16.msra.mxu0 %v2411
    %3699 = vmatprep.subr.bf16.mxu0 %v2416
    %3700 = vmatpush1.bf16.msra.mxu0 %v2415
    %3701 = vmatprep.subr.bf16.mxu0 %v2420
    %3702 = vmatpush1.bf16.msra.mxu0 %v2419
    %3703 = vmatprep.subr.bf16.mxu0 %v2424
    %3704 = vmatpush1.bf16.msra.mxu0 %v2423
    %3705 = vmatprep.subr.bf16.mxu0 %v2428
    %3706 = vmatpush1.bf16.msra.mxu0 %v2427
    %3707 = vmatprep.subr.bf16.mxu0 %v2432
    %3708 = vmatpush1.bf16.msra.mxu0 %v2431
    %3709 = vmatprep.subr.bf16.mxu0 %v2436
    %3710 = vmatpush1.bf16.msra.mxu0 %v2435
    %3711 = vmatprep.mubr.bf16.mxu0 %v164
    %3712 = vmatmul.mubr.bf16.gmra.mrb[0].mxu0 %v163
    %v3713 = vpop.f32.mrb[0].mxu0
    %v3714 = vadd.f32 %v3673, %v3713
    %v3715 = vpop.f32.mrb[0].mxu0
    %v3716 = vadd.f32 %v3675, %v3715
    %v3717 = vpop.f32.mrb[0].mxu0
    %v3718 = vpop.f32.mrb[0].mxu0
    %3719 = vdwg.mxu0
    %3720 = vmatprep.subr.bf16.mxu0 %v2440
    %3721 = vmatpush1.bf16.msra.mxu0 %v2439
    %3722 = vmatprep.subr.bf16.mxu0 %v2444
    %3723 = vmatpush1.bf16.msra.mxu0 %v2443
    %3724 = vmatprep.subr.bf16.mxu0 %v2448
    %3725 = vmatpush1.bf16.msra.mxu0 %v2447
    %3726 = vmatprep.subr.bf16.mxu0 %v2452
    %3727 = vmatpush1.bf16.msra.mxu0 %v2451
    %3728 = vmatprep.subr.bf16.mxu0 %v2456
    %3729 = vmatpush1.bf16.msra.mxu0 %v2455
    %3730 = vmatprep.subr.bf16.mxu0 %v2460
    %3731 = vmatpush1.bf16.msra.mxu0 %v2459
    %3732 = vmatprep.subr.bf16.mxu0 %v2464
    %3733 = vmatpush1.bf16.msra.mxu0 %v2463
    %3734 = vmatprep.subr.bf16.mxu0 %v2468
    %3735 = vmatpush1.bf16.msra.mxu0 %v2467
    %3736 = vmatprep.subr.bf16.mxu0 %v2472
    %3737 = vmatpush1.bf16.msra.mxu0 %v2471
    %3738 = vmatprep.subr.bf16.mxu0 %v2476
    %3739 = vmatpush1.bf16.msra.mxu0 %v2475
    %3740 = vmatprep.subr.bf16.mxu0 %v2480
    %3741 = vmatpush1.bf16.msra.mxu0 %v2479
    %3742 = vmatprep.subr.bf16.mxu0 %v2484
    %3743 = vmatpush1.bf16.msra.mxu0 %v2483
    %3744 = vmatprep.subr.bf16.mxu0 %v2488
    %3745 = vmatpush1.bf16.msra.mxu0 %v2487
    %3746 = vmatprep.subr.bf16.mxu0 %v2492
    %3747 = vmatpush1.bf16.msra.mxu0 %v2491
    %3748 = vmatprep.subr.bf16.mxu0 %v2496
    %3749 = vmatpush1.bf16.msra.mxu0 %v2495
    %3750 = vmatprep.subr.bf16.mxu0 %v2500
    %3751 = vmatpush1.bf16.msra.mxu0 %v2499
    %3752 = vmatprep.mubr.bf16.mxu0 %v166
    %3753 = vmatmul.mubr.bf16.gmra.mrb[0].mxu0 %v165
    %v3754 = vpop.f32.mrb[0].mxu0
    %v3755 = vadd.f32 %v3714, %v3754
    %v3756 = vpop.f32.mrb[0].mxu0
    %v3757 = vadd.f32 %v3716, %v3756
    %v3758 = vpop.f32.mrb[0].mxu0
    %v3759 = vpop.f32.mrb[0].mxu0
    %3760 = vdwg.mxu0
    %3761 = vmatprep.subr.bf16.mxu0 %v2504
    %3762 = vmatpush1.bf16.msra.mxu0 %v2503
    %3763 = vmatprep.subr.bf16.mxu0 %v2508
    %3764 = vmatpush1.bf16.msra.mxu0 %v2507
    %3765 = vmatprep.subr.bf16.mxu0 %v2512
    %3766 = vmatpush1.bf16.msra.mxu0 %v2511
    %3767 = vmatprep.subr.bf16.mxu0 %v2516
    %3768 = vmatpush1.bf16.msra.mxu0 %v2515
    %3769 = vmatprep.subr.bf16.mxu0 %v2520
    %3770 = vmatpush1.bf16.msra.mxu0 %v2519
    %3771 = vmatprep.subr.bf16.mxu0 %v2524
    %3772 = vmatpush1.bf16.msra.mxu0 %v2523
    %3773 = vmatprep.subr.bf16.mxu0 %v2528
    %3774 = vmatpush1.bf16.msra.mxu0 %v2527
    %3775 = vmatprep.subr.bf16.mxu0 %v2532
    %3776 = vmatpush1.bf16.msra.mxu0 %v2531
    %3777 = vmatprep.subr.bf16.mxu0 %v2536
    %3778 = vmatpush1.bf16.msra.mxu0 %v2535
    %3779 = vmatprep.subr.bf16.mxu0 %v2540
    %3780 = vmatpush1.bf16.msra.mxu0 %v2539
    %3781 = vmatprep.subr.bf16.mxu0 %v2544
    %3782 = vmatpush1.bf16.msra.mxu0 %v2543
    %3783 = vmatprep.subr.bf16.mxu0 %v2548
    %3784 = vmatpush1.bf16.msra.mxu0 %v2547
    %3785 = vmatprep.subr.bf16.mxu0 %v2552
    %3786 = vmatpush1.bf16.msra.mxu0 %v2551
    %3787 = vmatprep.subr.bf16.mxu0 %v2556
    %3788 = vmatpush1.bf16.msra.mxu0 %v2555
    %3789 = vmatprep.subr.bf16.mxu0 %v2560
    %3790 = vmatpush1.bf16.msra.mxu0 %v2559
    %3791 = vmatprep.subr.bf16.mxu0 %v2564
    %3792 = vmatpush1.bf16.msra.mxu0 %v2563
    %3793 = vmatprep.mubr.bf16.mxu0 %v168
    %3794 = vmatmul.mubr.bf16.gmra.mrb[0].mxu0 %v167
    %v3795 = vpop.f32.mrb[0].mxu0
    %v3796 = vadd.f32 %v3755, %v3795
    %v3797 = vpop.f32.mrb[0].mxu0
    %v3798 = vadd.f32 %v3757, %v3797
    %v3799 = vpop.f32.mrb[0].mxu0
    %v3800 = vpop.f32.mrb[0].mxu0
    %3801 = vdwg.mxu0
    %3802 = vmatprep.subr.bf16.mxu0 %v2568
    %3803 = vmatpush1.bf16.msra.mxu0 %v2567
    %3804 = vmatprep.subr.bf16.mxu0 %v2572
    %3805 = vmatpush1.bf16.msra.mxu0 %v2571
    %3806 = vmatprep.subr.bf16.mxu0 %v2576
    %3807 = vmatpush1.bf16.msra.mxu0 %v2575
    %3808 = vmatprep.subr.bf16.mxu0 %v2580
    %3809 = vmatpush1.bf16.msra.mxu0 %v2579
    %3810 = vmatprep.subr.bf16.mxu0 %v2584
    %3811 = vmatpush1.bf16.msra.mxu0 %v2583
    %3812 = vmatprep.subr.bf16.mxu0 %v2588
    %3813 = vmatpush1.bf16.msra.mxu0 %v2587
    %3814 = vmatprep.subr.bf16.mxu0 %v2592
    %3815 = vmatpush1.bf16.msra.mxu0 %v2591
    %3816 = vmatprep.subr.bf16.mxu0 %v2596
    %3817 = vmatpush1.bf16.msra.mxu0 %v2595
    %3818 = vmatprep.subr.bf16.mxu0 %v2600
    %3819 = vmatpush1.bf16.msra.mxu0 %v2599
    %3820 = vmatprep.subr.bf16.mxu0 %v2604
    %3821 = vmatpush1.bf16.msra.mxu0 %v2603
    %3822 = vmatprep.subr.bf16.mxu0 %v2608
    %3823 = vmatpush1.bf16.msra.mxu0 %v2607
    %3824 = vmatprep.subr.bf16.mxu0 %v2612
    %3825 = vmatpush1.bf16.msra.mxu0 %v2611
    %3826 = vmatprep.subr.bf16.mxu0 %v2616
    %3827 = vmatpush1.bf16.msra.mxu0 %v2615
    %3828 = vmatprep.subr.bf16.mxu0 %v2620
    %3829 = vmatpush1.bf16.msra.mxu0 %v2619
    %3830 = vmatprep.subr.bf16.mxu0 %v2624
    %3831 = vmatpush1.bf16.msra.mxu0 %v2623
    %3832 = vmatprep.subr.bf16.mxu0 %v2628
    %3833 = vmatpush1.bf16.msra.mxu0 %v2627
    %3834 = vmatprep.mubr.bf16.mxu0 %v170
    %3835 = vmatmul.mubr.bf16.gmra.mrb[0].mxu0 %v169
    %v3836 = vpop.f32.mrb[0].mxu0
    %v3837 = vadd.f32 %v3796, %v3836
    %v3838 = vpop.f32.mrb[0].mxu0
    %v3839 = vadd.f32 %v3798, %v3838
    %v3840 = vpop.f32.mrb[0].mxu0
    %v3841 = vpop.f32.mrb[0].mxu0
    %3842 = vdwg.mxu0
    %3843 = vmatprep.subr.bf16.mxu0 %v2632
    %3844 = vmatpush1.bf16.msra.mxu0 %v2631
    %3845 = vmatprep.subr.bf16.mxu0 %v2636
    %3846 = vmatpush1.bf16.msra.mxu0 %v2635
    %3847 = vmatprep.subr.bf16.mxu0 %v2640
    %3848 = vmatpush1.bf16.msra.mxu0 %v2639
    %3849 = vmatprep.subr.bf16.mxu0 %v2644
    %3850 = vmatpush1.bf16.msra.mxu0 %v2643
    %3851 = vmatprep.subr.bf16.mxu0 %v2648
    %3852 = vmatpush1.bf16.msra.mxu0 %v2647
    %3853 = vmatprep.subr.bf16.mxu0 %v2652
    %3854 = vmatpush1.bf16.msra.mxu0 %v2651
    %3855 = vmatprep.subr.bf16.mxu0 %v2656
    %3856 = vmatpush1.bf16.msra.mxu0 %v2655
    %3857 = vmatprep.subr.bf16.mxu0 %v2660
    %3858 = vmatpush1.bf16.msra.mxu0 %v2659
    %3859 = vmatprep.subr.bf16.mxu0 %v2664
    %3860 = vmatpush1.bf16.msra.mxu0 %v2663
    %3861 = vmatprep.subr.bf16.mxu0 %v2668
    %3862 = vmatpush1.bf16.msra.mxu0 %v2667
    %3863 = vmatprep.subr.bf16.mxu0 %v2672
    %3864 = vmatpush1.bf16.msra.mxu0 %v2671
    %3865 = vmatprep.subr.bf16.mxu0 %v2676
    %3866 = vmatpush1.bf16.msra.mxu0 %v2675
    %3867 = vmatprep.subr.bf16.mxu0 %v2680
    %3868 = vmatpush1.bf16.msra.mxu0 %v2679
    %3869 = vmatprep.subr.bf16.mxu0 %v2684
    %3870 = vmatpush1.bf16.msra.mxu0 %v2683
    %3871 = vmatprep.subr.bf16.mxu0 %v2688
    %3872 = vmatpush1.bf16.msra.mxu0 %v2687
    %3873 = vmatprep.subr.bf16.mxu0 %v2692
    %3874 = vmatpush1.bf16.msra.mxu0 %v2691
    %3875 = vmatprep.mubr.bf16.mxu0 %v172
    %3876 = vmatmul.mubr.bf16.gmra.mrb[0].mxu0 %v171
    %v3877 = vpop.f32.mrb[0].mxu0
    %v3878 = vadd.f32 %v3837, %v3877
    %v3879 = vpop.f32.mrb[0].mxu0
    %v3880 = vadd.f32 %v3839, %v3879
    %v3881 = vpop.f32.mrb[0].mxu0
    %v3882 = vpop.f32.mrb[0].mxu0
    %3883 = vdwg.mxu0
    %3884 = vmatprep.subr.bf16.mxu0 %v2696
    %3885 = vmatpush1.bf16.msra.mxu0 %v2695
    %3886 = vmatprep.subr.bf16.mxu0 %v2700
    %3887 = vmatpush1.bf16.msra.mxu0 %v2699
    %3888 = vmatprep.subr.bf16.mxu0 %v2704
    %3889 = vmatpush1.bf16.msra.mxu0 %v2703
    %3890 = vmatprep.subr.bf16.mxu0 %v2708
    %3891 = vmatpush1.bf16.msra.mxu0 %v2707
    %3892 = vmatprep.subr.bf16.mxu0 %v2712
    %3893 = vmatpush1.bf16.msra.mxu0 %v2711
    %3894 = vmatprep.subr.bf16.mxu0 %v2716
    %3895 = vmatpush1.bf16.msra.mxu0 %v2715
    %3896 = vmatprep.subr.bf16.mxu0 %v2720
    %3897 = vmatpush1.bf16.msra.mxu0 %v2719
    %3898 = vmatprep.subr.bf16.mxu0 %v2724
    %3899 = vmatpush1.bf16.msra.mxu0 %v2723
    %3900 = vmatprep.subr.bf16.mxu0 %v2728
    %3901 = vmatpush1.bf16.msra.mxu0 %v2727
    %3902 = vmatprep.subr.bf16.mxu0 %v2732
    %3903 = vmatpush1.bf16.msra.mxu0 %v2731
    %3904 = vmatprep.subr.bf16.mxu0 %v2736
    %3905 = vmatpush1.bf16.msra.mxu0 %v2735
    %3906 = vmatprep.subr.bf16.mxu0 %v2740
    %3907 = vmatpush1.bf16.msra.mxu0 %v2739
    %3908 = vmatprep.subr.bf16.mxu0 %v2744
    %3909 = vmatpush1.bf16.msra.mxu0 %v2743
    %3910 = vmatprep.subr.bf16.mxu0 %v2748
    %3911 = vmatpush1.bf16.msra.mxu0 %v2747
    %3912 = vmatprep.subr.bf16.mxu0 %v2752
    %3913 = vmatpush1.bf16.msra.mxu0 %v2751
    %3914 = vmatprep.subr.bf16.mxu0 %v2756
    %3915 = vmatpush1.bf16.msra.mxu0 %v2755
    %3916 = vmatprep.mubr.bf16.mxu0 %v174
    %3917 = vmatmul.mubr.bf16.gmra.mrb[0].mxu0 %v173
    %v3918 = vpop.f32.mrb[0].mxu0
    %v3919 = vadd.f32 %v3878, %v3918
    %v3920 = vpop.f32.mrb[0].mxu0
    %v3921 = vadd.f32 %v3880, %v3920
    %v3922 = vpop.f32.mrb[0].mxu0
    %v3923 = vpop.f32.mrb[0].mxu0
    %3924 = vdwg.mxu0
    %v3925 = vld [vmem:[#allocation8] sm:$0xff]
    %v3927 = vcombine.high %v3925, %v3925
    %v3929 = vunpack.c.l.s4 1983009808
    %v3930 = vunpack.c.0.s8 %v3929
    %v3931 = vlaneseq
    %v3932 = vshrl.u32 %v3931, 7
    %v3933 = vsub.s32 %v3930, %v3932
    %v3934 = vrot.slane %v3925, %v3933
    %v3936 = vunpack.c.l.s4 1983009808
    %v3937 = vunpack.c.0.s8 %v3936
    %v3938 = vlaneseq
    %v3939 = vshrl.u32 %v3938, 7
    %v3940 = vsub.s32 %v3937, %v3939
    %v3941 = vrot.slane %v3927, %v3940
    %v3942 = vcombine.high %v3934, %v3934
    %v3943 = vcombine.high %v3941, %v3941
    %v3948 = vadd.f32 %v3591, %v3934
    %v3949 = vadd.f32 %v3593, %v3942
    %v3950 = vadd.f32 %v3919, %v3941
    %v3951 = vadd.f32 %v3921, %v3943
    %v3952 = vmax.f32 %v3948, 0.0
    %v3953 = vmax.f32 %v3949, 0.0
    %v3954 = vmax.f32 %v3950, 0.0
    %v3955 = vmax.f32 %v3951, 0.0
    %v3960 = vcombine.low %v3952, %v3953
    %v3961 = vcombine.low %v3954, %v3955
    %v3963 = vunpack.c.l.s4 1983009808
    %v3964 = vunpack.c.0.s8 %v3963
    %v3965 = vlaneseq
    %v3966 = vshrl.u32 %v3965, 7
    %v3967 = vsub.s32 %v3964, %v3966
    %v3968 = vrot.slane %v3960, %v3967
    %v3970 = vunpack.c.l.s4 1983009808
    %v3971 = vunpack.c.0.s8 %v3970
    %v3972 = vlaneseq
    %v3973 = vshrl.u32 %v3972, 7
    %v3974 = vsub.s32 %v3971, %v3973
    %v3975 = vrot.slane %v3961, %v3974
    %v3976 = vcombine.low %v3968, %v3975
    %3978 = vst [vmem:[#allocation10] sm:$0xff] %v3976
    // Predicated region
    $region34: #{tpu_custom_call.1} parent=1 // pred_check
      _
    $region35: #{tpu_custom_call.1} parent=1 // pred_check_branch
      %3980 = sbr.rel (0) target = $region37
    $region36: #{tpu_custom_call.1} parent=1 // pred_region
      %s3982 = ssub.s32 128, 128
      %3983 = vsyncadd [#allocation4], %s3982
      %s3985 = sshll.u32 [#allocation10], 4
      %s3986 = int_to_ptr.vmem [resolvable:$true] %s3985
      %3988 = dma.vmem_to_hbm [thread:$0]  %s3986, 128, %s4, [#allocation4]
    $region37: #{tpu_custom_call.1} parent=1 // pred_fallthru
      _
    // Predicated region
    $region38: #{tpu_custom_call.1} parent=1 // pred_check
      _
    $region39: #{tpu_custom_call.1} parent=1 // pred_check_branch
      %3990 = sbr.rel (0) target = $region41
    $region40: #{tpu_custom_call.1} parent=1 // pred_region
      %3991 = dma.done [#allocation4], 128
    $region41: #{tpu_custom_call.1} parent=1 // pred_fallthru
      _
    %3992 = vsyncpa [#allocation3], 1
    %3993 = vsyncpa [#allocation6], 1
    %3994 = vsyncpa [#allocation9], 1
    %3995 = vsyncpa [#allocation4], 1

</llo_original>
